<compile_context>
chip_gen: v5e
topology: v5e:2x2
jax: 0.10.0
libtpu: 0.0.40
codegen_flags: <defaults>
</compile_context>

<pallas_src>
import math
import numpy as np
import jax
import jax.numpy as jnp
from jax import lax
from jax.experimental import pallas as pl
from jax.experimental.pallas import tpu as pltpu  # noqa: F401  (TPU backend)

# ---------------- model config (small, consistent with the module) -----------
BATCH    = 2
ENC_IN   = 4              # N (variates)
SEQ_LEN  = 24             # T; multiple of SEG_LEN so pad_in_len == seq_len
PRED_LEN = 24             # forecast adds dec_out + x_orgin -> pred_len == seq_len
SEG_LEN  = 12
D_MODEL  = 512            # forward does .view(..., 8, 64)  => d_model == 512
IN_SEG   = SEQ_LEN // SEG_LEN
C_CONV   = 8
D_HEAD   = 64
BN_EPS   = 1e-5
LN_EPS   = 1e-5

assert SEQ_LEN % SEG_LEN == 0
assert PRED_LEN == SEQ_LEN
assert D_MODEL == C_CONV * D_HEAD
assert IN_SEG == 2

# rows of the packed lane-dense vector table `vecs` (16, 512)
ROW_TAP0 = 0    # rows 0..8 : depthwise 3x3 taps (BN folded), per-channel on lanes
ROW_BD   = 9    # depthwise bias (BN folded)
ROW_BP   = 10   # pointwise bias (BN folded)
ROW_GPRE = 11   # pre_norm gamma (tiled over 8 heads)
ROW_BPRE = 12   # pre_norm beta
ROW_GN2  = 13   # norm2 gamma
ROW_BN2  = 14   # norm2 beta


# ----------------------------- fused Pallas kernel ----------------------------
def _pcformer_fused_kernel(xt_ref, wemb_ref, pos_ref, vecs_ref, wpt_ref,
                           sseg_ref, eseg_ref, w1_ref, b1_ref, w2s_ref, b2_ref,
                           o_ref):
    f32 = jnp.float32
    xt = xt_ref[...]                                    # (BN, T)  rows = b*N + n
    BNr = xt.shape[0]

    # --- diff + restore split (torch.diff, zero pad at t=0; x_orgin = x - diff)
    xo_t = jnp.concatenate([xt[:, :1], xt[:, :SEQ_LEN - 1]], axis=1)   # (BN, T)
    xd_t = xt - xo_t                                                   # (BN, T)

    wemb = wemb_ref[...]                                # (SEG_LEN, D_MODEL)
    pos  = pos_ref[...]                                 # (IN_SEG, D_MODEL)
    V    = vecs_ref[...]                                # (16, D_MODEL)
    wpt  = wpt_ref[...]                                 # (D_MODEL, D_MODEL) kron(Wp^T, I64)
    sseg = sseg_ref[...]                                # (D_MODEL, C)  block avg (1/64)
    eseg = eseg_ref[...]                                # (C, D_MODEL)  block expand (0/1)
    w1   = w1_ref[...]                                  # (D_MODEL, SEG_LEN)
    b1   = b1_ref[...]                                  # (1, SEG_LEN)
    w2s  = w2s_ref[...]                                 # (IN_SEG, SEG_LEN, PRED_LEN)
    b2   = b2_ref[...]                                  # (1, PRED_LEN)

    bd_l  = V[ROW_BD:ROW_BD + 1, :]
    bp_l  = V[ROW_BP:ROW_BP + 1, :]
    g_pre = V[ROW_GPRE:ROW_GPRE + 1, :]
    b_pre = V[ROW_BPRE:ROW_BPRE + 1, :]
    g_n2  = V[ROW_GN2:ROW_GN2 + 1, :]
    b_n2  = V[ROW_BN2:ROW_BN2 + 1, :]

    lane = lax.broadcasted_iota(jnp.int32, (BNr, D_MODEL), 1)
    hpos = lane % D_HEAD                                # position inside 64-wide head

    def chunk_ln(v, g, b):
        # LayerNorm over each 64-wide head chunk, kept lane-dense via segmented matmuls (MXU).
        mu  = jnp.dot(v, sseg, preferred_element_type=f32)              # (BN, C)
        xc  = v - jnp.dot(mu, eseg, preferred_element_type=f32)         # (BN, D_MODEL)
        var = jnp.dot(xc * xc, sseg, preferred_element_type=f32)        # (BN, C)
        rs  = jnp.dot(lax.rsqrt(var + LN_EPS), eseg, preferred_element_type=f32)
        return xc * rs * g + b

    def shift_w(v, dj):
        # out[:, d] = v[:, d + dj] with zeroing across 64-lane head boundaries.
        if dj == 0:
            return v
        if dj > 0:
            sh = jnp.concatenate([v[:, 1:], jnp.zeros((BNr, 1), f32)], axis=1)
            keep = hpos != (D_HEAD - 1)
        else:
            sh = jnp.concatenate([jnp.zeros((BNr, 1), f32), v[:, :-1]], axis=1)
            keep = hpos != 0
        return jnp.where(keep, sh, 0.0)

    # --- PatchEmbedding (Linear 12->512, no bias) + sinusoidal pos + pre_norm ---
    # slab s holds all BN rows for segment s; columns = (head c, h) lane-dense.
    y = []
    for s in range(IN_SEG):
        pat = xd_t[:, s * SEG_LEN:(s + 1) * SEG_LEN]                    # (BN, 12)
        emb = jnp.dot(pat, wemb, preferred_element_type=f32) + pos[s:s + 1, :]
        y.append(chunk_ln(emb, g_pre, b_pre))                           # (BN, 512)

    # --- depthwise 3x3 conv (BN folded) + ReLU -----------------------------------
    # W direction: two lane-shifted copies (built once); H direction: slab exchange.
    ysh = [[shift_w(y[s], dj) for dj in (-1, 0, 1)] for s in range(IN_SEG)]
    dw = []
    for s in range(IN_SEG):
        acc = jnp.zeros((BNr, D_MODEL), f32)
        for di in (-1, 0, 1):
            sp = s + di
            if 0 <= sp < IN_SEG:
                for dj in (-1, 0, 1):
                    t = ROW_TAP0 + 3 * (di + 1) + (dj + 1)
                    acc = acc + V[t:t + 1, :] * ysh[sp][dj + 1]
        dw.append(jnp.maximum(acc + bd_l, 0.0))

    # --- pointwise 1x1 conv (BN folded, one MXU matmul) + ReLU, norm2, Linear1 ---
    d2 = []
    for s in range(IN_SEG):
        pw = jnp.maximum(jnp.dot(dw[s], wpt, preferred_element_type=f32) + bp_l, 0.0)
        n2 = chunk_ln(pw, g_n2, b_n2)
        d2.append(jnp.dot(n2, w1, preferred_element_type=f32) + b1)     # (BN, 12)

    # --- reassemble time axis (t = s*12 + k), Linear2 (T -> pred_len), residual ---
    d3 = jnp.zeros((BNr, PRED_LEN), f32) + b2
    for s in range(IN_SEG):
        d3 = d3 + jnp.dot(d2[s], w2s[s], preferred_element_type=f32)    # (BN, PRED)
    o_ref[...] = d3 + xo_t


def pcformer_fused(xt, p):
    BN = xt.shape[0]
    return pl.pallas_call(
        _pcformer_fused_kernel,
        out_shape=jax.ShapeDtypeStruct((BN, PRED_LEN), jnp.float32),
        # no grid / no blocking: total working set < 2 MiB, everything lives in VMEM
    )(xt, p['w_emb'], p['pos'], p['vecs'], p['wpt_big'], p['sseg'], p['eseg'],
      p['W1'], p['b1r'], p['W2_stack'], p['b2r'])


# ----------------------------- parameters -------------------------------------
def init_params(key):
    ks = jax.random.split(key, 9)
    p = {}
    # PatchEmbedding: value_embedding Linear(seg_len -> d_model, bias=False)
    p['w_emb'] = 0.1 * jax.random.normal(ks[0], (SEG_LEN, D_MODEL), jnp.float32)
    # sinusoidal positional embedding (IN_SEG, d_model)
    pos = np.zeros((IN_SEG, D_MODEL), np.float32)
    position = np.arange(IN_SEG, dtype=np.float32)[:, None]
    div_term = np.exp(np.arange(0, D_MODEL, 2, dtype=np.float32)
                      * -(math.log(10000.0) / D_MODEL))
    pos[:, 0::2] = np.sin(position * div_term)
    pos[:, 1::2] = np.cos(position * div_term)
    p['pos'] = jnp.asarray(pos)
    # LayerNorm(64) params (PyTorch default init)
    p['g_pre'] = jnp.ones((D_HEAD,), jnp.float32)
    p['b_pre'] = jnp.zeros((D_HEAD,), jnp.float32)
    p['g_n2'] = jnp.ones((D_HEAD,), jnp.float32)
    p['b_n2'] = jnp.zeros((D_HEAD,), jnp.float32)
    # conv1: depthwise 3x3 (groups=8) + BN + ReLU, pointwise 1x1 + BN + ReLU
    kd = 0.1 * jax.random.normal(ks[1], (C_CONV, 3, 3), jnp.float32)
    bdw = 0.1 * jax.random.normal(ks[2], (C_CONV,), jnp.float32)
    wp = 0.1 * jax.random.normal(ks[3], (C_CONV, C_CONV), jnp.float32)   # (out, in)
    bpw = 0.1 * jax.random.normal(ks[4], (C_CONV,), jnp.float32)
    # fold eval-mode BatchNorm (mean=0, var=1, gamma=1, beta=0): scale = 1/sqrt(1+eps)
    s = 1.0 / math.sqrt(1.0 + BN_EPS)
    p['kd_f'], p['bd_f'] = kd * s, bdw * s
    p['wp_f'], p['bp_f'] = wp * s, bpw * s
    # Linear1 (d_model -> seg_len), Linear2 (seq_len -> pred_len)
    p['W1'] = 0.05 * jax.random.normal(ks[5], (D_MODEL, SEG_LEN), jnp.float32)
    p['b1'] = 0.05 * jax.random.normal(ks[6], (SEG_LEN,), jnp.float32)
    p['W2'] = 0.1 * jax.random.normal(ks[7], (SEQ_LEN, PRED_LEN), jnp.float32)
    p['b2'] = 0.1 * jax.random.normal(ks[8], (PRED_LEN,), jnp.float32)

    # ---- kernel-friendly lane-dense packings (computed once at init) ----------
    tap = jnp.transpose(p['kd_f'].reshape(C_CONV, 9), (1, 0))            # (9, C)
    tap_l = jnp.repeat(tap, D_HEAD, axis=1)                              # (9, 512)
    bd_l = jnp.repeat(p['bd_f'], D_HEAD)[None, :]                        # (1, 512)
    bp_l = jnp.repeat(p['bp_f'], D_HEAD)[None, :]
    g_pre_l = jnp.tile(p['g_pre'], C_CONV)[None, :]
    b_pre_l = jnp.tile(p['b_pre'], C_CONV)[None, :]
    g_n2_l = jnp.tile(p['g_n2'], C_CONV)[None, :]
    b_n2_l = jnp.tile(p['b_n2'], C_CONV)[None, :]
    p['vecs'] = jnp.concatenate(
        [tap_l, bd_l, bp_l, g_pre_l, b_pre_l, g_n2_l, b_n2_l,
         jnp.zeros((1, D_MODEL), jnp.float32)], axis=0)                  # (16, 512)
    # pointwise conv as a block matmul that keeps (rows, 512) lane-dense
    p['wpt_big'] = jnp.kron(jnp.transpose(p['wp_f']),
                            jnp.eye(D_HEAD, dtype=jnp.float32))          # (512, 512)
    # segmented mean / expand matrices for chunked LayerNorm(64)
    eseg = np.kron(np.eye(C_CONV, dtype=np.float32),
                   np.ones((1, D_HEAD), np.float32))                     # (8, 512)
    p['eseg'] = jnp.asarray(eseg)
    p['sseg'] = jnp.asarray(eseg.T / float(D_HEAD))                      # (512, 8)
    p['b1r'] = p['b1'][None, :]                                          # (1, 12)
    p['b2r'] = p['b2'][None, :]                                          # (1, 24)
    p['W2_stack'] = p['W2'].reshape(IN_SEG, SEG_LEN, PRED_LEN)           # (2, 12, 24)
    return p


# ----------------------------- forward pass -----------------------------------
def model_forward(x, p):
    B, T, N = x.shape
    BN = B * N
    xt = jnp.transpose(x, (0, 2, 1)).reshape(BN, T)        # rows = b*N + n
    out_t = pcformer_fused(xt, p)                           # (BN, PRED_LEN)
    out = jnp.transpose(out_t.reshape(B, N, PRED_LEN), (0, 2, 1))
    return out[:, -PRED_LEN:, :]


# ----------------------------- pure-JAX reference -----------------------------
def reference_forward(x, p):
    B, T, N = x.shape
    BN = B * N
    xd = jnp.pad(x[:, 1:, :] - x[:, :-1, :], ((0, 0), (1, 0), (0, 0)))
    x_orgin = x - xd
    patches = jnp.transpose(xd, (0, 2, 1)).reshape(BN, IN_SEG, SEG_LEN)
    emb = jnp.einsum('bsk,kd->bsd', patches, p['w_emb'],
                     precision=lax.Precision.HIGHEST) + p['pos'][None]

    def ln(v, g, b):
        m = v.mean(-1, keepdims=True)
        var = ((v - m) ** 2).mean(-1, keepdims=True)
        return (v - m) / jnp.sqrt(var + LN_EPS) * g + b

    x4 = jnp.transpose(emb.reshape(BN, IN_SEG, C_CONV, D_HEAD), (0, 2, 1, 3))
    x4 = ln(x4, p['g_pre'], p['b_pre'])
    xp = jnp.pad(x4, ((0, 0), (0, 0), (1, 1), (1, 1)))
    H, W = IN_SEG, D_HEAD
    acc = jnp.zeros_like(x4)
    for dh in range(3):
        for dw in range(3):
            acc = acc + xp[:, :, dh:dh + H, dw:dw + W] * p['kd_f'][None, :, dh, dw, None, None]
    acc = jnp.maximum(acc + p['bd_f'][None, :, None, None], 0.0)
    out = jnp.einsum('oc,bchw->bohw', p['wp_f'], acc,
                     precision=lax.Precision.HIGHEST) + p['bp_f'][None, :, None, None]
    out = jnp.maximum(out, 0.0)
    d1 = jnp.transpose(out, (0, 2, 1, 3))
    d1 = ln(d1, p['g_n2'], p['b_n2']).reshape(B, N, IN_SEG, D_MODEL)
    d2 = jnp.einsum('bnsd,dk->bnsk', d1, p['W1'],
                    precision=lax.Precision.HIGHEST) + p['b1']
    d2 = jnp.transpose(d2, (0, 2, 3, 1)).reshape(B, -1, N)
    d3 = jnp.einsum('bnt,tp->bnp', jnp.transpose(d2, (0, 2, 1)), p['W2'],
                    precision=lax.Precision.HIGHEST) + p['b2']
    d3 = jnp.transpose(d3, (0, 2, 1))
    return (d3 + x_orgin)[:, -PRED_LEN:, :]


# ----------------------------- main --------------------------------------------
if __name__ == "__main__":
    key = jax.random.PRNGKey(0)
    kx, kp = jax.random.split(key)
    x = jax.random.normal(kx, (BATCH, SEQ_LEN, ENC_IN), jnp.float32)
    params = init_params(kp)

    fwd = jax.jit(model_forward)
    out = jax.block_until_ready(fwd(x, params))
    assert out.shape == (BATCH, PRED_LEN, ENC_IN), out.shape

    ref = jax.block_until_ready(reference_forward(x, params))
    np.testing.assert_allclose(np.asarray(out), np.asarray(ref), rtol=5e-2, atol=5e-2)
    print("KERNEL_OK")
</pallas_src>

<mosaic_0001>
module attributes {stable_mosaic.version = 11 : i64} {
  func.func @_pcformer_fused_kernel(%arg0: memref<8x24xf32, #tpu.memory_space<vmem>>, %arg1: memref<12x512xf32, #tpu.memory_space<vmem>>, %arg2: memref<2x512xf32, #tpu.memory_space<vmem>>, %arg3: memref<16x512xf32, #tpu.memory_space<vmem>>, %arg4: memref<512x512xf32, #tpu.memory_space<vmem>>, %arg5: memref<512x8xf32, #tpu.memory_space<vmem>>, %arg6: memref<8x512xf32, #tpu.memory_space<vmem>>, %arg7: memref<512x12xf32, #tpu.memory_space<vmem>>, %arg8: memref<1x12xf32, #tpu.memory_space<vmem>>, %arg9: memref<2x12x24xf32, #tpu.memory_space<vmem>>, %arg10: memref<1x24xf32, #tpu.memory_space<vmem>>, %arg11: memref<8x24xf32, #tpu.memory_space<vmem>>) attributes {dimension_semantics = [], scalar_prefetch = 0 : i64, scratch_operands = 0 : i64, tpu.core_type = #tpu.core_type<tc>} {
    %c0 = arith.constant 0 : index
    %c0_0 = arith.constant 0 : index
    %0 = vector.load %arg0[%c0, %c0_0] : memref<8x24xf32, #tpu.memory_space<vmem>>, vector<8x24xf32>
    %1 = vector.extract_strided_slice %0 {offsets = [0, 0], sizes = [8, 1], strides = [1, 1]} : vector<8x24xf32> to vector<8x1xf32>
    %2 = vector.extract_strided_slice %0 {offsets = [0, 0], sizes = [8, 23], strides = [1, 1]} : vector<8x24xf32> to vector<8x23xf32>
    %3 = tpu.concatenate %1, %2 in 1 : vector<8x1xf32>, vector<8x23xf32> -> vector<8x24xf32>
    %4 = arith.subf %0, %3 : vector<8x24xf32>
    %c0_1 = arith.constant 0 : index
    %c0_2 = arith.constant 0 : index
    %5 = vector.load %arg1[%c0_1, %c0_2] : memref<12x512xf32, #tpu.memory_space<vmem>>, vector<12x512xf32>
    %c0_3 = arith.constant 0 : index
    %c0_4 = arith.constant 0 : index
    %6 = vector.load %arg2[%c0_3, %c0_4] : memref<2x512xf32, #tpu.memory_space<vmem>>, vector<2x512xf32>
    %c0_5 = arith.constant 0 : index
    %c0_6 = arith.constant 0 : index
    %7 = vector.load %arg3[%c0_5, %c0_6] : memref<16x512xf32, #tpu.memory_space<vmem>>, vector<16x512xf32>
    %c0_7 = arith.constant 0 : index
    %c0_8 = arith.constant 0 : index
    %8 = vector.load %arg4[%c0_7, %c0_8] : memref<512x512xf32, #tpu.memory_space<vmem>>, vector<512x512xf32>
    %c0_9 = arith.constant 0 : index
    %c0_10 = arith.constant 0 : index
    %9 = vector.load %arg5[%c0_9, %c0_10] : memref<512x8xf32, #tpu.memory_space<vmem>>, vector<512x8xf32>
    %c0_11 = arith.constant 0 : index
    %c0_12 = arith.constant 0 : index
    %10 = vector.load %arg6[%c0_11, %c0_12] : memref<8x512xf32, #tpu.memory_space<vmem>>, vector<8x512xf32>
    %c0_13 = arith.constant 0 : index
    %c0_14 = arith.constant 0 : index
    %11 = vector.load %arg7[%c0_13, %c0_14] : memref<512x12xf32, #tpu.memory_space<vmem>>, vector<512x12xf32>
    %c0_15 = arith.constant 0 : index
    %c0_16 = arith.constant 0 : index
    %12 = vector.load %arg8[%c0_15, %c0_16] : memref<1x12xf32, #tpu.memory_space<vmem>>, vector<1x12xf32>
    %c0_17 = arith.constant 0 : index
    %c0_18 = arith.constant 0 : index
    %c0_19 = arith.constant 0 : index
    %13 = vector.load %arg9[%c0_17, %c0_18, %c0_19] : memref<2x12x24xf32, #tpu.memory_space<vmem>>, vector<2x12x24xf32>
    %c0_20 = arith.constant 0 : index
    %c0_21 = arith.constant 0 : index
    %14 = vector.load %arg10[%c0_20, %c0_21] : memref<1x24xf32, #tpu.memory_space<vmem>>, vector<1x24xf32>
    %15 = vector.extract_strided_slice %7 {offsets = [9, 0], sizes = [1, 512], strides = [1, 1]} : vector<16x512xf32> to vector<1x512xf32>
    %16 = vector.extract_strided_slice %7 {offsets = [10, 0], sizes = [1, 512], strides = [1, 1]} : vector<16x512xf32> to vector<1x512xf32>
    %17 = vector.extract_strided_slice %7 {offsets = [11, 0], sizes = [1, 512], strides = [1, 1]} : vector<16x512xf32> to vector<1x512xf32>
    %18 = vector.extract_strided_slice %7 {offsets = [12, 0], sizes = [1, 512], strides = [1, 1]} : vector<16x512xf32> to vector<1x512xf32>
    %19 = vector.extract_strided_slice %7 {offsets = [13, 0], sizes = [1, 512], strides = [1, 1]} : vector<16x512xf32> to vector<1x512xf32>
    %20 = vector.extract_strided_slice %7 {offsets = [14, 0], sizes = [1, 512], strides = [1, 1]} : vector<16x512xf32> to vector<1x512xf32>
    %21 = tpu.iota {dimensions = array<i32: 1>} : vector<8x512xi32>
    %c64_i32 = arith.constant 64 : i32
    %c0_i32 = arith.constant 0 : i32
    %22 = arith.cmpi eq, %c64_i32, %c0_i32 : i32
    %c1_i32 = arith.constant 1 : i32
    %23 = arith.select %22, %c1_i32, %c64_i32 : i32
    %24 = vector.broadcast %23 : i32 to vector<8x512xi32>
    %25 = arith.remsi %21, %24 : vector<8x512xi32>
    %c0_i32_22 = arith.constant 0 : i32
    %26 = vector.broadcast %c0_i32_22 : i32 to vector<8x512xi32>
    %27 = arith.cmpi ne, %25, %26 : vector<8x512xi32>
    %c0_i32_23 = arith.constant 0 : i32
    %28 = vector.broadcast %c0_i32_23 : i32 to vector<8x512xi32>
    %29 = arith.cmpi slt, %25, %28 : vector<8x512xi32>
    %c0_i32_24 = arith.constant 0 : i32
    %30 = arith.cmpi slt, %23, %c0_i32_24 : i32
    %31 = vector.broadcast %30 : i1 to vector<8x512xi1>
    %32 = vector.broadcast %31 : vector<8x512xi1> to vector<8x512xi1>
    %33 = arith.xori %29, %32 : vector<8x512xi1>
    %34 = arith.andi %33, %27 : vector<8x512xi1>
    %35 = vector.broadcast %23 : i32 to vector<8x512xi32>
    %36 = arith.addi %25, %35 : vector<8x512xi32>
    %37 = arith.select %34, %36, %25 : vector<8x512xi1>, vector<8x512xi32>
    %38 = vector.extract_strided_slice %4 {offsets = [0, 0], sizes = [8, 12], strides = [1, 1]} : vector<8x24xf32> to vector<8x12xf32>
    %cst = arith.constant dense<0.000000e+00> : vector<8x512xf32>
    %39 = tpu.matmul %38, %5, %cst {dimension_numbers = #tpu.dot_dimension_numbers<[1], [0], [0], [1], [0, 0, 1, 1], [], []>} : vector<8x12xf32>, vector<12x512xf32>, vector<8x512xf32> -> vector<8x512xf32>
    %40 = vector.extract_strided_slice %6 {offsets = [0, 0], sizes = [1, 512], strides = [1, 1]} : vector<2x512xf32> to vector<1x512xf32>
    %41 = vector.broadcast %40 : vector<1x512xf32> to vector<8x512xf32>
    %42 = arith.addf %39, %41 : vector<8x512xf32>
    %cst_25 = arith.constant dense<0.000000e+00> : vector<8x8xf32>
    %43 = tpu.matmul %42, %9, %cst_25 {dimension_numbers = #tpu.dot_dimension_numbers<[1], [0], [0], [1], [0, 0, 1, 1], [], []>} : vector<8x512xf32>, vector<512x8xf32>, vector<8x8xf32> -> vector<8x8xf32>
    %cst_26 = arith.constant dense<0.000000e+00> : vector<8x512xf32>
    %44 = tpu.matmul %43, %10, %cst_26 {dimension_numbers = #tpu.dot_dimension_numbers<[1], [0], [0], [1], [0, 0, 1, 1], [], []>} : vector<8x8xf32>, vector<8x512xf32>, vector<8x512xf32> -> vector<8x512xf32>
    %45 = arith.subf %42, %44 : vector<8x512xf32>
    %46 = arith.mulf %45, %45 : vector<8x512xf32>
    %cst_27 = arith.constant dense<0.000000e+00> : vector<8x8xf32>
    %47 = tpu.matmul %46, %9, %cst_27 {dimension_numbers = #tpu.dot_dimension_numbers<[1], [0], [0], [1], [0, 0, 1, 1], [], []>} : vector<8x512xf32>, vector<512x8xf32>, vector<8x8xf32> -> vector<8x8xf32>
    %cst_28 = arith.constant 9.99999974E-6 : f32
    %48 = vector.broadcast %cst_28 : f32 to vector<8x8xf32>
    %49 = arith.addf %47, %48 : vector<8x8xf32>
    %50 = math.rsqrt %49 : vector<8x8xf32>
    %cst_29 = arith.constant dense<0.000000e+00> : vector<8x512xf32>
    %51 = tpu.matmul %50, %10, %cst_29 {dimension_numbers = #tpu.dot_dimension_numbers<[1], [0], [0], [1], [0, 0, 1, 1], [], []>} : vector<8x8xf32>, vector<8x512xf32>, vector<8x512xf32> -> vector<8x512xf32>
    %52 = arith.mulf %45, %51 : vector<8x512xf32>
    %53 = vector.broadcast %17 : vector<1x512xf32> to vector<8x512xf32>
    %54 = arith.mulf %52, %53 : vector<8x512xf32>
    %55 = vector.broadcast %18 : vector<1x512xf32> to vector<8x512xf32>
    %56 = arith.addf %54, %55 : vector<8x512xf32>
    %57 = vector.extract_strided_slice %4 {offsets = [0, 12], sizes = [8, 12], strides = [1, 1]} : vector<8x24xf32> to vector<8x12xf32>
    %cst_30 = arith.constant dense<0.000000e+00> : vector<8x512xf32>
    %58 = tpu.matmul %57, %5, %cst_30 {dimension_numbers = #tpu.dot_dimension_numbers<[1], [0], [0], [1], [0, 0, 1, 1], [], []>} : vector<8x12xf32>, vector<12x512xf32>, vector<8x512xf32> -> vector<8x512xf32>
    %59 = vector.extract_strided_slice %6 {offsets = [1, 0], sizes = [1, 512], strides = [1, 1]} : vector<2x512xf32> to vector<1x512xf32>
    %60 = vector.broadcast %59 : vector<1x512xf32> to vector<8x512xf32>
    %61 = arith.addf %58, %60 : vector<8x512xf32>
    %cst_31 = arith.constant dense<0.000000e+00> : vector<8x8xf32>
    %62 = tpu.matmul %61, %9, %cst_31 {dimension_numbers = #tpu.dot_dimension_numbers<[1], [0], [0], [1], [0, 0, 1, 1], [], []>} : vector<8x512xf32>, vector<512x8xf32>, vector<8x8xf32> -> vector<8x8xf32>
    %cst_32 = arith.constant dense<0.000000e+00> : vector<8x512xf32>
    %63 = tpu.matmul %62, %10, %cst_32 {dimension_numbers = #tpu.dot_dimension_numbers<[1], [0], [0], [1], [0, 0, 1, 1], [], []>} : vector<8x8xf32>, vector<8x512xf32>, vector<8x512xf32> -> vector<8x512xf32>
    %64 = arith.subf %61, %63 : vector<8x512xf32>
    %65 = arith.mulf %64, %64 : vector<8x512xf32>
    %cst_33 = arith.constant dense<0.000000e+00> : vector<8x8xf32>
    %66 = tpu.matmul %65, %9, %cst_33 {dimension_numbers = #tpu.dot_dimension_numbers<[1], [0], [0], [1], [0, 0, 1, 1], [], []>} : vector<8x512xf32>, vector<512x8xf32>, vector<8x8xf32> -> vector<8x8xf32>
    %cst_34 = arith.constant 9.99999974E-6 : f32
    %67 = vector.broadcast %cst_34 : f32 to vector<8x8xf32>
    %68 = arith.addf %66, %67 : vector<8x8xf32>
    %69 = math.rsqrt %68 : vector<8x8xf32>
    %cst_35 = arith.constant dense<0.000000e+00> : vector<8x512xf32>
    %70 = tpu.matmul %69, %10, %cst_35 {dimension_numbers = #tpu.dot_dimension_numbers<[1], [0], [0], [1], [0, 0, 1, 1], [], []>} : vector<8x8xf32>, vector<8x512xf32>, vector<8x512xf32> -> vector<8x512xf32>
    %71 = arith.mulf %64, %70 : vector<8x512xf32>
    %72 = vector.broadcast %17 : vector<1x512xf32> to vector<8x512xf32>
    %73 = arith.mulf %71, %72 : vector<8x512xf32>
    %74 = vector.broadcast %18 : vector<1x512xf32> to vector<8x512xf32>
    %75 = arith.addf %73, %74 : vector<8x512xf32>
    %cst_36 = arith.constant 0.000000e+00 : f32
    %76 = vector.broadcast %cst_36 : f32 to vector<8x1xf32>
    %77 = vector.extract_strided_slice %56 {offsets = [0, 0], sizes = [8, 511], strides = [1, 1]} : vector<8x512xf32> to vector<8x511xf32>
    %78 = tpu.concatenate %76, %77 in 1 : vector<8x1xf32>, vector<8x511xf32> -> vector<8x512xf32>
    %c0_i32_37 = arith.constant 0 : i32
    %79 = vector.broadcast %c0_i32_37 : i32 to vector<8x512xi32>
    %80 = arith.cmpi ne, %37, %79 : vector<8x512xi32>
    %cst_38 = arith.constant 0.000000e+00 : f32
    %81 = vector.broadcast %cst_38 : f32 to vector<8x512xf32>
    %82 = arith.select %80, %78, %81 : vector<8x512xi1>, vector<8x512xf32>
    %83 = vector.extract_strided_slice %56 {offsets = [0, 1], sizes = [8, 511], strides = [1, 1]} : vector<8x512xf32> to vector<8x511xf32>
    %cst_39 = arith.constant 0.000000e+00 : f32
    %84 = vector.broadcast %cst_39 : f32 to vector<8x1xf32>
    %85 = tpu.concatenate %83, %84 in 1 : vector<8x511xf32>, vector<8x1xf32> -> vector<8x512xf32>
    %c63_i32 = arith.constant 63 : i32
    %86 = vector.broadcast %c63_i32 : i32 to vector<8x512xi32>
    %87 = arith.cmpi ne, %37, %86 : vector<8x512xi32>
    %cst_40 = arith.constant 0.000000e+00 : f32
    %88 = vector.broadcast %cst_40 : f32 to vector<8x512xf32>
    %89 = arith.select %87, %85, %88 : vector<8x512xi1>, vector<8x512xf32>
    %cst_41 = arith.constant 0.000000e+00 : f32
    %90 = vector.broadcast %cst_41 : f32 to vector<8x1xf32>
    %91 = vector.extract_strided_slice %75 {offsets = [0, 0], sizes = [8, 511], strides = [1, 1]} : vector<8x512xf32> to vector<8x511xf32>
    %92 = tpu.concatenate %90, %91 in 1 : vector<8x1xf32>, vector<8x511xf32> -> vector<8x512xf32>
    %c0_i32_42 = arith.constant 0 : i32
    %93 = vector.broadcast %c0_i32_42 : i32 to vector<8x512xi32>
    %94 = arith.cmpi ne, %37, %93 : vector<8x512xi32>
    %cst_43 = arith.constant 0.000000e+00 : f32
    %95 = vector.broadcast %cst_43 : f32 to vector<8x512xf32>
    %96 = arith.select %94, %92, %95 : vector<8x512xi1>, vector<8x512xf32>
    %97 = vector.extract_strided_slice %75 {offsets = [0, 1], sizes = [8, 511], strides = [1, 1]} : vector<8x512xf32> to vector<8x511xf32>
    %cst_44 = arith.constant 0.000000e+00 : f32
    %98 = vector.broadcast %cst_44 : f32 to vector<8x1xf32>
    %99 = tpu.concatenate %97, %98 in 1 : vector<8x511xf32>, vector<8x1xf32> -> vector<8x512xf32>
    %c63_i32_45 = arith.constant 63 : i32
    %100 = vector.broadcast %c63_i32_45 : i32 to vector<8x512xi32>
    %101 = arith.cmpi ne, %37, %100 : vector<8x512xi32>
    %cst_46 = arith.constant 0.000000e+00 : f32
    %102 = vector.broadcast %cst_46 : f32 to vector<8x512xf32>
    %103 = arith.select %101, %99, %102 : vector<8x512xi1>, vector<8x512xf32>
    %cst_47 = arith.constant 0.000000e+00 : f32
    %104 = vector.broadcast %cst_47 : f32 to vector<8x512xf32>
    %105 = vector.extract_strided_slice %7 {offsets = [3, 0], sizes = [1, 512], strides = [1, 1]} : vector<16x512xf32> to vector<1x512xf32>
    %106 = vector.broadcast %105 : vector<1x512xf32> to vector<8x512xf32>
    %107 = arith.mulf %106, %82 : vector<8x512xf32>
    %108 = arith.addf %104, %107 : vector<8x512xf32>
    %109 = vector.extract_strided_slice %7 {offsets = [4, 0], sizes = [1, 512], strides = [1, 1]} : vector<16x512xf32> to vector<1x512xf32>
    %110 = vector.broadcast %109 : vector<1x512xf32> to vector<8x512xf32>
    %111 = arith.mulf %110, %56 : vector<8x512xf32>
    %112 = arith.addf %108, %111 : vector<8x512xf32>
    %113 = vector.extract_strided_slice %7 {offsets = [5, 0], sizes = [1, 512], strides = [1, 1]} : vector<16x512xf32> to vector<1x512xf32>
    %114 = vector.broadcast %113 : vector<1x512xf32> to vector<8x512xf32>
    %115 = arith.mulf %114, %89 : vector<8x512xf32>
    %116 = arith.addf %112, %115 : vector<8x512xf32>
    %117 = vector.extract_strided_slice %7 {offsets = [6, 0], sizes = [1, 512], strides = [1, 1]} : vector<16x512xf32> to vector<1x512xf32>
    %118 = vector.broadcast %117 : vector<1x512xf32> to vector<8x512xf32>
    %119 = arith.mulf %118, %96 : vector<8x512xf32>
    %120 = arith.addf %116, %119 : vector<8x512xf32>
    %121 = vector.extract_strided_slice %7 {offsets = [7, 0], sizes = [1, 512], strides = [1, 1]} : vector<16x512xf32> to vector<1x512xf32>
    %122 = vector.broadcast %121 : vector<1x512xf32> to vector<8x512xf32>
    %123 = arith.mulf %122, %75 : vector<8x512xf32>
    %124 = arith.addf %120, %123 : vector<8x512xf32>
    %125 = vector.extract_strided_slice %7 {offsets = [8, 0], sizes = [1, 512], strides = [1, 1]} : vector<16x512xf32> to vector<1x512xf32>
    %126 = vector.broadcast %125 : vector<1x512xf32> to vector<8x512xf32>
    %127 = arith.mulf %126, %103 : vector<8x512xf32>
    %128 = arith.addf %124, %127 : vector<8x512xf32>
    %129 = vector.broadcast %15 : vector<1x512xf32> to vector<8x512xf32>
    %130 = arith.addf %128, %129 : vector<8x512xf32>
    %cst_48 = arith.constant 0.000000e+00 : f32
    %131 = vector.broadcast %cst_48 : f32 to vector<8x512xf32>
    %132 = arith.maximumf %130, %131 : vector<8x512xf32>
    %cst_49 = arith.constant 0.000000e+00 : f32
    %133 = vector.broadcast %cst_49 : f32 to vector<8x512xf32>
    %134 = vector.extract_strided_slice %7 {offsets = [0, 0], sizes = [1, 512], strides = [1, 1]} : vector<16x512xf32> to vector<1x512xf32>
    %135 = vector.broadcast %134 : vector<1x512xf32> to vector<8x512xf32>
    %136 = arith.mulf %135, %82 : vector<8x512xf32>
    %137 = arith.addf %133, %136 : vector<8x512xf32>
    %138 = vector.extract_strided_slice %7 {offsets = [1, 0], sizes = [1, 512], strides = [1, 1]} : vector<16x512xf32> to vector<1x512xf32>
    %139 = vector.broadcast %138 : vector<1x512xf32> to vector<8x512xf32>
    %140 = arith.mulf %139, %56 : vector<8x512xf32>
    %141 = arith.addf %137, %140 : vector<8x512xf32>
    %142 = vector.extract_strided_slice %7 {offsets = [2, 0], sizes = [1, 512], strides = [1, 1]} : vector<16x512xf32> to vector<1x512xf32>
    %143 = vector.broadcast %142 : vector<1x512xf32> to vector<8x512xf32>
    %144 = arith.mulf %143, %89 : vector<8x512xf32>
    %145 = arith.addf %141, %144 : vector<8x512xf32>
    %146 = vector.extract_strided_slice %7 {offsets = [3, 0], sizes = [1, 512], strides = [1, 1]} : vector<16x512xf32> to vector<1x512xf32>
    %147 = vector.broadcast %146 : vector<1x512xf32> to vector<8x512xf32>
    %148 = arith.mulf %147, %96 : vector<8x512xf32>
    %149 = arith.addf %145, %148 : vector<8x512xf32>
    %150 = vector.extract_strided_slice %7 {offsets = [4, 0], sizes = [1, 512], strides = [1, 1]} : vector<16x512xf32> to vector<1x512xf32>
    %151 = vector.broadcast %150 : vector<1x512xf32> to vector<8x512xf32>
    %152 = arith.mulf %151, %75 : vector<8x512xf32>
    %153 = arith.addf %149, %152 : vector<8x512xf32>
    %154 = vector.extract_strided_slice %7 {offsets = [5, 0], sizes = [1, 512], strides = [1, 1]} : vector<16x512xf32> to vector<1x512xf32>
    %155 = vector.broadcast %154 : vector<1x512xf32> to vector<8x512xf32>
    %156 = arith.mulf %155, %103 : vector<8x512xf32>
    %157 = arith.addf %153, %156 : vector<8x512xf32>
    %158 = vector.broadcast %15 : vector<1x512xf32> to vector<8x512xf32>
    %159 = arith.addf %157, %158 : vector<8x512xf32>
    %cst_50 = arith.constant 0.000000e+00 : f32
    %160 = vector.broadcast %cst_50 : f32 to vector<8x512xf32>
    %161 = arith.maximumf %159, %160 : vector<8x512xf32>
    %cst_51 = arith.constant dense<0.000000e+00> : vector<8x512xf32>
    %162 = tpu.matmul %132, %8, %cst_51 {dimension_numbers = #tpu.dot_dimension_numbers<[1], [0], [0], [1], [0, 0, 1, 1], [], []>} : vector<8x512xf32>, vector<512x512xf32>, vector<8x512xf32> -> vector<8x512xf32>
    %163 = vector.broadcast %16 : vector<1x512xf32> to vector<8x512xf32>
    %164 = arith.addf %162, %163 : vector<8x512xf32>
    %cst_52 = arith.constant 0.000000e+00 : f32
    %165 = vector.broadcast %cst_52 : f32 to vector<8x512xf32>
    %166 = arith.maximumf %164, %165 : vector<8x512xf32>
    %cst_53 = arith.constant dense<0.000000e+00> : vector<8x8xf32>
    %167 = tpu.matmul %166, %9, %cst_53 {dimension_numbers = #tpu.dot_dimension_numbers<[1], [0], [0], [1], [0, 0, 1, 1], [], []>} : vector<8x512xf32>, vector<512x8xf32>, vector<8x8xf32> -> vector<8x8xf32>
    %cst_54 = arith.constant dense<0.000000e+00> : vector<8x512xf32>
    %168 = tpu.matmul %167, %10, %cst_54 {dimension_numbers = #tpu.dot_dimension_numbers<[1], [0], [0], [1], [0, 0, 1, 1], [], []>} : vector<8x8xf32>, vector<8x512xf32>, vector<8x512xf32> -> vector<8x512xf32>
    %169 = arith.subf %166, %168 : vector<8x512xf32>
    %170 = arith.mulf %169, %169 : vector<8x512xf32>
    %cst_55 = arith.constant dense<0.000000e+00> : vector<8x8xf32>
    %171 = tpu.matmul %170, %9, %cst_55 {dimension_numbers = #tpu.dot_dimension_numbers<[1], [0], [0], [1], [0, 0, 1, 1], [], []>} : vector<8x512xf32>, vector<512x8xf32>, vector<8x8xf32> -> vector<8x8xf32>
    %cst_56 = arith.constant 9.99999974E-6 : f32
    %172 = vector.broadcast %cst_56 : f32 to vector<8x8xf32>
    %173 = arith.addf %171, %172 : vector<8x8xf32>
    %174 = math.rsqrt %173 : vector<8x8xf32>
    %cst_57 = arith.constant dense<0.000000e+00> : vector<8x512xf32>
    %175 = tpu.matmul %174, %10, %cst_57 {dimension_numbers = #tpu.dot_dimension_numbers<[1], [0], [0], [1], [0, 0, 1, 1], [], []>} : vector<8x8xf32>, vector<8x512xf32>, vector<8x512xf32> -> vector<8x512xf32>
    %176 = arith.mulf %169, %175 : vector<8x512xf32>
    %177 = vector.broadcast %19 : vector<1x512xf32> to vector<8x512xf32>
    %178 = arith.mulf %176, %177 : vector<8x512xf32>
    %179 = vector.broadcast %20 : vector<1x512xf32> to vector<8x512xf32>
    %180 = arith.addf %178, %179 : vector<8x512xf32>
    %cst_58 = arith.constant dense<0.000000e+00> : vector<8x12xf32>
    %181 = tpu.matmul %180, %11, %cst_58 {dimension_numbers = #tpu.dot_dimension_numbers<[1], [0], [0], [1], [0, 0, 1, 1], [], []>} : vector<8x512xf32>, vector<512x12xf32>, vector<8x12xf32> -> vector<8x12xf32>
    %182 = vector.broadcast %12 : vector<1x12xf32> to vector<8x12xf32>
    %183 = arith.addf %181, %182 : vector<8x12xf32>
    %cst_59 = arith.constant dense<0.000000e+00> : vector<8x512xf32>
    %184 = tpu.matmul %161, %8, %cst_59 {dimension_numbers = #tpu.dot_dimension_numbers<[1], [0], [0], [1], [0, 0, 1, 1], [], []>} : vector<8x512xf32>, vector<512x512xf32>, vector<8x512xf32> -> vector<8x512xf32>
    %185 = vector.broadcast %16 : vector<1x512xf32> to vector<8x512xf32>
    %186 = arith.addf %184, %185 : vector<8x512xf32>
    %cst_60 = arith.constant 0.000000e+00 : f32
    %187 = vector.broadcast %cst_60 : f32 to vector<8x512xf32>
    %188 = arith.maximumf %186, %187 : vector<8x512xf32>
    %cst_61 = arith.constant dense<0.000000e+00> : vector<8x8xf32>
    %189 = tpu.matmul %188, %9, %cst_61 {dimension_numbers = #tpu.dot_dimension_numbers<[1], [0], [0], [1], [0, 0, 1, 1], [], []>} : vector<8x512xf32>, vector<512x8xf32>, vector<8x8xf32> -> vector<8x8xf32>
    %cst_62 = arith.constant dense<0.000000e+00> : vector<8x512xf32>
    %190 = tpu.matmul %189, %10, %cst_62 {dimension_numbers = #tpu.dot_dimension_numbers<[1], [0], [0], [1], [0, 0, 1, 1], [], []>} : vector<8x8xf32>, vector<8x512xf32>, vector<8x512xf32> -> vector<8x512xf32>
    %191 = arith.subf %188, %190 : vector<8x512xf32>
    %192 = arith.mulf %191, %191 : vector<8x512xf32>
    %cst_63 = arith.constant dense<0.000000e+00> : vector<8x8xf32>
    %193 = tpu.matmul %192, %9, %cst_63 {dimension_numbers = #tpu.dot_dimension_numbers<[1], [0], [0], [1], [0, 0, 1, 1], [], []>} : vector<8x512xf32>, vector<512x8xf32>, vector<8x8xf32> -> vector<8x8xf32>
    %cst_64 = arith.constant 9.99999974E-6 : f32
    %194 = vector.broadcast %cst_64 : f32 to vector<8x8xf32>
    %195 = arith.addf %193, %194 : vector<8x8xf32>
    %196 = math.rsqrt %195 : vector<8x8xf32>
    %cst_65 = arith.constant dense<0.000000e+00> : vector<8x512xf32>
    %197 = tpu.matmul %196, %10, %cst_65 {dimension_numbers = #tpu.dot_dimension_numbers<[1], [0], [0], [1], [0, 0, 1, 1], [], []>} : vector<8x8xf32>, vector<8x512xf32>, vector<8x512xf32> -> vector<8x512xf32>
    %198 = arith.mulf %191, %197 : vector<8x512xf32>
    %199 = vector.broadcast %19 : vector<1x512xf32> to vector<8x512xf32>
    %200 = arith.mulf %198, %199 : vector<8x512xf32>
    %201 = vector.broadcast %20 : vector<1x512xf32> to vector<8x512xf32>
    %202 = arith.addf %200, %201 : vector<8x512xf32>
    %cst_66 = arith.constant dense<0.000000e+00> : vector<8x12xf32>
    %203 = tpu.matmul %202, %11, %cst_66 {dimension_numbers = #tpu.dot_dimension_numbers<[1], [0], [0], [1], [0, 0, 1, 1], [], []>} : vector<8x512xf32>, vector<512x12xf32>, vector<8x12xf32> -> vector<8x12xf32>
    %204 = vector.broadcast %12 : vector<1x12xf32> to vector<8x12xf32>
    %205 = arith.addf %203, %204 : vector<8x12xf32>
    %cst_67 = arith.constant 0.000000e+00 : f32
    %206 = vector.broadcast %cst_67 : f32 to vector<8x24xf32>
    %207 = vector.broadcast %14 : vector<1x24xf32> to vector<8x24xf32>
    %208 = arith.addf %206, %207 : vector<8x24xf32>
    %209 = vector.extract_strided_slice %13 {offsets = [0, 0, 0], sizes = [1, 12, 24], strides = [1, 1, 1]} : vector<2x12x24xf32> to vector<1x12x24xf32>
    %210 = vector.shape_cast %209 : vector<1x12x24xf32> to vector<12x24xf32>
    %cst_68 = arith.constant dense<0.000000e+00> : vector<8x24xf32>
    %211 = tpu.matmul %183, %210, %cst_68 {dimension_numbers = #tpu.dot_dimension_numbers<[1], [0], [0], [1], [0, 0, 1, 1], [], []>} : vector<8x12xf32>, vector<12x24xf32>, vector<8x24xf32> -> vector<8x24xf32>
    %212 = arith.addf %208, %211 : vector<8x24xf32>
    %213 = vector.extract_strided_slice %13 {offsets = [1, 0, 0], sizes = [1, 12, 24], strides = [1, 1, 1]} : vector<2x12x24xf32> to vector<1x12x24xf32>
    %214 = vector.shape_cast %213 : vector<1x12x24xf32> to vector<12x24xf32>
    %cst_69 = arith.constant dense<0.000000e+00> : vector<8x24xf32>
    %215 = tpu.matmul %205, %214, %cst_69 {dimension_numbers = #tpu.dot_dimension_numbers<[1], [0], [0], [1], [0, 0, 1, 1], [], []>} : vector<8x12xf32>, vector<12x24xf32>, vector<8x24xf32> -> vector<8x24xf32>
    %216 = arith.addf %212, %215 : vector<8x24xf32>
    %217 = arith.addf %216, %3 : vector<8x24xf32>
    %c0_70 = arith.constant 0 : index
    %c0_71 = arith.constant 0 : index
    %218 = vector.load %arg11[%c0_70, %c0_71] : memref<8x24xf32, #tpu.memory_space<vmem>>, vector<8x24xf32>
    tpu.vector_store %arg11[%c0_70, %c0_71], %217 {strides = array<i32>} : memref<8x24xf32, #tpu.memory_space<vmem>>, vector<8x24xf32>,
    return
  }
}

</mosaic_0001>

<llo_original>
// kernel: model_forward.1
$region0: #{model_forward.1}
  #allocation0 [shape = 'u32[]', space=smem, size = 0x4, offset = 0x4, fixed_abs, tag = 'smem constant byte address 0x4 - core index']
  #allocation1 [shape = 'u32[72,128]{1,0:T(1,128)}', space=vmem, size = 0x9000, scoped, tag = 'internal scratch']
  %s0 = inlined_call_operand.vmem [shape: f32[8,24], index: 0, kind: input, shape index: {}]
  %s1 = inlined_call_operand.vmem [shape: f32[12,512], index: 1, kind: input, shape index: {}]
  %s2 = inlined_call_operand.vmem [shape: f32[2,512], index: 2, kind: input, shape index: {}]
  %s3 = inlined_call_operand.vmem [shape: f32[16,512], index: 3, kind: input, shape index: {}]
  %s4 = inlined_call_operand.hbm [shape: f32[512,512], index: 4, kind: input, shape index: {}]
  %s5 = inlined_call_operand.vmem [shape: f32[512,8], index: 5, kind: input, shape index: {}]
  %s6 = inlined_call_operand.vmem [shape: f32[8,512], index: 6, kind: input, shape index: {}]
  %s7 = inlined_call_operand.vmem [shape: f32[512,12], index: 7, kind: input, shape index: {}]
  %s8 = inlined_call_operand.vmem [shape: f32[1,12], index: 8, kind: input, shape index: {}]
  %s9 = inlined_call_operand.vmem [shape: f32[2,12,24], index: 9, kind: input, shape index: {}]
  %s10 = inlined_call_operand.vmem [shape: f32[1,24], index: 10, kind: input, shape index: {}]
  %s11 = inlined_call_operand.hbm [shape: f32[8,24], index: 11, kind: output, shape index: {}]
  %s12 = sld [smem:[#allocation0]]
  $region58: #{model_forward.1} parent=0
    _
  %s14 = ssub.s32 1, %s12
  %s15 = scalar_select 0, %s14, %s12
  $region1: #{model_forward.1} parent=0
    #allocation2 [shape = 'u8[1048576]{0}', space=vmem, size = 0x100000, scoped, tag = 'input window, operand 4, single buffered']
    #allocation3 [shape = 's32[1]{0}', space=sflag, size = 0x4, scoped, tag = 'scoped memory for model_forward.1']
    #allocation4 [shape = 's32[1]{0}', space=sflag, size = 0x4, scoped, tag = 'scoped memory for model_forward.1']
    #allocation5 [shape = 'u8[4096]{0}', space=vmem, size = 0x1000, scoped, tag = 'output window, operand 0, single buffered']
    %16 = vsyncpa [#allocation3], 0
    %17 = vsyncpa [#allocation4], 0
    // Predicated region
    $region2: #{model_forward.1} parent=1 // pred_check
      _
    $region3: #{model_forward.1} parent=1 // pred_check_branch
      %19 = sbr.rel (0) target = $region5
    $region4: #{model_forward.1} parent=1 // pred_region
      _
    $region5: #{model_forward.1} parent=1 // pred_fallthru
      _
    // Predicated region
    $region6: #{model_forward.1} parent=1 // pred_check
      _
    $region7: #{model_forward.1} parent=1 // pred_check_branch
      %21 = sbr.rel (0) target = $region9
    $region8: #{model_forward.1} parent=1 // pred_region
      _
    $region9: #{model_forward.1} parent=1 // pred_fallthru
      _
    // Predicated region
    $region10: #{model_forward.1} parent=1 // pred_check
      _
    $region11: #{model_forward.1} parent=1 // pred_check_branch
      %23 = sbr.rel (0) target = $region13
    $region12: #{model_forward.1} parent=1 // pred_region
      _
    $region13: #{model_forward.1} parent=1 // pred_fallthru
      _
    // Predicated region
    $region14: #{model_forward.1} parent=1 // pred_check
      _
    $region15: #{model_forward.1} parent=1 // pred_check_branch
      %25 = sbr.rel (0) target = $region17
    $region16: #{model_forward.1} parent=1 // pred_region
      _
    $region17: #{model_forward.1} parent=1 // pred_fallthru
      _
    // Predicated region
    $region18: #{model_forward.1} parent=1 // pred_check
      _
    $region19: #{model_forward.1} parent=1 // pred_check_branch
      %27 = sbr.rel (0) target = $region21
    $region20: #{model_forward.1} parent=1 // pred_region
      %29 = vsyncadd [#allocation3], 0
      %s30 = sshll.u32 %s4, 4
      %s31 = int_to_ptr.hbm [resolvable:$true] %s30
      %s32 = sshll.u32 [#allocation2], 4
      %s33 = int_to_ptr.vmem [resolvable:$true] %s32
      %38 = dma.hbm_to_vmem [thread:$0]  %s31, 32768, %s33, [#allocation3], 512, 512, 32
    $region21: #{model_forward.1} parent=1 // pred_fallthru
      _
    // Predicated region
    $region22: #{model_forward.1} parent=1 // pred_check
      _
    $region23: #{model_forward.1} parent=1 // pred_check_branch
      %40 = sbr.rel (0) target = $region25
    $region24: #{model_forward.1} parent=1 // pred_region
      _
    $region25: #{model_forward.1} parent=1 // pred_fallthru
      _
    // Predicated region
    $region26: #{model_forward.1} parent=1 // pred_check
      _
    $region27: #{model_forward.1} parent=1 // pred_check_branch
      %42 = sbr.rel (0) target = $region29
    $region28: #{model_forward.1} parent=1 // pred_region
      _
    $region29: #{model_forward.1} parent=1 // pred_fallthru
      _
    // Predicated region
    $region30: #{model_forward.1} parent=1 // pred_check
      _
    $region31: #{model_forward.1} parent=1 // pred_check_branch
      %44 = sbr.rel (0) target = $region33
    $region32: #{model_forward.1} parent=1 // pred_region
      _
    $region33: #{model_forward.1} parent=1 // pred_fallthru
      _
    // Predicated region
    $region34: #{model_forward.1} parent=1 // pred_check
      _
    $region35: #{model_forward.1} parent=1 // pred_check_branch
      %46 = sbr.rel (0) target = $region37
    $region36: #{model_forward.1} parent=1 // pred_region
      _
    $region37: #{model_forward.1} parent=1 // pred_fallthru
      _
    // Predicated region
    $region38: #{model_forward.1} parent=1 // pred_check
      _
    $region39: #{model_forward.1} parent=1 // pred_check_branch
      %48 = sbr.rel (0) target = $region41
    $region40: #{model_forward.1} parent=1 // pred_region
      _
    $region41: #{model_forward.1} parent=1 // pred_fallthru
      _
    // Predicated region
    $region42: #{model_forward.1} parent=1 // pred_check
      _
    $region43: #{model_forward.1} parent=1 // pred_check_branch
      %50 = sbr.rel (0) target = $region45
    $region44: #{model_forward.1} parent=1 // pred_region
      _
    $region45: #{model_forward.1} parent=1 // pred_fallthru
      _
    // Predicated region
    $region46: #{model_forward.1} parent=1 // pred_check
      _
    $region47: #{model_forward.1} parent=1 // pred_check_branch
      %52 = sbr.rel (0) target = $region49
    $region48: #{model_forward.1} parent=1 // pred_region
      %54 = dma.done [#allocation3], 32768
    $region49: #{model_forward.1} parent=1 // pred_fallthru
      _
    %v55 = vld [vmem:[%s0] sm:$0xff]
    %57 = vrot.lane.b32.xlu0 %v55, 1
    %v58 = vpop.permute.xlu0 %57
    %vm60 = vcmask 7168
    %v61 = vsel %vm60, %v55, %v58
    %v62 = vsub.f32 %v55, %v61
    %v63 = vld [vmem:[%s1] sm:$0xff]
    %v64 = vld [vmem:[%s1 + $0x8] sm:$0xff]
    %v65 = vld [vmem:[%s1 + $0x10] sm:$0xff]
    %v66 = vld [vmem:[%s1 + $0x18] sm:$0xff]
    %v67 = vld [vmem:[%s1 + $0x20] sm:$0xf]
    %v68 = vld [vmem:[%s1 + $0x28] sm:$0xf]
    %v69 = vld [vmem:[%s1 + $0x30] sm:$0xf]
    %v70 = vld [vmem:[%s1 + $0x38] sm:$0xf]
    %v71 = vld [vmem:[%s2] sm:$0xff]
    %v72 = vld [vmem:[%s3] sm:$0xff]
    %v73 = vld [vmem:[%s3 + $0x8] sm:$0xff]
    %v74 = vld [vmem:[%s3 + $0x10] sm:$0xff]
    %v75 = vld [vmem:[%s3 + $0x18] sm:$0xff]
    %v76 = vld [vmem:[%s3 + $0x20] sm:$0xff]
    %v77 = vld [vmem:[%s3 + $0x28] sm:$0xff]
    %v78 = vld [vmem:[%s3 + $0x30] sm:$0xff]
    %v79 = vld [vmem:[%s3 + $0x38] sm:$0xff]
    %v80 = vld [vmem:[#allocation2] sm:$0xff]
    %v81 = vld [vmem:[#allocation2 + $0x8] sm:$0xff]
    %v82 = vld [vmem:[#allocation2 + $0x10] sm:$0xff]
    %v83 = vld [vmem:[#allocation2 + $0x18] sm:$0xff]
    %v84 = vld [vmem:[#allocation2 + $0x20] sm:$0xff]
    %v85 = vld [vmem:[#allocation2 + $0x28] sm:$0xff]
    %v86 = vld [vmem:[#allocation2 + $0x30] sm:$0xff]
    %v87 = vld [vmem:[#allocation2 + $0x38] sm:$0xff]
    %v88 = vld [vmem:[#allocation2 + $0x40] sm:$0xff]
    %v89 = vld [vmem:[#allocation2 + $0x48] sm:$0xff]
    %v90 = vld [vmem:[#allocation2 + $0x50] sm:$0xff]
    %v91 = vld [vmem:[#allocation2 + $0x58] sm:$0xff]
    %v92 = vld [vmem:[#allocation2 + $0x60] sm:$0xff]
    %v93 = vld [vmem:[#allocation2 + $0x68] sm:$0xff]
    %v94 = vld [vmem:[#allocation2 + $0x70] sm:$0xff]
    %v95 = vld [vmem:[#allocation2 + $0x78] sm:$0xff]
    %v96 = vld [vmem:[#allocation2 + $0x80] sm:$0xff]
    %v97 = vld [vmem:[#allocation2 + $0x88] sm:$0xff]
    %v98 = vld [vmem:[#allocation2 + $0x90] sm:$0xff]
    %v99 = vld [vmem:[#allocation2 + $0x98] sm:$0xff]
    %v100 = vld [vmem:[#allocation2 + $0xa0] sm:$0xff]
    %v101 = vld [vmem:[#allocation2 + $0xa8] sm:$0xff]
    %v102 = vld [vmem:[#allocation2 + $0xb0] sm:$0xff]
    %v103 = vld [vmem:[#allocation2 + $0xb8] sm:$0xff]
    %v104 = vld [vmem:[#allocation2 + $0xc0] sm:$0xff]
    %v105 = vld [vmem:[#allocation2 + $0xc8] sm:$0xff]
    %v106 = vld [vmem:[#allocation2 + $0xd0] sm:$0xff]
    %v107 = vld [vmem:[#allocation2 + $0xd8] sm:$0xff]
    %v108 = vld [vmem:[#allocation2 + $0xe0] sm:$0xff]
    %v109 = vld [vmem:[#allocation2 + $0xe8] sm:$0xff]
    %v110 = vld [vmem:[#allocation2 + $0xf0] sm:$0xff]
    %v111 = vld [vmem:[#allocation2 + $0xf8] sm:$0xff]
    %v112 = vld [vmem:[#allocation2 + $0x100] sm:$0xff]
    %v113 = vld [vmem:[#allocation2 + $0x108] sm:$0xff]
    %v114 = vld [vmem:[#allocation2 + $0x110] sm:$0xff]
    %v115 = vld [vmem:[#allocation2 + $0x118] sm:$0xff]
    %v116 = vld [vmem:[#allocation2 + $0x120] sm:$0xff]
    %v117 = vld [vmem:[#allocation2 + $0x128] sm:$0xff]
    %v118 = vld [vmem:[#allocation2 + $0x130] sm:$0xff]
    %v119 = vld [vmem:[#allocation2 + $0x138] sm:$0xff]
    %v120 = vld [vmem:[#allocation2 + $0x140] sm:$0xff]
    %v121 = vld [vmem:[#allocation2 + $0x148] sm:$0xff]
    %v122 = vld [vmem:[#allocation2 + $0x150] sm:$0xff]
    %v123 = vld [vmem:[#allocation2 + $0x158] sm:$0xff]
    %v124 = vld [vmem:[#allocation2 + $0x160] sm:$0xff]
    %v125 = vld [vmem:[#allocation2 + $0x168] sm:$0xff]
    %v126 = vld [vmem:[#allocation2 + $0x170] sm:$0xff]
    %v127 = vld [vmem:[#allocation2 + $0x178] sm:$0xff]
    %v128 = vld [vmem:[#allocation2 + $0x180] sm:$0xff]
    %v129 = vld [vmem:[#allocation2 + $0x188] sm:$0xff]
    %v130 = vld [vmem:[#allocation2 + $0x190] sm:$0xff]
    %v131 = vld [vmem:[#allocation2 + $0x198] sm:$0xff]
    %v132 = vld [vmem:[#allocation2 + $0x1a0] sm:$0xff]
    %v133 = vld [vmem:[#allocation2 + $0x1a8] sm:$0xff]
    %v134 = vld [vmem:[#allocation2 + $0x1b0] sm:$0xff]
    %v135 = vld [vmem:[#allocation2 + $0x1b8] sm:$0xff]
    %v136 = vld [vmem:[#allocation2 + $0x1c0] sm:$0xff]
    %v137 = vld [vmem:[#allocation2 + $0x1c8] sm:$0xff]
    %v138 = vld [vmem:[#allocation2 + $0x1d0] sm:$0xff]
    %v139 = vld [vmem:[#allocation2 + $0x1d8] sm:$0xff]
    %v140 = vld [vmem:[#allocation2 + $0x1e0] sm:$0xff]
    %v141 = vld [vmem:[#allocation2 + $0x1e8] sm:$0xff]
    %v142 = vld [vmem:[#allocation2 + $0x1f0] sm:$0xff]
    %v143 = vld [vmem:[#allocation2 + $0x1f8] sm:$0xff]
    %v144 = vld [vmem:[#allocation2 + $0x200] sm:$0xff]
    %v145 = vld [vmem:[#allocation2 + $0x208] sm:$0xff]
    %v146 = vld [vmem:[#allocation2 + $0x210] sm:$0xff]
    %v147 = vld [vmem:[#allocation2 + $0x218] sm:$0xff]
    %v148 = vld [vmem:[#allocation2 + $0x220] sm:$0xff]
    %v149 = vld [vmem:[#allocation2 + $0x228] sm:$0xff]
    %v150 = vld [vmem:[#allocation2 + $0x230] sm:$0xff]
    %v151 = vld [vmem:[#allocation2 + $0x238] sm:$0xff]
    %v152 = vld [vmem:[#allocation2 + $0x240] sm:$0xff]
    %v153 = vld [vmem:[#allocation2 + $0x248] sm:$0xff]
    %v154 = vld [vmem:[#allocation2 + $0x250] sm:$0xff]
    %v155 = vld [vmem:[#allocation2 + $0x258] sm:$0xff]
    %v156 = vld [vmem:[#allocation2 + $0x260] sm:$0xff]
    %v157 = vld [vmem:[#allocation2 + $0x268] sm:$0xff]
    %v158 = vld [vmem:[#allocation2 + $0x270] sm:$0xff]
    %v159 = vld [vmem:[#allocation2 + $0x278] sm:$0xff]
    %v160 = vld [vmem:[#allocation2 + $0x280] sm:$0xff]
    %v161 = vld [vmem:[#allocation2 + $0x288] sm:$0xff]
    %v162 = vld [vmem:[#allocation2 + $0x290] sm:$0xff]
    %v163 = vld [vmem:[#allocation2 + $0x298] sm:$0xff]
    %v164 = vld [vmem:[#allocation2 + $0x2a0] sm:$0xff]
    %v165 = vld [vmem:[#allocation2 + $0x2a8] sm:$0xff]
    %v166 = vld [vmem:[#allocation2 + $0x2b0] sm:$0xff]
    %v167 = vld [vmem:[#allocation2 + $0x2b8] sm:$0xff]
    %v168 = vld [vmem:[#allocation2 + $0x2c0] sm:$0xff]
    %v169 = vld [vmem:[#allocation2 + $0x2c8] sm:$0xff]
    %v170 = vld [vmem:[#allocation2 + $0x2d0] sm:$0xff]
    %v171 = vld [vmem:[#allocation2 + $0x2d8] sm:$0xff]
    %v172 = vld [vmem:[#allocation2 + $0x2e0] sm:$0xff]
    %v173 = vld [vmem:[#allocation2 + $0x2e8] sm:$0xff]
    %v174 = vld [vmem:[#allocation2 + $0x2f0] sm:$0xff]
    %v175 = vld [vmem:[#allocation2 + $0x2f8] sm:$0xff]
    %v176 = vld [vmem:[#allocation2 + $0x300] sm:$0xff]
    %v177 = vld [vmem:[#allocation2 + $0x308] sm:$0xff]
    %v178 = vld [vmem:[#allocation2 + $0x310] sm:$0xff]
    %v179 = vld [vmem:[#allocation2 + $0x318] sm:$0xff]
    %v180 = vld [vmem:[#allocation2 + $0x320] sm:$0xff]
    %v181 = vld [vmem:[#allocation2 + $0x328] sm:$0xff]
    %v182 = vld [vmem:[#allocation2 + $0x330] sm:$0xff]
    %v183 = vld [vmem:[#allocation2 + $0x338] sm:$0xff]
    %v184 = vld [vmem:[#allocation2 + $0x340] sm:$0xff]
    %v185 = vld [vmem:[#allocation2 + $0x348] sm:$0xff]
    %v186 = vld [vmem:[#allocation2 + $0x350] sm:$0xff]
    %v187 = vld [vmem:[#allocation2 + $0x358] sm:$0xff]
    %v188 = vld [vmem:[#allocation2 + $0x360] sm:$0xff]
    %v189 = vld [vmem:[#allocation2 + $0x368] sm:$0xff]
    %v190 = vld [vmem:[#allocation2 + $0x370] sm:$0xff]
    %v191 = vld [vmem:[#allocation2 + $0x378] sm:$0xff]
    %v192 = vld [vmem:[#allocation2 + $0x380] sm:$0xff]
    %v193 = vld [vmem:[#allocation2 + $0x388] sm:$0xff]
    %v194 = vld [vmem:[#allocation2 + $0x390] sm:$0xff]
    %v195 = vld [vmem:[#allocation2 + $0x398] sm:$0xff]
    %v196 = vld [vmem:[#allocation2 + $0x3a0] sm:$0xff]
    %v197 = vld [vmem:[#allocation2 + $0x3a8] sm:$0xff]
    %v198 = vld [vmem:[#allocation2 + $0x3b0] sm:$0xff]
    %v199 = vld [vmem:[#allocation2 + $0x3b8] sm:$0xff]
    %v200 = vld [vmem:[#allocation2 + $0x3c0] sm:$0xff]
    %v201 = vld [vmem:[#allocation2 + $0x3c8] sm:$0xff]
    %v202 = vld [vmem:[#allocation2 + $0x3d0] sm:$0xff]
    %v203 = vld [vmem:[#allocation2 + $0x3d8] sm:$0xff]
    %v204 = vld [vmem:[#allocation2 + $0x3e0] sm:$0xff]
    %v205 = vld [vmem:[#allocation2 + $0x3e8] sm:$0xff]
    %v206 = vld [vmem:[#allocation2 + $0x3f0] sm:$0xff]
    %v207 = vld [vmem:[#allocation2 + $0x3f8] sm:$0xff]
    %v208 = vld [vmem:[#allocation2 + $0x400] sm:$0xff]
    %v209 = vld [vmem:[#allocation2 + $0x408] sm:$0xff]
    %v210 = vld [vmem:[#allocation2 + $0x410] sm:$0xff]
    %v211 = vld [vmem:[#allocation2 + $0x418] sm:$0xff]
    %v212 = vld [vmem:[#allocation2 + $0x420] sm:$0xff]
    %v213 = vld [vmem:[#allocation2 + $0x428] sm:$0xff]
    %v214 = vld [vmem:[#allocation2 + $0x430] sm:$0xff]
    %v215 = vld [vmem:[#allocation2 + $0x438] sm:$0xff]
    %v216 = vld [vmem:[#allocation2 + $0x440] sm:$0xff]
    %v217 = vld [vmem:[#allocation2 + $0x448] sm:$0xff]
    %v218 = vld [vmem:[#allocation2 + $0x450] sm:$0xff]
    %v219 = vld [vmem:[#allocation2 + $0x458] sm:$0xff]
    %v220 = vld [vmem:[#allocation2 + $0x460] sm:$0xff]
    %v221 = vld [vmem:[#allocation2 + $0x468] sm:$0xff]
    %v222 = vld [vmem:[#allocation2 + $0x470] sm:$0xff]
    %v223 = vld [vmem:[#allocation2 + $0x478] sm:$0xff]
    %v224 = vld [vmem:[#allocation2 + $0x480] sm:$0xff]
    %v225 = vld [vmem:[#allocation2 + $0x488] sm:$0xff]
    %v226 = vld [vmem:[#allocation2 + $0x490] sm:$0xff]
    %v227 = vld [vmem:[#allocation2 + $0x498] sm:$0xff]
    %v228 = vld [vmem:[#allocation2 + $0x4a0] sm:$0xff]
    %v229 = vld [vmem:[#allocation2 + $0x4a8] sm:$0xff]
    %v230 = vld [vmem:[#allocation2 + $0x4b0] sm:$0xff]
    %v231 = vld [vmem:[#allocation2 + $0x4b8] sm:$0xff]
    %v232 = vld [vmem:[#allocation2 + $0x4c0] sm:$0xff]
    %v233 = vld [vmem:[#allocation2 + $0x4c8] sm:$0xff]
    %v234 = vld [vmem:[#allocation2 + $0x4d0] sm:$0xff]
    %v235 = vld [vmem:[#allocation2 + $0x4d8] sm:$0xff]
    %v236 = vld [vmem:[#allocation2 + $0x4e0] sm:$0xff]
    %v237 = vld [vmem:[#allocation2 + $0x4e8] sm:$0xff]
    %v238 = vld [vmem:[#allocation2 + $0x4f0] sm:$0xff]
    %v239 = vld [vmem:[#allocation2 + $0x4f8] sm:$0xff]
    %v240 = vld [vmem:[#allocation2 + $0x500] sm:$0xff]
    %v241 = vld [vmem:[#allocation2 + $0x508] sm:$0xff]
    %v242 = vld [vmem:[#allocation2 + $0x510] sm:$0xff]
    %v243 = vld [vmem:[#allocation2 + $0x518] sm:$0xff]
    %v244 = vld [vmem:[#allocation2 + $0x520] sm:$0xff]
    %v245 = vld [vmem:[#allocation2 + $0x528] sm:$0xff]
    %v246 = vld [vmem:[#allocation2 + $0x530] sm:$0xff]
    %v247 = vld [vmem:[#allocation2 + $0x538] sm:$0xff]
    %v248 = vld [vmem:[#allocation2 + $0x540] sm:$0xff]
    %v249 = vld [vmem:[#allocation2 + $0x548] sm:$0xff]
    %v250 = vld [vmem:[#allocation2 + $0x550] sm:$0xff]
    %v251 = vld [vmem:[#allocation2 + $0x558] sm:$0xff]
    %v252 = vld [vmem:[#allocation2 + $0x560] sm:$0xff]
    %v253 = vld [vmem:[#allocation2 + $0x568] sm:$0xff]
    %v254 = vld [vmem:[#allocation2 + $0x570] sm:$0xff]
    %v255 = vld [vmem:[#allocation2 + $0x578] sm:$0xff]
    %v256 = vld [vmem:[#allocation2 + $0x580] sm:$0xff]
    %v257 = vld [vmem:[#allocation2 + $0x588] sm:$0xff]
    %v258 = vld [vmem:[#allocation2 + $0x590] sm:$0xff]
    %v259 = vld [vmem:[#allocation2 + $0x598] sm:$0xff]
    %v260 = vld [vmem:[#allocation2 + $0x5a0] sm:$0xff]
    %v261 = vld [vmem:[#allocation2 + $0x5a8] sm:$0xff]
    %v262 = vld [vmem:[#allocation2 + $0x5b0] sm:$0xff]
    %v263 = vld [vmem:[#allocation2 + $0x5b8] sm:$0xff]
    %v264 = vld [vmem:[#allocation2 + $0x5c0] sm:$0xff]
    %v265 = vld [vmem:[#allocation2 + $0x5c8] sm:$0xff]
    %v266 = vld [vmem:[#allocation2 + $0x5d0] sm:$0xff]
    %v267 = vld [vmem:[#allocation2 + $0x5d8] sm:$0xff]
    %v268 = vld [vmem:[#allocation2 + $0x5e0] sm:$0xff]
    %v269 = vld [vmem:[#allocation2 + $0x5e8] sm:$0xff]
    %v270 = vld [vmem:[#allocation2 + $0x5f0] sm:$0xff]
    %v271 = vld [vmem:[#allocation2 + $0x5f8] sm:$0xff]
    %v272 = vld [vmem:[#allocation2 + $0x600] sm:$0xff]
    %v273 = vld [vmem:[#allocation2 + $0x608] sm:$0xff]
    %v274 = vld [vmem:[#allocation2 + $0x610] sm:$0xff]
    %v275 = vld [vmem:[#allocation2 + $0x618] sm:$0xff]
    %v276 = vld [vmem:[#allocation2 + $0x620] sm:$0xff]
    %v277 = vld [vmem:[#allocation2 + $0x628] sm:$0xff]
    %v278 = vld [vmem:[#allocation2 + $0x630] sm:$0xff]
    %v279 = vld [vmem:[#allocation2 + $0x638] sm:$0xff]
    %v280 = vld [vmem:[#allocation2 + $0x640] sm:$0xff]
    %v281 = vld [vmem:[#allocation2 + $0x648] sm:$0xff]
    %v282 = vld [vmem:[#allocation2 + $0x650] sm:$0xff]
    %v283 = vld [vmem:[#allocation2 + $0x658] sm:$0xff]
    %v284 = vld [vmem:[#allocation2 + $0x660] sm:$0xff]
    %v285 = vld [vmem:[#allocation2 + $0x668] sm:$0xff]
    %v286 = vld [vmem:[#allocation2 + $0x670] sm:$0xff]
    %v287 = vld [vmem:[#allocation2 + $0x678] sm:$0xff]
    %v288 = vld [vmem:[#allocation2 + $0x680] sm:$0xff]
    %v289 = vld [vmem:[#allocation2 + $0x688] sm:$0xff]
    %v290 = vld [vmem:[#allocation2 + $0x690] sm:$0xff]
    %v291 = vld [vmem:[#allocation2 + $0x698] sm:$0xff]
    %v292 = vld [vmem:[#allocation2 + $0x6a0] sm:$0xff]
    %v293 = vld [vmem:[#allocation2 + $0x6a8] sm:$0xff]
    %v294 = vld [vmem:[#allocation2 + $0x6b0] sm:$0xff]
    %v295 = vld [vmem:[#allocation2 + $0x6b8] sm:$0xff]
    %v296 = vld [vmem:[#allocation2 + $0x6c0] sm:$0xff]
    %v297 = vld [vmem:[#allocation2 + $0x6c8] sm:$0xff]
    %v298 = vld [vmem:[#allocation2 + $0x6d0] sm:$0xff]
    %v299 = vld [vmem:[#allocation2 + $0x6d8] sm:$0xff]
    %v300 = vld [vmem:[#allocation2 + $0x6e0] sm:$0xff]
    %v301 = vld [vmem:[#allocation2 + $0x6e8] sm:$0xff]
    %v302 = vld [vmem:[#allocation2 + $0x6f0] sm:$0xff]
    %v303 = vld [vmem:[#allocation2 + $0x6f8] sm:$0xff]
    %v304 = vld [vmem:[#allocation2 + $0x700] sm:$0xff]
    %v305 = vld [vmem:[#allocation2 + $0x708] sm:$0xff]
    %v306 = vld [vmem:[#allocation2 + $0x710] sm:$0xff]
    %v307 = vld [vmem:[#allocation2 + $0x718] sm:$0xff]
    %v308 = vld [vmem:[#allocation2 + $0x720] sm:$0xff]
    %v309 = vld [vmem:[#allocation2 + $0x728] sm:$0xff]
    %v310 = vld [vmem:[#allocation2 + $0x730] sm:$0xff]
    %v311 = vld [vmem:[#allocation2 + $0x738] sm:$0xff]
    %v312 = vld [vmem:[#allocation2 + $0x740] sm:$0xff]
    %v313 = vld [vmem:[#allocation2 + $0x748] sm:$0xff]
    %v314 = vld [vmem:[#allocation2 + $0x750] sm:$0xff]
    %v315 = vld [vmem:[#allocation2 + $0x758] sm:$0xff]
    %v316 = vld [vmem:[#allocation2 + $0x760] sm:$0xff]
    %v317 = vld [vmem:[#allocation2 + $0x768] sm:$0xff]
    %v318 = vld [vmem:[#allocation2 + $0x770] sm:$0xff]
    %v319 = vld [vmem:[#allocation2 + $0x778] sm:$0xff]
    %v320 = vld [vmem:[#allocation2 + $0x780] sm:$0xff]
    %v321 = vld [vmem:[#allocation2 + $0x788] sm:$0xff]
    %v322 = vld [vmem:[#allocation2 + $0x790] sm:$0xff]
    %v323 = vld [vmem:[#allocation2 + $0x798] sm:$0xff]
    %v324 = vld [vmem:[#allocation2 + $0x7a0] sm:$0xff]
    %v325 = vld [vmem:[#allocation2 + $0x7a8] sm:$0xff]
    %v326 = vld [vmem:[#allocation2 + $0x7b0] sm:$0xff]
    %v327 = vld [vmem:[#allocation2 + $0x7b8] sm:$0xff]
    %v328 = vld [vmem:[#allocation2 + $0x7c0] sm:$0xff]
    %v329 = vld [vmem:[#allocation2 + $0x7c8] sm:$0xff]
    %v330 = vld [vmem:[#allocation2 + $0x7d0] sm:$0xff]
    %v331 = vld [vmem:[#allocation2 + $0x7d8] sm:$0xff]
    %v332 = vld [vmem:[#allocation2 + $0x7e0] sm:$0xff]
    %v333 = vld [vmem:[#allocation2 + $0x7e8] sm:$0xff]
    %v334 = vld [vmem:[#allocation2 + $0x7f0] sm:$0xff]
    %v335 = vld [vmem:[#allocation2 + $0x7f8] sm:$0xff]
    %v336 = vld [vmem:[%s5] sm:$0xff]
    %v337 = vld [vmem:[%s5 + $0x8] sm:$0xff]
    %v338 = vld [vmem:[%s5 + $0x10] sm:$0xff]
    %v339 = vld [vmem:[%s5 + $0x18] sm:$0xff]
    %v340 = vld [vmem:[%s5 + $0x20] sm:$0xff]
    %v341 = vld [vmem:[%s5 + $0x28] sm:$0xff]
    %v342 = vld [vmem:[%s5 + $0x30] sm:$0xff]
    %v343 = vld [vmem:[%s5 + $0x38] sm:$0xff]
    %v344 = vld [vmem:[%s5 + $0x40] sm:$0xff]
    %v345 = vld [vmem:[%s5 + $0x48] sm:$0xff]
    %v346 = vld [vmem:[%s5 + $0x50] sm:$0xff]
    %v347 = vld [vmem:[%s5 + $0x58] sm:$0xff]
    %v348 = vld [vmem:[%s5 + $0x60] sm:$0xff]
    %v349 = vld [vmem:[%s5 + $0x68] sm:$0xff]
    %v350 = vld [vmem:[%s5 + $0x70] sm:$0xff]
    %v351 = vld [vmem:[%s5 + $0x78] sm:$0xff]
    %v352 = vld [vmem:[%s5 + $0x80] sm:$0xff]
    %v353 = vld [vmem:[%s5 + $0x88] sm:$0xff]
    %v354 = vld [vmem:[%s5 + $0x90] sm:$0xff]
    %v355 = vld [vmem:[%s5 + $0x98] sm:$0xff]
    %v356 = vld [vmem:[%s5 + $0xa0] sm:$0xff]
    %v357 = vld [vmem:[%s5 + $0xa8] sm:$0xff]
    %v358 = vld [vmem:[%s5 + $0xb0] sm:$0xff]
    %v359 = vld [vmem:[%s5 + $0xb8] sm:$0xff]
    %v360 = vld [vmem:[%s5 + $0xc0] sm:$0xff]
    %v361 = vld [vmem:[%s5 + $0xc8] sm:$0xff]
    %v362 = vld [vmem:[%s5 + $0xd0] sm:$0xff]
    %v363 = vld [vmem:[%s5 + $0xd8] sm:$0xff]
    %v364 = vld [vmem:[%s5 + $0xe0] sm:$0xff]
    %v365 = vld [vmem:[%s5 + $0xe8] sm:$0xff]
    %v366 = vld [vmem:[%s5 + $0xf0] sm:$0xff]
    %v367 = vld [vmem:[%s5 + $0xf8] sm:$0xff]
    %v368 = vld [vmem:[%s5 + $0x100] sm:$0xff]
    %v369 = vld [vmem:[%s5 + $0x108] sm:$0xff]
    %v370 = vld [vmem:[%s5 + $0x110] sm:$0xff]
    %v371 = vld [vmem:[%s5 + $0x118] sm:$0xff]
    %v372 = vld [vmem:[%s5 + $0x120] sm:$0xff]
    %v373 = vld [vmem:[%s5 + $0x128] sm:$0xff]
    %v374 = vld [vmem:[%s5 + $0x130] sm:$0xff]
    %v375 = vld [vmem:[%s5 + $0x138] sm:$0xff]
    %v376 = vld [vmem:[%s5 + $0x140] sm:$0xff]
    %v377 = vld [vmem:[%s5 + $0x148] sm:$0xff]
    %v378 = vld [vmem:[%s5 + $0x150] sm:$0xff]
    %v379 = vld [vmem:[%s5 + $0x158] sm:$0xff]
    %v380 = vld [vmem:[%s5 + $0x160] sm:$0xff]
    %v381 = vld [vmem:[%s5 + $0x168] sm:$0xff]
    %v382 = vld [vmem:[%s5 + $0x170] sm:$0xff]
    %v383 = vld [vmem:[%s5 + $0x178] sm:$0xff]
    %v384 = vld [vmem:[%s5 + $0x180] sm:$0xff]
    %v385 = vld [vmem:[%s5 + $0x188] sm:$0xff]
    %v386 = vld [vmem:[%s5 + $0x190] sm:$0xff]
    %v387 = vld [vmem:[%s5 + $0x198] sm:$0xff]
    %v388 = vld [vmem:[%s5 + $0x1a0] sm:$0xff]
    %v389 = vld [vmem:[%s5 + $0x1a8] sm:$0xff]
    %v390 = vld [vmem:[%s5 + $0x1b0] sm:$0xff]
    %v391 = vld [vmem:[%s5 + $0x1b8] sm:$0xff]
    %v392 = vld [vmem:[%s5 + $0x1c0] sm:$0xff]
    %v393 = vld [vmem:[%s5 + $0x1c8] sm:$0xff]
    %v394 = vld [vmem:[%s5 + $0x1d0] sm:$0xff]
    %v395 = vld [vmem:[%s5 + $0x1d8] sm:$0xff]
    %v396 = vld [vmem:[%s5 + $0x1e0] sm:$0xff]
    %v397 = vld [vmem:[%s5 + $0x1e8] sm:$0xff]
    %v398 = vld [vmem:[%s5 + $0x1f0] sm:$0xff]
    %v399 = vld [vmem:[%s5 + $0x1f8] sm:$0xff]
    %v400 = vld [vmem:[%s6] sm:$0xff]
    %v401 = vld [vmem:[%s6 + $0x8] sm:$0xff]
    %v402 = vld [vmem:[%s6 + $0x10] sm:$0xff]
    %v403 = vld [vmem:[%s6 + $0x18] sm:$0xff]
    %v404 = vld [vmem:[%s7] sm:$0xff]
    %v405 = vld [vmem:[%s7 + $0x8] sm:$0xff]
    %v406 = vld [vmem:[%s7 + $0x10] sm:$0xff]
    %v407 = vld [vmem:[%s7 + $0x18] sm:$0xff]
    %v408 = vld [vmem:[%s7 + $0x20] sm:$0xff]
    %v409 = vld [vmem:[%s7 + $0x28] sm:$0xff]
    %v410 = vld [vmem:[%s7 + $0x30] sm:$0xff]
    %v411 = vld [vmem:[%s7 + $0x38] sm:$0xff]
    %v412 = vld [vmem:[%s7 + $0x40] sm:$0xff]
    %v413 = vld [vmem:[%s7 + $0x48] sm:$0xff]
    %v414 = vld [vmem:[%s7 + $0x50] sm:$0xff]
    %v415 = vld [vmem:[%s7 + $0x58] sm:$0xff]
    %v416 = vld [vmem:[%s7 + $0x60] sm:$0xff]
    %v417 = vld [vmem:[%s7 + $0x68] sm:$0xff]
    %v418 = vld [vmem:[%s7 + $0x70] sm:$0xff]
    %v419 = vld [vmem:[%s7 + $0x78] sm:$0xff]
    %v420 = vld [vmem:[%s7 + $0x80] sm:$0xff]
    %v421 = vld [vmem:[%s7 + $0x88] sm:$0xff]
    %v422 = vld [vmem:[%s7 + $0x90] sm:$0xff]
    %v423 = vld [vmem:[%s7 + $0x98] sm:$0xff]
    %v424 = vld [vmem:[%s7 + $0xa0] sm:$0xff]
    %v425 = vld [vmem:[%s7 + $0xa8] sm:$0xff]
    %v426 = vld [vmem:[%s7 + $0xb0] sm:$0xff]
    %v427 = vld [vmem:[%s7 + $0xb8] sm:$0xff]
    %v428 = vld [vmem:[%s7 + $0xc0] sm:$0xff]
    %v429 = vld [vmem:[%s7 + $0xc8] sm:$0xff]
    %v430 = vld [vmem:[%s7 + $0xd0] sm:$0xff]
    %v431 = vld [vmem:[%s7 + $0xd8] sm:$0xff]
    %v432 = vld [vmem:[%s7 + $0xe0] sm:$0xff]
    %v433 = vld [vmem:[%s7 + $0xe8] sm:$0xff]
    %v434 = vld [vmem:[%s7 + $0xf0] sm:$0xff]
    %v435 = vld [vmem:[%s7 + $0xf8] sm:$0xff]
    %v436 = vld [vmem:[%s7 + $0x100] sm:$0xff]
    %v437 = vld [vmem:[%s7 + $0x108] sm:$0xff]
    %v438 = vld [vmem:[%s7 + $0x110] sm:$0xff]
    %v439 = vld [vmem:[%s7 + $0x118] sm:$0xff]
    %v440 = vld [vmem:[%s7 + $0x120] sm:$0xff]
    %v441 = vld [vmem:[%s7 + $0x128] sm:$0xff]
    %v442 = vld [vmem:[%s7 + $0x130] sm:$0xff]
    %v443 = vld [vmem:[%s7 + $0x138] sm:$0xff]
    %v444 = vld [vmem:[%s7 + $0x140] sm:$0xff]
    %v445 = vld [vmem:[%s7 + $0x148] sm:$0xff]
    %v446 = vld [vmem:[%s7 + $0x150] sm:$0xff]
    %v447 = vld [vmem:[%s7 + $0x158] sm:$0xff]
    %v448 = vld [vmem:[%s7 + $0x160] sm:$0xff]
    %v449 = vld [vmem:[%s7 + $0x168] sm:$0xff]
    %v450 = vld [vmem:[%s7 + $0x170] sm:$0xff]
    %v451 = vld [vmem:[%s7 + $0x178] sm:$0xff]
    %v452 = vld [vmem:[%s7 + $0x180] sm:$0xff]
    %v453 = vld [vmem:[%s7 + $0x188] sm:$0xff]
    %v454 = vld [vmem:[%s7 + $0x190] sm:$0xff]
    %v455 = vld [vmem:[%s7 + $0x198] sm:$0xff]
    %v456 = vld [vmem:[%s7 + $0x1a0] sm:$0xff]
    %v457 = vld [vmem:[%s7 + $0x1a8] sm:$0xff]
    %v458 = vld [vmem:[%s7 + $0x1b0] sm:$0xff]
    %v459 = vld [vmem:[%s7 + $0x1b8] sm:$0xff]
    %v460 = vld [vmem:[%s7 + $0x1c0] sm:$0xff]
    %v461 = vld [vmem:[%s7 + $0x1c8] sm:$0xff]
    %v462 = vld [vmem:[%s7 + $0x1d0] sm:$0xff]
    %v463 = vld [vmem:[%s7 + $0x1d8] sm:$0xff]
    %v464 = vld [vmem:[%s7 + $0x1e0] sm:$0xff]
    %v465 = vld [vmem:[%s7 + $0x1e8] sm:$0xff]
    %v466 = vld [vmem:[%s7 + $0x1f0] sm:$0xff]
    %v467 = vld [vmem:[%s7 + $0x1f8] sm:$0xff]
    %v468 = vld [vmem:[%s8] sm:$0x1]
    %v469 = vld [vmem:[%s9] sm:$0xff]
    %v470 = vld [vmem:[%s9 + $0x8] sm:$0xf]
    %v471 = vld [vmem:[%s9 + $0x10] sm:$0xff]
    %v472 = vld [vmem:[%s9 + $0x18] sm:$0xf]
    %v473 = vld [vmem:[%s10] sm:$0x1]
    %v474 = vlaneseq
    %v475 = vand.u32 %v474, 127
    %v476 = vadd.s32 %v475, 128
    %v477 = vadd.s32 %v475, 256
    %v478 = vadd.s32 %v475, 384
    %vm479 = vcmp.lt.s32.totalorder %v475, 0
    %v480 = vsub.s32 0, %v475
    %v481 = vsel %vm479, %v480, %v475
    %v482 = vshrl.u32 %v481, 6
    %v483 = vand.u32 %v481, 63
    %v484 = vsub.s32 0, %v483
    %v485 = vsel %vm479, %v484, %v483
    %vm486 = vcmp.lt.s32.totalorder %v476, 0
    %v487 = vsub.s32 0, %v476
    %v488 = vsel %vm486, %v487, %v476
    %v489 = vshrl.u32 %v488, 6
    %v490 = vand.u32 %v488, 63
    %v491 = vsub.s32 0, %v490
    %v492 = vsel %vm486, %v491, %v490
    %vm493 = vcmp.lt.s32.totalorder %v477, 0
    %v494 = vsub.s32 0, %v477
    %v495 = vsel %vm493, %v494, %v477
    %v496 = vshrl.u32 %v495, 6
    %v497 = vand.u32 %v495, 63
    %v498 = vsub.s32 0, %v497
    %v499 = vsel %vm493, %v498, %v497
    %vm500 = vcmp.lt.s32.totalorder %v478, 0
    %v501 = vsub.s32 0, %v478
    %v502 = vsel %vm500, %v501, %v478
    %v503 = vshrl.u32 %v502, 6
    %v504 = vand.u32 %v502, 63
    %v505 = vsub.s32 0, %v504
    %v506 = vsel %vm500, %v505, %v504
    %vm507 = vcmp.ne.s32.totalorder %v485, 0
    %vm508 = vcmp.ne.s32.totalorder %v492, 0
    %vm509 = vcmp.ne.s32.totalorder %v499, 0
    %vm510 = vcmp.ne.s32.totalorder %v506, 0
    %vm511 = vcmp.lt.s32.totalorder %v485, 0
    %vm512 = vcmp.lt.s32.totalorder %v492, 0
    %vm513 = vcmp.lt.s32.totalorder %v499, 0
    %vm514 = vcmp.lt.s32.totalorder %v506, 0
    %vm515 = vmand %vm511, %vm507
    %vm516 = vmand %vm512, %vm508
    %vm517 = vmand %vm513, %vm509
    %vm518 = vmand %vm514, %vm510
    %v519 = vadd.s32 %v485, 64
    %v520 = vadd.s32 %v492, 64
    %v521 = vadd.s32 %v499, 64
    %v522 = vadd.s32 %v506, 64
    %v523 = vsel %vm515, %v519, %v485
    %v524 = vsel %vm516, %v520, %v492
    %v525 = vsel %vm517, %v521, %v499
    %v526 = vsel %vm518, %v522, %v506
    %v528 = vperm.slane %v71, 0
    %v529 = vperm.slane %v71, 2
    %v530 = vperm.slane %v71, 4
    %v531 = vperm.slane %v71, 6
    %v536 = vperm.slane %v528, 0
    %v537 = vperm.slane %v529, 0
    %v538 = vperm.slane %v530, 0
    %v539 = vperm.slane %v531, 0
    %vm540 = vcmask 97280
    %v542 = vsel %vm540, %v62, 0
    %vm544 = vcmask 1043456
    %v546 = vsel %vm544, %v67, 0
    %v549 = vsel %vm544, %v68, 0
    %v552 = vsel %vm544, %v69, 0
    %v555 = vsel %vm544, %v70, 0
    %557 = vmatpush.msra.mxu0 0.0
    %558 = vmatpush.msra.mxu0 0.0
    %559 = vmatpush.msra.mxu0 0.0
    %560 = vmatpush.msra.mxu0 0.0
    %561 = vmatpush.msra.mxu0 0.0
    %562 = vmatpush.msra.mxu0 0.0
    %563 = vmatpush.msra.mxu0 0.0
    %564 = vmatpush.msra.mxu0 0.0
    %565 = vmatpush.msra.mxu0 0.0
    %566 = vmatpush.msra.mxu0 0.0
    %567 = vmatpush.msra.mxu0 0.0
    %568 = vmatpush.msra.mxu0 0.0
    %569 = vmatpush.msra.mxu0 0.0
    %570 = vmatpush.msra.mxu0 0.0
    %571 = vmatpush.msra.mxu0 %v546
    %572 = vmatpush.msra.mxu0 %v63
    %573 = vmatmul.f32.gmra.mxu0 %v542
    %v574 = vpop.f32.mrf.mxu0
    %v575 = vadd.f32 %v536, %v574
    %576 = vdwg.mxu0
    %577 = vmatpush.msra.mxu0 0.0
    %578 = vmatpush.msra.mxu0 0.0
    %579 = vmatpush.msra.mxu0 0.0
    %580 = vmatpush.msra.mxu0 0.0
    %581 = vmatpush.msra.mxu0 0.0
    %582 = vmatpush.msra.mxu0 0.0
    %583 = vmatpush.msra.mxu0 0.0
    %584 = vmatpush.msra.mxu0 0.0
    %585 = vmatpush.msra.mxu0 0.0
    %586 = vmatpush.msra.mxu0 0.0
    %587 = vmatpush.msra.mxu0 0.0
    %588 = vmatpush.msra.mxu0 0.0
    %589 = vmatpush.msra.mxu0 0.0
    %590 = vmatpush.msra.mxu0 0.0
    %591 = vmatpush.msra.mxu0 %v549
    %592 = vmatpush.msra.mxu0 %v64
    %593 = vmatmul.f32.gmra.mxu0 %v542
    %v594 = vpop.f32.mrf.mxu0
    %v595 = vadd.f32 %v537, %v594
    %596 = vdwg.mxu0
    %597 = vmatpush.msra.mxu0 0.0
    %598 = vmatpush.msra.mxu0 0.0
    %599 = vmatpush.msra.mxu0 0.0
    %600 = vmatpush.msra.mxu0 0.0
    %601 = vmatpush.msra.mxu0 0.0
    %602 = vmatpush.msra.mxu0 0.0
    %603 = vmatpush.msra.mxu0 0.0
    %604 = vmatpush.msra.mxu0 0.0
    %605 = vmatpush.msra.mxu0 0.0
    %606 = vmatpush.msra.mxu0 0.0
    %607 = vmatpush.msra.mxu0 0.0
    %608 = vmatpush.msra.mxu0 0.0
    %609 = vmatpush.msra.mxu0 0.0
    %610 = vmatpush.msra.mxu0 0.0
    %611 = vmatpush.msra.mxu0 %v552
    %612 = vmatpush.msra.mxu0 %v65
    %613 = vmatmul.f32.gmra.mxu0 %v542
    %v614 = vpop.f32.mrf.mxu0
    %v615 = vadd.f32 %v538, %v614
    %616 = vdwg.mxu0
    %617 = vmatpush.msra.mxu0 0.0
    %618 = vmatpush.msra.mxu0 0.0
    %619 = vmatpush.msra.mxu0 0.0
    %620 = vmatpush.msra.mxu0 0.0
    %621 = vmatpush.msra.mxu0 0.0
    %622 = vmatpush.msra.mxu0 0.0
    %623 = vmatpush.msra.mxu0 0.0
    %624 = vmatpush.msra.mxu0 0.0
    %625 = vmatpush.msra.mxu0 0.0
    %626 = vmatpush.msra.mxu0 0.0
    %627 = vmatpush.msra.mxu0 0.0
    %628 = vmatpush.msra.mxu0 0.0
    %629 = vmatpush.msra.mxu0 0.0
    %630 = vmatpush.msra.mxu0 0.0
    %631 = vmatpush.msra.mxu0 %v555
    %632 = vmatpush.msra.mxu0 %v66
    %633 = vmatmul.f32.gmra.mxu0 %v542
    %v634 = vpop.f32.mrf.mxu0
    %v635 = vadd.f32 %v539, %v634
    %636 = vdwg.mxu0
    %637 = vmatpush.msra.mxu0 %v351
    %638 = vmatpush.msra.mxu0 %v350
    %639 = vmatpush.msra.mxu0 %v349
    %640 = vmatpush.msra.mxu0 %v348
    %641 = vmatpush.msra.mxu0 %v347
    %642 = vmatpush.msra.mxu0 %v346
    %643 = vmatpush.msra.mxu0 %v345
    %644 = vmatpush.msra.mxu0 %v344
    %645 = vmatpush.msra.mxu0 %v343
    %646 = vmatpush.msra.mxu0 %v342
    %647 = vmatpush.msra.mxu0 %v341
    %648 = vmatpush.msra.mxu0 %v340
    %649 = vmatpush.msra.mxu0 %v339
    %650 = vmatpush.msra.mxu0 %v338
    %651 = vmatpush.msra.mxu0 %v337
    %652 = vmatpush.msra.mxu0 %v336
    %653 = vmatmul.f32.gmra.mxu0 %v575
    %v654 = vpop.f32.mrf.mxu0
    %v655 = vadd.f32 0.0, %v654
    %656 = vdwg.mxu0
    %657 = vmatpush.msra.mxu0 %v367
    %658 = vmatpush.msra.mxu0 %v366
    %659 = vmatpush.msra.mxu0 %v365
    %660 = vmatpush.msra.mxu0 %v364
    %661 = vmatpush.msra.mxu0 %v363
    %662 = vmatpush.msra.mxu0 %v362
    %663 = vmatpush.msra.mxu0 %v361
    %664 = vmatpush.msra.mxu0 %v360
    %665 = vmatpush.msra.mxu0 %v359
    %666 = vmatpush.msra.mxu0 %v358
    %667 = vmatpush.msra.mxu0 %v357
    %668 = vmatpush.msra.mxu0 %v356
    %669 = vmatpush.msra.mxu0 %v355
    %670 = vmatpush.msra.mxu0 %v354
    %671 = vmatpush.msra.mxu0 %v353
    %672 = vmatpush.msra.mxu0 %v352
    %673 = vmatmul.f32.gmra.mxu0 %v595
    %v674 = vpop.f32.mrf.mxu0
    %v675 = vadd.f32 %v655, %v674
    %676 = vdwg.mxu0
    %677 = vmatpush.msra.mxu0 %v383
    %678 = vmatpush.msra.mxu0 %v382
    %679 = vmatpush.msra.mxu0 %v381
    %680 = vmatpush.msra.mxu0 %v380
    %681 = vmatpush.msra.mxu0 %v379
    %682 = vmatpush.msra.mxu0 %v378
    %683 = vmatpush.msra.mxu0 %v377
    %684 = vmatpush.msra.mxu0 %v376
    %685 = vmatpush.msra.mxu0 %v375
    %686 = vmatpush.msra.mxu0 %v374
    %687 = vmatpush.msra.mxu0 %v373
    %688 = vmatpush.msra.mxu0 %v372
    %689 = vmatpush.msra.mxu0 %v371
    %690 = vmatpush.msra.mxu0 %v370
    %691 = vmatpush.msra.mxu0 %v369
    %692 = vmatpush.msra.mxu0 %v368
    %693 = vmatmul.f32.gmra.mxu0 %v615
    %v694 = vpop.f32.mrf.mxu0
    %v695 = vadd.f32 %v675, %v694
    %696 = vdwg.mxu0
    %697 = vmatpush.msra.mxu0 %v399
    %698 = vmatpush.msra.mxu0 %v398
    %699 = vmatpush.msra.mxu0 %v397
    %700 = vmatpush.msra.mxu0 %v396
    %701 = vmatpush.msra.mxu0 %v395
    %702 = vmatpush.msra.mxu0 %v394
    %703 = vmatpush.msra.mxu0 %v393
    %704 = vmatpush.msra.mxu0 %v392
    %705 = vmatpush.msra.mxu0 %v391
    %706 = vmatpush.msra.mxu0 %v390
    %707 = vmatpush.msra.mxu0 %v389
    %708 = vmatpush.msra.mxu0 %v388
    %709 = vmatpush.msra.mxu0 %v387
    %710 = vmatpush.msra.mxu0 %v386
    %711 = vmatpush.msra.mxu0 %v385
    %712 = vmatpush.msra.mxu0 %v384
    %713 = vmatmul.f32.gmra.mxu0 %v635
    %v714 = vpop.f32.mrf.mxu0
    %v715 = vadd.f32 %v695, %v714
    %716 = vdwg.mxu0
    %vm717 = vcmask 64512
    %v719 = vsel %vm717, %v715, 0
    %721 = vmatpush.msra.mxu0 0.0
    %722 = vmatpush.msra.mxu0 0.0
    %723 = vmatpush.msra.mxu0 0.0
    %724 = vmatpush.msra.mxu0 0.0
    %725 = vmatpush.msra.mxu0 0.0
    %726 = vmatpush.msra.mxu0 0.0
    %727 = vmatpush.msra.mxu0 0.0
    %728 = vmatpush.msra.mxu0 0.0
    %729 = vmatpush.msra.mxu0 0.0
    %730 = vmatpush.msra.mxu0 0.0
    %731 = vmatpush.msra.mxu0 0.0
    %732 = vmatpush.msra.mxu0 0.0
    %733 = vmatpush.msra.mxu0 0.0
    %734 = vmatpush.msra.mxu0 0.0
    %735 = vmatpush.msra.mxu0 0.0
    %736 = vmatpush.msra.mxu0 %v400
    %737 = vmatmul.f32.gmra.mxu0 %v719
    %v738 = vpop.f32.mrf.mxu0
    %v739 = vadd.f32 0.0, %v738
    %740 = vdwg.mxu0
    %741 = vmatpush.msra.mxu0 0.0
    %742 = vmatpush.msra.mxu0 0.0
    %743 = vmatpush.msra.mxu0 0.0
    %744 = vmatpush.msra.mxu0 0.0
    %745 = vmatpush.msra.mxu0 0.0
    %746 = vmatpush.msra.mxu0 0.0
    %747 = vmatpush.msra.mxu0 0.0
    %748 = vmatpush.msra.mxu0 0.0
    %749 = vmatpush.msra.mxu0 0.0
    %750 = vmatpush.msra.mxu0 0.0
    %751 = vmatpush.msra.mxu0 0.0
    %752 = vmatpush.msra.mxu0 0.0
    %753 = vmatpush.msra.mxu0 0.0
    %754 = vmatpush.msra.mxu0 0.0
    %755 = vmatpush.msra.mxu0 0.0
    %756 = vmatpush.msra.mxu0 %v401
    %757 = vmatmul.f32.gmra.mxu0 %v719
    %v758 = vpop.f32.mrf.mxu0
    %v759 = vadd.f32 0.0, %v758
    %760 = vdwg.mxu0
    %761 = vmatpush.msra.mxu0 0.0
    %762 = vmatpush.msra.mxu0 0.0
    %763 = vmatpush.msra.mxu0 0.0
    %764 = vmatpush.msra.mxu0 0.0
    %765 = vmatpush.msra.mxu0 0.0
    %766 = vmatpush.msra.mxu0 0.0
    %767 = vmatpush.msra.mxu0 0.0
    %768 = vmatpush.msra.mxu0 0.0
    %769 = vmatpush.msra.mxu0 0.0
    %770 = vmatpush.msra.mxu0 0.0
    %771 = vmatpush.msra.mxu0 0.0
    %772 = vmatpush.msra.mxu0 0.0
    %773 = vmatpush.msra.mxu0 0.0
    %774 = vmatpush.msra.mxu0 0.0
    %775 = vmatpush.msra.mxu0 0.0
    %776 = vmatpush.msra.mxu0 %v402
    %777 = vmatmul.f32.gmra.mxu0 %v719
    %v778 = vpop.f32.mrf.mxu0
    %v779 = vadd.f32 0.0, %v778
    %780 = vdwg.mxu0
    %781 = vmatpush.msra.mxu0 0.0
    %782 = vmatpush.msra.mxu0 0.0
    %783 = vmatpush.msra.mxu0 0.0
    %784 = vmatpush.msra.mxu0 0.0
    %785 = vmatpush.msra.mxu0 0.0
    %786 = vmatpush.msra.mxu0 0.0
    %787 = vmatpush.msra.mxu0 0.0
    %788 = vmatpush.msra.mxu0 0.0
    %789 = vmatpush.msra.mxu0 0.0
    %790 = vmatpush.msra.mxu0 0.0
    %791 = vmatpush.msra.mxu0 0.0
    %792 = vmatpush.msra.mxu0 0.0
    %793 = vmatpush.msra.mxu0 0.0
    %794 = vmatpush.msra.mxu0 0.0
    %795 = vmatpush.msra.mxu0 0.0
    %796 = vmatpush.msra.mxu0 %v403
    %797 = vmatmul.f32.gmra.mxu0 %v719
    %v798 = vpop.f32.mrf.mxu0
    %v799 = vadd.f32 0.0, %v798
    %800 = vdwg.mxu0
    %v801 = vsub.f32 %v575, %v739
    %v802 = vsub.f32 %v595, %v759
    %v803 = vsub.f32 %v615, %v779
    %v804 = vsub.f32 %v635, %v799
    %v805 = vmul.f32 %v801, %v801
    %v806 = vmul.f32 %v802, %v802
    %v807 = vmul.f32 %v803, %v803
    %v808 = vmul.f32 %v804, %v804
    %809 = vmatpush.msra.mxu0 %v351
    %810 = vmatpush.msra.mxu0 %v350
    %811 = vmatpush.msra.mxu0 %v349
    %812 = vmatpush.msra.mxu0 %v348
    %813 = vmatpush.msra.mxu0 %v347
    %814 = vmatpush.msra.mxu0 %v346
    %815 = vmatpush.msra.mxu0 %v345
    %816 = vmatpush.msra.mxu0 %v344
    %817 = vmatpush.msra.mxu0 %v343
    %818 = vmatpush.msra.mxu0 %v342
    %819 = vmatpush.msra.mxu0 %v341
    %820 = vmatpush.msra.mxu0 %v340
    %821 = vmatpush.msra.mxu0 %v339
    %822 = vmatpush.msra.mxu0 %v338
    %823 = vmatpush.msra.mxu0 %v337
    %824 = vmatpush.msra.mxu0 %v336
    %825 = vmatmul.f32.gmra.mxu0 %v805
    %v826 = vpop.f32.mrf.mxu0
    %v827 = vadd.f32 1e-05, %v826
    %828 = vdwg.mxu0
    %829 = vmatpush.msra.mxu0 %v367
    %830 = vmatpush.msra.mxu0 %v366
    %831 = vmatpush.msra.mxu0 %v365
    %832 = vmatpush.msra.mxu0 %v364
    %833 = vmatpush.msra.mxu0 %v363
    %834 = vmatpush.msra.mxu0 %v362
    %835 = vmatpush.msra.mxu0 %v361
    %836 = vmatpush.msra.mxu0 %v360
    %837 = vmatpush.msra.mxu0 %v359
    %838 = vmatpush.msra.mxu0 %v358
    %839 = vmatpush.msra.mxu0 %v357
    %840 = vmatpush.msra.mxu0 %v356
    %841 = vmatpush.msra.mxu0 %v355
    %842 = vmatpush.msra.mxu0 %v354
    %843 = vmatpush.msra.mxu0 %v353
    %844 = vmatpush.msra.mxu0 %v352
    %845 = vmatmul.f32.gmra.mxu0 %v806
    %v846 = vpop.f32.mrf.mxu0
    %v847 = vadd.f32 %v827, %v846
    %848 = vdwg.mxu0
    %849 = vmatpush.msra.mxu0 %v383
    %850 = vmatpush.msra.mxu0 %v382
    %851 = vmatpush.msra.mxu0 %v381
    %852 = vmatpush.msra.mxu0 %v380
    %853 = vmatpush.msra.mxu0 %v379
    %854 = vmatpush.msra.mxu0 %v378
    %855 = vmatpush.msra.mxu0 %v377
    %856 = vmatpush.msra.mxu0 %v376
    %857 = vmatpush.msra.mxu0 %v375
    %858 = vmatpush.msra.mxu0 %v374
    %859 = vmatpush.msra.mxu0 %v373
    %860 = vmatpush.msra.mxu0 %v372
    %861 = vmatpush.msra.mxu0 %v371
    %862 = vmatpush.msra.mxu0 %v370
    %863 = vmatpush.msra.mxu0 %v369
    %864 = vmatpush.msra.mxu0 %v368
    %865 = vmatmul.f32.gmra.mxu0 %v807
    %v866 = vpop.f32.mrf.mxu0
    %v867 = vadd.f32 %v847, %v866
    %868 = vdwg.mxu0
    %869 = vmatpush.msra.mxu0 %v399
    %870 = vmatpush.msra.mxu0 %v398
    %871 = vmatpush.msra.mxu0 %v397
    %872 = vmatpush.msra.mxu0 %v396
    %873 = vmatpush.msra.mxu0 %v395
    %874 = vmatpush.msra.mxu0 %v394
    %875 = vmatpush.msra.mxu0 %v393
    %876 = vmatpush.msra.mxu0 %v392
    %877 = vmatpush.msra.mxu0 %v391
    %878 = vmatpush.msra.mxu0 %v390
    %879 = vmatpush.msra.mxu0 %v389
    %880 = vmatpush.msra.mxu0 %v388
    %881 = vmatpush.msra.mxu0 %v387
    %882 = vmatpush.msra.mxu0 %v386
    %883 = vmatpush.msra.mxu0 %v385
    %884 = vmatpush.msra.mxu0 %v384
    %885 = vmatmul.f32.gmra.mxu0 %v808
    %v886 = vpop.f32.mrf.mxu0
    %v887 = vadd.f32 %v867, %v886
    %888 = vdwg.mxu0
    %v889 = vrsqrt.pop %v887
    %v890 = vmul.f32 %v889, %v887
    %v891 = vmul.f32 %v890, %v889
    %v892 = vmul.f32 0.5, %v891
    %v893 = vsub.f32 1.5, %v892
    %v894 = vmul.f32 %v889, %v893
    %vm895 = vweird.f32 %v887
    %vm896 = vweird.f32 %v889
    %vm897 = vmor %vm895, %vm896
    %v898 = vsel %vm897, %v889, %v894
    %v900 = vsel %vm717, %v898, 0
    %902 = vmatpush.msra.mxu0 0.0
    %903 = vmatpush.msra.mxu0 0.0
    %904 = vmatpush.msra.mxu0 0.0
    %905 = vmatpush.msra.mxu0 0.0
    %906 = vmatpush.msra.mxu0 0.0
    %907 = vmatpush.msra.mxu0 0.0
    %908 = vmatpush.msra.mxu0 0.0
    %909 = vmatpush.msra.mxu0 0.0
    %910 = vmatpush.msra.mxu0 0.0
    %911 = vmatpush.msra.mxu0 0.0
    %912 = vmatpush.msra.mxu0 0.0
    %913 = vmatpush.msra.mxu0 0.0
    %914 = vmatpush.msra.mxu0 0.0
    %915 = vmatpush.msra.mxu0 0.0
    %916 = vmatpush.msra.mxu0 0.0
    %917 = vmatpush.msra.mxu0 %v400
    %918 = vmatmul.f32.gmra.mxu0 %v900
    %v919 = vpop.f32.mrf.mxu0
    %v920 = vadd.f32 0.0, %v919
    %921 = vdwg.mxu0
    %922 = vmatpush.msra.mxu0 0.0
    %923 = vmatpush.msra.mxu0 0.0
    %924 = vmatpush.msra.mxu0 0.0
    %925 = vmatpush.msra.mxu0 0.0
    %926 = vmatpush.msra.mxu0 0.0
    %927 = vmatpush.msra.mxu0 0.0
    %928 = vmatpush.msra.mxu0 0.0
    %929 = vmatpush.msra.mxu0 0.0
    %930 = vmatpush.msra.mxu0 0.0
    %931 = vmatpush.msra.mxu0 0.0
    %932 = vmatpush.msra.mxu0 0.0
    %933 = vmatpush.msra.mxu0 0.0
    %934 = vmatpush.msra.mxu0 0.0
    %935 = vmatpush.msra.mxu0 0.0
    %936 = vmatpush.msra.mxu0 0.0
    %937 = vmatpush.msra.mxu0 %v401
    %938 = vmatmul.f32.gmra.mxu0 %v900
    %v939 = vpop.f32.mrf.mxu0
    %v940 = vadd.f32 0.0, %v939
    %941 = vdwg.mxu0
    %942 = vmatpush.msra.mxu0 0.0
    %943 = vmatpush.msra.mxu0 0.0
    %944 = vmatpush.msra.mxu0 0.0
    %945 = vmatpush.msra.mxu0 0.0
    %946 = vmatpush.msra.mxu0 0.0
    %947 = vmatpush.msra.mxu0 0.0
    %948 = vmatpush.msra.mxu0 0.0
    %949 = vmatpush.msra.mxu0 0.0
    %950 = vmatpush.msra.mxu0 0.0
    %951 = vmatpush.msra.mxu0 0.0
    %952 = vmatpush.msra.mxu0 0.0
    %953 = vmatpush.msra.mxu0 0.0
    %954 = vmatpush.msra.mxu0 0.0
    %955 = vmatpush.msra.mxu0 0.0
    %956 = vmatpush.msra.mxu0 0.0
    %957 = vmatpush.msra.mxu0 %v402
    %958 = vmatmul.f32.gmra.mxu0 %v900
    %v959 = vpop.f32.mrf.mxu0
    %v960 = vadd.f32 0.0, %v959
    %961 = vdwg.mxu0
    %962 = vmatpush.msra.mxu0 0.0
    %963 = vmatpush.msra.mxu0 0.0
    %964 = vmatpush.msra.mxu0 0.0
    %965 = vmatpush.msra.mxu0 0.0
    %966 = vmatpush.msra.mxu0 0.0
    %967 = vmatpush.msra.mxu0 0.0
    %968 = vmatpush.msra.mxu0 0.0
    %969 = vmatpush.msra.mxu0 0.0
    %970 = vmatpush.msra.mxu0 0.0
    %971 = vmatpush.msra.mxu0 0.0
    %972 = vmatpush.msra.mxu0 0.0
    %973 = vmatpush.msra.mxu0 0.0
    %974 = vmatpush.msra.mxu0 0.0
    %975 = vmatpush.msra.mxu0 0.0
    %976 = vmatpush.msra.mxu0 0.0
    %977 = vmatpush.msra.mxu0 %v403
    %978 = vmatmul.f32.gmra.mxu0 %v900
    %v979 = vpop.f32.mrf.mxu0
    %v980 = vadd.f32 0.0, %v979
    %981 = vdwg.mxu0
    %v982 = vmul.f32 %v801, %v920
    %v983 = vmul.f32 %v802, %v940
    %v984 = vmul.f32 %v803, %v960
    %v985 = vmul.f32 %v804, %v980
    %v986 = vperm.slane %v76, 3
    %v987 = vperm.slane %v77, 3
    %v988 = vperm.slane %v78, 3
    %v989 = vperm.slane %v79, 3
    %v990 = vmul.f32 %v982, %v986
    %v991 = vmul.f32 %v983, %v987
    %v992 = vmul.f32 %v984, %v988
    %v993 = vmul.f32 %v985, %v989
    %v994 = vperm.slane %v76, 4
    %v995 = vperm.slane %v77, 4
    %v996 = vperm.slane %v78, 4
    %v997 = vperm.slane %v79, 4
    %v998 = vadd.f32 %v990, %v994
    %v999 = vadd.f32 %v991, %v995
    %v1000 = vadd.f32 %v992, %v996
    %v1001 = vadd.f32 %v993, %v997
    %v1002 = vperm.slane %v71, 1
    %v1003 = vperm.slane %v71, 3
    %v1004 = vperm.slane %v71, 5
    %v1005 = vperm.slane %v71, 7
    %v1010 = vperm.slane %v1002, 1
    %v1011 = vperm.slane %v1003, 1
    %v1012 = vperm.slane %v1004, 1
    %v1013 = vperm.slane %v1005, 1
    %1014 = vrot.lane.b32.xlu0 %v62, 116
    %v1015 = vpop.permute.xlu0 %1014
    %v1016 = vsel %vm540, %v1015, 0
    %1018 = vmatpush.msra.mxu0 0.0
    %1019 = vmatpush.msra.mxu0 0.0
    %1020 = vmatpush.msra.mxu0 0.0
    %1021 = vmatpush.msra.mxu0 0.0
    %1022 = vmatpush.msra.mxu0 0.0
    %1023 = vmatpush.msra.mxu0 0.0
    %1024 = vmatpush.msra.mxu0 0.0
    %1025 = vmatpush.msra.mxu0 0.0
    %1026 = vmatpush.msra.mxu0 0.0
    %1027 = vmatpush.msra.mxu0 0.0
    %1028 = vmatpush.msra.mxu0 0.0
    %1029 = vmatpush.msra.mxu0 0.0
    %1030 = vmatpush.msra.mxu0 0.0
    %1031 = vmatpush.msra.mxu0 0.0
    %1032 = vmatpush.msra.mxu0 %v546
    %1033 = vmatpush.msra.mxu0 %v63
    %1034 = vmatmul.f32.gmra.mxu0 %v1016
    %v1035 = vpop.f32.mrf.mxu0
    %v1036 = vadd.f32 %v1010, %v1035
    %1037 = vdwg.mxu0
    %1038 = vmatpush.msra.mxu0 0.0
    %1039 = vmatpush.msra.mxu0 0.0
    %1040 = vmatpush.msra.mxu0 0.0
    %1041 = vmatpush.msra.mxu0 0.0
    %1042 = vmatpush.msra.mxu0 0.0
    %1043 = vmatpush.msra.mxu0 0.0
    %1044 = vmatpush.msra.mxu0 0.0
    %1045 = vmatpush.msra.mxu0 0.0
    %1046 = vmatpush.msra.mxu0 0.0
    %1047 = vmatpush.msra.mxu0 0.0
    %1048 = vmatpush.msra.mxu0 0.0
    %1049 = vmatpush.msra.mxu0 0.0
    %1050 = vmatpush.msra.mxu0 0.0
    %1051 = vmatpush.msra.mxu0 0.0
    %1052 = vmatpush.msra.mxu0 %v549
    %1053 = vmatpush.msra.mxu0 %v64
    %1054 = vmatmul.f32.gmra.mxu0 %v1016
    %v1055 = vpop.f32.mrf.mxu0
    %v1056 = vadd.f32 %v1011, %v1055
    %1057 = vdwg.mxu0
    %1058 = vmatpush.msra.mxu0 0.0
    %1059 = vmatpush.msra.mxu0 0.0
    %1060 = vmatpush.msra.mxu0 0.0
    %1061 = vmatpush.msra.mxu0 0.0
    %1062 = vmatpush.msra.mxu0 0.0
    %1063 = vmatpush.msra.mxu0 0.0
    %1064 = vmatpush.msra.mxu0 0.0
    %1065 = vmatpush.msra.mxu0 0.0
    %1066 = vmatpush.msra.mxu0 0.0
    %1067 = vmatpush.msra.mxu0 0.0
    %1068 = vmatpush.msra.mxu0 0.0
    %1069 = vmatpush.msra.mxu0 0.0
    %1070 = vmatpush.msra.mxu0 0.0
    %1071 = vmatpush.msra.mxu0 0.0
    %1072 = vmatpush.msra.mxu0 %v552
    %1073 = vmatpush.msra.mxu0 %v65
    %1074 = vmatmul.f32.gmra.mxu0 %v1016
    %v1075 = vpop.f32.mrf.mxu0
    %v1076 = vadd.f32 %v1012, %v1075
    %1077 = vdwg.mxu0
    %1078 = vmatpush.msra.mxu0 0.0
    %1079 = vmatpush.msra.mxu0 0.0
    %1080 = vmatpush.msra.mxu0 0.0
    %1081 = vmatpush.msra.mxu0 0.0
    %1082 = vmatpush.msra.mxu0 0.0
    %1083 = vmatpush.msra.mxu0 0.0
    %1084 = vmatpush.msra.mxu0 0.0
    %1085 = vmatpush.msra.mxu0 0.0
    %1086 = vmatpush.msra.mxu0 0.0
    %1087 = vmatpush.msra.mxu0 0.0
    %1088 = vmatpush.msra.mxu0 0.0
    %1089 = vmatpush.msra.mxu0 0.0
    %1090 = vmatpush.msra.mxu0 0.0
    %1091 = vmatpush.msra.mxu0 0.0
    %1092 = vmatpush.msra.mxu0 %v555
    %1093 = vmatpush.msra.mxu0 %v66
    %1094 = vmatmul.f32.gmra.mxu0 %v1016
    %v1095 = vpop.f32.mrf.mxu0
    %v1096 = vadd.f32 %v1013, %v1095
    %1097 = vdwg.mxu0
    %1098 = vmatpush.msra.mxu0 %v351
    %1099 = vmatpush.msra.mxu0 %v350
    %1100 = vmatpush.msra.mxu0 %v349
    %1101 = vmatpush.msra.mxu0 %v348
    %1102 = vmatpush.msra.mxu0 %v347
    %1103 = vmatpush.msra.mxu0 %v346
    %1104 = vmatpush.msra.mxu0 %v345
    %1105 = vmatpush.msra.mxu0 %v344
    %1106 = vmatpush.msra.mxu0 %v343
    %1107 = vmatpush.msra.mxu0 %v342
    %1108 = vmatpush.msra.mxu0 %v341
    %1109 = vmatpush.msra.mxu0 %v340
    %1110 = vmatpush.msra.mxu0 %v339
    %1111 = vmatpush.msra.mxu0 %v338
    %1112 = vmatpush.msra.mxu0 %v337
    %1113 = vmatpush.msra.mxu0 %v336
    %1114 = vmatmul.f32.gmra.mxu0 %v1036
    %v1115 = vpop.f32.mrf.mxu0
    %v1116 = vadd.f32 0.0, %v1115
    %1117 = vdwg.mxu0
    %1118 = vmatpush.msra.mxu0 %v367
    %1119 = vmatpush.msra.mxu0 %v366
    %1120 = vmatpush.msra.mxu0 %v365
    %1121 = vmatpush.msra.mxu0 %v364
    %1122 = vmatpush.msra.mxu0 %v363
    %1123 = vmatpush.msra.mxu0 %v362
    %1124 = vmatpush.msra.mxu0 %v361
    %1125 = vmatpush.msra.mxu0 %v360
    %1126 = vmatpush.msra.mxu0 %v359
    %1127 = vmatpush.msra.mxu0 %v358
    %1128 = vmatpush.msra.mxu0 %v357
    %1129 = vmatpush.msra.mxu0 %v356
    %1130 = vmatpush.msra.mxu0 %v355
    %1131 = vmatpush.msra.mxu0 %v354
    %1132 = vmatpush.msra.mxu0 %v353
    %1133 = vmatpush.msra.mxu0 %v352
    %1134 = vmatmul.f32.gmra.mxu0 %v1056
    %v1135 = vpop.f32.mrf.mxu0
    %v1136 = vadd.f32 %v1116, %v1135
    %1137 = vdwg.mxu0
    %1138 = vmatpush.msra.mxu0 %v383
    %1139 = vmatpush.msra.mxu0 %v382
    %1140 = vmatpush.msra.mxu0 %v381
    %1141 = vmatpush.msra.mxu0 %v380
    %1142 = vmatpush.msra.mxu0 %v379
    %1143 = vmatpush.msra.mxu0 %v378
    %1144 = vmatpush.msra.mxu0 %v377
    %1145 = vmatpush.msra.mxu0 %v376
    %1146 = vmatpush.msra.mxu0 %v375
    %1147 = vmatpush.msra.mxu0 %v374
    %1148 = vmatpush.msra.mxu0 %v373
    %1149 = vmatpush.msra.mxu0 %v372
    %1150 = vmatpush.msra.mxu0 %v371
    %1151 = vmatpush.msra.mxu0 %v370
    %1152 = vmatpush.msra.mxu0 %v369
    %1153 = vmatpush.msra.mxu0 %v368
    %1154 = vmatmul.f32.gmra.mxu0 %v1076
    %v1155 = vpop.f32.mrf.mxu0
    %v1156 = vadd.f32 %v1136, %v1155
    %1157 = vdwg.mxu0
    %1158 = vmatpush.msra.mxu0 %v399
    %1159 = vmatpush.msra.mxu0 %v398
    %1160 = vmatpush.msra.mxu0 %v397
    %1161 = vmatpush.msra.mxu0 %v396
    %1162 = vmatpush.msra.mxu0 %v395
    %1163 = vmatpush.msra.mxu0 %v394
    %1164 = vmatpush.msra.mxu0 %v393
    %1165 = vmatpush.msra.mxu0 %v392
    %1166 = vmatpush.msra.mxu0 %v391
    %1167 = vmatpush.msra.mxu0 %v390
    %1168 = vmatpush.msra.mxu0 %v389
    %1169 = vmatpush.msra.mxu0 %v388
    %1170 = vmatpush.msra.mxu0 %v387
    %1171 = vmatpush.msra.mxu0 %v386
    %1172 = vmatpush.msra.mxu0 %v385
    %1173 = vmatpush.msra.mxu0 %v384
    %1174 = vmatmul.f32.gmra.mxu0 %v1096
    %v1175 = vpop.f32.mrf.mxu0
    %v1176 = vadd.f32 %v1156, %v1175
    %1177 = vdwg.mxu0
    %v1179 = vsel %vm717, %v1176, 0
    %1181 = vmatpush.msra.mxu0 0.0
    %1182 = vmatpush.msra.mxu0 0.0
    %1183 = vmatpush.msra.mxu0 0.0
    %1184 = vmatpush.msra.mxu0 0.0
    %1185 = vmatpush.msra.mxu0 0.0
    %1186 = vmatpush.msra.mxu0 0.0
    %1187 = vmatpush.msra.mxu0 0.0
    %1188 = vmatpush.msra.mxu0 0.0
    %1189 = vmatpush.msra.mxu0 0.0
    %1190 = vmatpush.msra.mxu0 0.0
    %1191 = vmatpush.msra.mxu0 0.0
    %1192 = vmatpush.msra.mxu0 0.0
    %1193 = vmatpush.msra.mxu0 0.0
    %1194 = vmatpush.msra.mxu0 0.0
    %1195 = vmatpush.msra.mxu0 0.0
    %1196 = vmatpush.msra.mxu0 %v400
    %1197 = vmatmul.f32.gmra.mxu0 %v1179
    %v1198 = vpop.f32.mrf.mxu0
    %v1199 = vadd.f32 0.0, %v1198
    %1200 = vdwg.mxu0
    %1201 = vmatpush.msra.mxu0 0.0
    %1202 = vmatpush.msra.mxu0 0.0
    %1203 = vmatpush.msra.mxu0 0.0
    %1204 = vmatpush.msra.mxu0 0.0
    %1205 = vmatpush.msra.mxu0 0.0
    %1206 = vmatpush.msra.mxu0 0.0
    %1207 = vmatpush.msra.mxu0 0.0
    %1208 = vmatpush.msra.mxu0 0.0
    %1209 = vmatpush.msra.mxu0 0.0
    %1210 = vmatpush.msra.mxu0 0.0
    %1211 = vmatpush.msra.mxu0 0.0
    %1212 = vmatpush.msra.mxu0 0.0
    %1213 = vmatpush.msra.mxu0 0.0
    %1214 = vmatpush.msra.mxu0 0.0
    %1215 = vmatpush.msra.mxu0 0.0
    %1216 = vmatpush.msra.mxu0 %v401
    %1217 = vmatmul.f32.gmra.mxu0 %v1179
    %v1218 = vpop.f32.mrf.mxu0
    %v1219 = vadd.f32 0.0, %v1218
    %1220 = vdwg.mxu0
    %1221 = vmatpush.msra.mxu0 0.0
    %1222 = vmatpush.msra.mxu0 0.0
    %1223 = vmatpush.msra.mxu0 0.0
    %1224 = vmatpush.msra.mxu0 0.0
    %1225 = vmatpush.msra.mxu0 0.0
    %1226 = vmatpush.msra.mxu0 0.0
    %1227 = vmatpush.msra.mxu0 0.0
    %1228 = vmatpush.msra.mxu0 0.0
    %1229 = vmatpush.msra.mxu0 0.0
    %1230 = vmatpush.msra.mxu0 0.0
    %1231 = vmatpush.msra.mxu0 0.0
    %1232 = vmatpush.msra.mxu0 0.0
    %1233 = vmatpush.msra.mxu0 0.0
    %1234 = vmatpush.msra.mxu0 0.0
    %1235 = vmatpush.msra.mxu0 0.0
    %1236 = vmatpush.msra.mxu0 %v402
    %1237 = vmatmul.f32.gmra.mxu0 %v1179
    %v1238 = vpop.f32.mrf.mxu0
    %v1239 = vadd.f32 0.0, %v1238
    %1240 = vdwg.mxu0
    %1241 = vmatpush.msra.mxu0 0.0
    %1242 = vmatpush.msra.mxu0 0.0
    %1243 = vmatpush.msra.mxu0 0.0
    %1244 = vmatpush.msra.mxu0 0.0
    %1245 = vmatpush.msra.mxu0 0.0
    %1246 = vmatpush.msra.mxu0 0.0
    %1247 = vmatpush.msra.mxu0 0.0
    %1248 = vmatpush.msra.mxu0 0.0
    %1249 = vmatpush.msra.mxu0 0.0
    %1250 = vmatpush.msra.mxu0 0.0
    %1251 = vmatpush.msra.mxu0 0.0
    %1252 = vmatpush.msra.mxu0 0.0
    %1253 = vmatpush.msra.mxu0 0.0
    %1254 = vmatpush.msra.mxu0 0.0
    %1255 = vmatpush.msra.mxu0 0.0
    %1256 = vmatpush.msra.mxu0 %v403
    %1257 = vmatmul.f32.gmra.mxu0 %v1179
    %v1258 = vpop.f32.mrf.mxu0
    %v1259 = vadd.f32 0.0, %v1258
    %1260 = vdwg.mxu0
    %v1261 = vsub.f32 %v1036, %v1199
    %v1262 = vsub.f32 %v1056, %v1219
    %v1263 = vsub.f32 %v1076, %v1239
    %v1264 = vsub.f32 %v1096, %v1259
    %v1265 = vmul.f32 %v1261, %v1261
    %v1266 = vmul.f32 %v1262, %v1262
    %v1267 = vmul.f32 %v1263, %v1263
    %v1268 = vmul.f32 %v1264, %v1264
    %1269 = vmatpush.msra.mxu0 %v351
    %1270 = vmatpush.msra.mxu0 %v350
    %1271 = vmatpush.msra.mxu0 %v349
    %1272 = vmatpush.msra.mxu0 %v348
    %1273 = vmatpush.msra.mxu0 %v347
    %1274 = vmatpush.msra.mxu0 %v346
    %1275 = vmatpush.msra.mxu0 %v345
    %1276 = vmatpush.msra.mxu0 %v344
    %1277 = vmatpush.msra.mxu0 %v343
    %1278 = vmatpush.msra.mxu0 %v342
    %1279 = vmatpush.msra.mxu0 %v341
    %1280 = vmatpush.msra.mxu0 %v340
    %1281 = vmatpush.msra.mxu0 %v339
    %1282 = vmatpush.msra.mxu0 %v338
    %1283 = vmatpush.msra.mxu0 %v337
    %1284 = vmatpush.msra.mxu0 %v336
    %1285 = vmatmul.f32.gmra.mxu0 %v1265
    %v1286 = vpop.f32.mrf.mxu0
    %v1287 = vadd.f32 1e-05, %v1286
    %1288 = vdwg.mxu0
    %1289 = vmatpush.msra.mxu0 %v367
    %1290 = vmatpush.msra.mxu0 %v366
    %1291 = vmatpush.msra.mxu0 %v365
    %1292 = vmatpush.msra.mxu0 %v364
    %1293 = vmatpush.msra.mxu0 %v363
    %1294 = vmatpush.msra.mxu0 %v362
    %1295 = vmatpush.msra.mxu0 %v361
    %1296 = vmatpush.msra.mxu0 %v360
    %1297 = vmatpush.msra.mxu0 %v359
    %1298 = vmatpush.msra.mxu0 %v358
    %1299 = vmatpush.msra.mxu0 %v357
    %1300 = vmatpush.msra.mxu0 %v356
    %1301 = vmatpush.msra.mxu0 %v355
    %1302 = vmatpush.msra.mxu0 %v354
    %1303 = vmatpush.msra.mxu0 %v353
    %1304 = vmatpush.msra.mxu0 %v352
    %1305 = vmatmul.f32.gmra.mxu0 %v1266
    %v1306 = vpop.f32.mrf.mxu0
    %v1307 = vadd.f32 %v1287, %v1306
    %1308 = vdwg.mxu0
    %1309 = vmatpush.msra.mxu0 %v383
    %1310 = vmatpush.msra.mxu0 %v382
    %1311 = vmatpush.msra.mxu0 %v381
    %1312 = vmatpush.msra.mxu0 %v380
    %1313 = vmatpush.msra.mxu0 %v379
    %1314 = vmatpush.msra.mxu0 %v378
    %1315 = vmatpush.msra.mxu0 %v377
    %1316 = vmatpush.msra.mxu0 %v376
    %1317 = vmatpush.msra.mxu0 %v375
    %1318 = vmatpush.msra.mxu0 %v374
    %1319 = vmatpush.msra.mxu0 %v373
    %1320 = vmatpush.msra.mxu0 %v372
    %1321 = vmatpush.msra.mxu0 %v371
    %1322 = vmatpush.msra.mxu0 %v370
    %1323 = vmatpush.msra.mxu0 %v369
    %1324 = vmatpush.msra.mxu0 %v368
    %1325 = vmatmul.f32.gmra.mxu0 %v1267
    %v1326 = vpop.f32.mrf.mxu0
    %v1327 = vadd.f32 %v1307, %v1326
    %1328 = vdwg.mxu0
    %1329 = vmatpush.msra.mxu0 %v399
    %1330 = vmatpush.msra.mxu0 %v398
    %1331 = vmatpush.msra.mxu0 %v397
    %1332 = vmatpush.msra.mxu0 %v396
    %1333 = vmatpush.msra.mxu0 %v395
    %1334 = vmatpush.msra.mxu0 %v394
    %1335 = vmatpush.msra.mxu0 %v393
    %1336 = vmatpush.msra.mxu0 %v392
    %1337 = vmatpush.msra.mxu0 %v391
    %1338 = vmatpush.msra.mxu0 %v390
    %1339 = vmatpush.msra.mxu0 %v389
    %1340 = vmatpush.msra.mxu0 %v388
    %1341 = vmatpush.msra.mxu0 %v387
    %1342 = vmatpush.msra.mxu0 %v386
    %1343 = vmatpush.msra.mxu0 %v385
    %1344 = vmatpush.msra.mxu0 %v384
    %1345 = vmatmul.f32.gmra.mxu0 %v1268
    %v1346 = vpop.f32.mrf.mxu0
    %v1347 = vadd.f32 %v1327, %v1346
    %1348 = vdwg.mxu0
    %v1349 = vrsqrt.pop %v1347
    %v1350 = vmul.f32 %v1349, %v1347
    %v1351 = vmul.f32 %v1350, %v1349
    %v1352 = vmul.f32 0.5, %v1351
    %v1353 = vsub.f32 1.5, %v1352
    %v1354 = vmul.f32 %v1349, %v1353
    %vm1355 = vweird.f32 %v1347
    %vm1356 = vweird.f32 %v1349
    %vm1357 = vmor %vm1355, %vm1356
    %v1358 = vsel %vm1357, %v1349, %v1354
    %v1360 = vsel %vm717, %v1358, 0
    %1362 = vmatpush.msra.mxu0 0.0
    %1363 = vmatpush.msra.mxu0 0.0
    %1364 = vmatpush.msra.mxu0 0.0
    %1365 = vmatpush.msra.mxu0 0.0
    %1366 = vmatpush.msra.mxu0 0.0
    %1367 = vmatpush.msra.mxu0 0.0
    %1368 = vmatpush.msra.mxu0 0.0
    %1369 = vmatpush.msra.mxu0 0.0
    %1370 = vmatpush.msra.mxu0 0.0
    %1371 = vmatpush.msra.mxu0 0.0
    %1372 = vmatpush.msra.mxu0 0.0
    %1373 = vmatpush.msra.mxu0 0.0
    %1374 = vmatpush.msra.mxu0 0.0
    %1375 = vmatpush.msra.mxu0 0.0
    %1376 = vmatpush.msra.mxu0 0.0
    %1377 = vmatpush.msra.mxu0 %v400
    %1378 = vmatmul.f32.gmra.mxu0 %v1360
    %v1379 = vpop.f32.mrf.mxu0
    %v1380 = vadd.f32 0.0, %v1379
    %1381 = vdwg.mxu0
    %1382 = vmatpush.msra.mxu0 0.0
    %1383 = vmatpush.msra.mxu0 0.0
    %1384 = vmatpush.msra.mxu0 0.0
    %1385 = vmatpush.msra.mxu0 0.0
    %1386 = vmatpush.msra.mxu0 0.0
    %1387 = vmatpush.msra.mxu0 0.0
    %1388 = vmatpush.msra.mxu0 0.0
    %1389 = vmatpush.msra.mxu0 0.0
    %1390 = vmatpush.msra.mxu0 0.0
    %1391 = vmatpush.msra.mxu0 0.0
    %1392 = vmatpush.msra.mxu0 0.0
    %1393 = vmatpush.msra.mxu0 0.0
    %1394 = vmatpush.msra.mxu0 0.0
    %1395 = vmatpush.msra.mxu0 0.0
    %1396 = vmatpush.msra.mxu0 0.0
    %1397 = vmatpush.msra.mxu0 %v401
    %1398 = vmatmul.f32.gmra.mxu0 %v1360
    %v1399 = vpop.f32.mrf.mxu0
    %v1400 = vadd.f32 0.0, %v1399
    %1401 = vdwg.mxu0
    %1402 = vmatpush.msra.mxu0 0.0
    %1403 = vmatpush.msra.mxu0 0.0
    %1404 = vmatpush.msra.mxu0 0.0
    %1405 = vmatpush.msra.mxu0 0.0
    %1406 = vmatpush.msra.mxu0 0.0
    %1407 = vmatpush.msra.mxu0 0.0
    %1408 = vmatpush.msra.mxu0 0.0
    %1409 = vmatpush.msra.mxu0 0.0
    %1410 = vmatpush.msra.mxu0 0.0
    %1411 = vmatpush.msra.mxu0 0.0
    %1412 = vmatpush.msra.mxu0 0.0
    %1413 = vmatpush.msra.mxu0 0.0
    %1414 = vmatpush.msra.mxu0 0.0
    %1415 = vmatpush.msra.mxu0 0.0
    %1416 = vmatpush.msra.mxu0 0.0
    %1417 = vmatpush.msra.mxu0 %v402
    %1418 = vmatmul.f32.gmra.mxu0 %v1360
    %v1419 = vpop.f32.mrf.mxu0
    %v1420 = vadd.f32 0.0, %v1419
    %1421 = vdwg.mxu0
    %1422 = vmatpush.msra.mxu0 0.0
    %1423 = vmatpush.msra.mxu0 0.0
    %1424 = vmatpush.msra.mxu0 0.0
    %1425 = vmatpush.msra.mxu0 0.0
    %1426 = vmatpush.msra.mxu0 0.0
    %1427 = vmatpush.msra.mxu0 0.0
    %1428 = vmatpush.msra.mxu0 0.0
    %1429 = vmatpush.msra.mxu0 0.0
    %1430 = vmatpush.msra.mxu0 0.0
    %1431 = vmatpush.msra.mxu0 0.0
    %1432 = vmatpush.msra.mxu0 0.0
    %1433 = vmatpush.msra.mxu0 0.0
    %1434 = vmatpush.msra.mxu0 0.0
    %1435 = vmatpush.msra.mxu0 0.0
    %1436 = vmatpush.msra.mxu0 0.0
    %1437 = vmatpush.msra.mxu0 %v403
    %1438 = vmatmul.f32.gmra.mxu0 %v1360
    %v1439 = vpop.f32.mrf.mxu0
    %v1440 = vadd.f32 0.0, %v1439
    %1441 = vdwg.mxu0
    %v1442 = vmul.f32 %v1261, %v1380
    %v1443 = vmul.f32 %v1262, %v1400
    %v1444 = vmul.f32 %v1263, %v1420
    %v1445 = vmul.f32 %v1264, %v1440
    %v1446 = vmul.f32 %v1442, %v986
    %v1447 = vmul.f32 %v1443, %v987
    %v1448 = vmul.f32 %v1444, %v988
    %v1449 = vmul.f32 %v1445, %v989
    %v1450 = vadd.f32 %v1446, %v994
    %v1451 = vadd.f32 %v1447, %v995
    %v1452 = vadd.f32 %v1448, %v996
    %v1453 = vadd.f32 %v1449, %v997
    %1458 = vrot.lane.b32.xlu0 %v998, 1
    %v1459 = vpop.permute.xlu0 %1458
    %1460 = vrot.lane.b32.xlu0 %v999, 1
    %v1461 = vpop.permute.xlu0 %1460
    %1462 = vrot.lane.b32.xlu0 %v1000, 1
    %v1463 = vpop.permute.xlu0 %1462
    %1464 = vrot.lane.b32.xlu0 %v1001, 1
    %v1465 = vpop.permute.xlu0 %1464
    %v1466 = vsel %vm60, %v1459, %v1461
    %v1467 = vsel %vm60, %v1461, %v1463
    %v1468 = vsel %vm60, %v1463, %v1465
    %v1473 = vsel %vm60, 0.0, %v1459
    %vm1474 = vcmp.ne.s32.totalorder %v523, 0
    %vm1475 = vcmp.ne.s32.totalorder %v524, 0
    %vm1476 = vcmp.ne.s32.totalorder %v525, 0
    %vm1477 = vcmp.ne.s32.totalorder %v526, 0
    %v1478 = vsel %vm1474, %v1473, 0.0
    %v1479 = vsel %vm1475, %v1466, 0.0
    %v1480 = vsel %vm1476, %v1467, 0.0
    %v1481 = vsel %vm1477, %v1468, 0.0
    %1482 = vrot.lane.b32.xlu0 %v998, 127
    %v1483 = vpop.permute.xlu0 %1482
    %1484 = vrot.lane.b32.xlu0 %v999, 127
    %v1485 = vpop.permute.xlu0 %1484
    %1486 = vrot.lane.b32.xlu0 %v1000, 127
    %v1487 = vpop.permute.xlu0 %1486
    %1488 = vrot.lane.b32.xlu0 %v1001, 127
    %v1489 = vpop.permute.xlu0 %1488
    %vm1490 = vcmask 1039360
    %v1491 = vsel %vm1490, %v1483, %v1485
    %v1492 = vsel %vm1490, %v1485, %v1487
    %v1493 = vsel %vm1490, %v1487, %v1489
    %v1498 = vsel %vm1490, %v1489, 0.0
    %vm1499 = vcmp.ne.s32.totalorder %v523, 63
    %vm1500 = vcmp.ne.s32.totalorder %v524, 63
    %vm1501 = vcmp.ne.s32.totalorder %v525, 63
    %vm1502 = vcmp.ne.s32.totalorder %v526, 63
    %v1503 = vsel %vm1499, %v1491, 0.0
    %v1504 = vsel %vm1500, %v1492, 0.0
    %v1505 = vsel %vm1501, %v1493, 0.0
    %v1506 = vsel %vm1502, %v1498, 0.0
    %1511 = vrot.lane.b32.xlu0 %v1450, 1
    %v1512 = vpop.permute.xlu0 %1511
    %1513 = vrot.lane.b32.xlu0 %v1451, 1
    %v1514 = vpop.permute.xlu0 %1513
    %1515 = vrot.lane.b32.xlu0 %v1452, 1
    %v1516 = vpop.permute.xlu0 %1515
    %1517 = vrot.lane.b32.xlu0 %v1453, 1
    %v1518 = vpop.permute.xlu0 %1517
    %v1519 = vsel %vm60, %v1512, %v1514
    %v1520 = vsel %vm60, %v1514, %v1516
    %v1521 = vsel %vm60, %v1516, %v1518
    %v1526 = vsel %vm60, 0.0, %v1512
    %v1527 = vsel %vm1474, %v1526, 0.0
    %v1528 = vsel %vm1475, %v1519, 0.0
    %v1529 = vsel %vm1476, %v1520, 0.0
    %v1530 = vsel %vm1477, %v1521, 0.0
    %1531 = vrot.lane.b32.xlu0 %v1450, 127
    %v1532 = vpop.permute.xlu0 %1531
    %1533 = vrot.lane.b32.xlu0 %v1451, 127
    %v1534 = vpop.permute.xlu0 %1533
    %1535 = vrot.lane.b32.xlu0 %v1452, 127
    %v1536 = vpop.permute.xlu0 %1535
    %1537 = vrot.lane.b32.xlu0 %v1453, 127
    %v1538 = vpop.permute.xlu0 %1537
    %v1539 = vsel %vm1490, %v1532, %v1534
    %v1540 = vsel %vm1490, %v1534, %v1536
    %v1541 = vsel %vm1490, %v1536, %v1538
    %v1546 = vsel %vm1490, %v1538, 0.0
    %v1547 = vsel %vm1499, %v1539, 0.0
    %v1548 = vsel %vm1500, %v1540, 0.0
    %v1549 = vsel %vm1501, %v1541, 0.0
    %v1550 = vsel %vm1502, %v1546, 0.0
    %v1551 = vperm.slane %v72, 3
    %v1552 = vperm.slane %v73, 3
    %v1553 = vperm.slane %v74, 3
    %v1554 = vperm.slane %v75, 3
    %v1555 = vmul.f32 %v1551, %v1478
    %v1556 = vmul.f32 %v1552, %v1479
    %v1557 = vmul.f32 %v1553, %v1480
    %v1558 = vmul.f32 %v1554, %v1481
    %v1559 = vadd.f32 %v1555, 0.0
    %v1560 = vadd.f32 %v1556, 0.0
    %v1561 = vadd.f32 %v1557, 0.0
    %v1562 = vadd.f32 %v1558, 0.0
    %v1563 = vperm.slane %v72, 4
    %v1564 = vperm.slane %v73, 4
    %v1565 = vperm.slane %v74, 4
    %v1566 = vperm.slane %v75, 4
    %v1567 = vmul.f32 %v1563, %v998
    %v1568 = vmul.f32 %v1564, %v999
    %v1569 = vmul.f32 %v1565, %v1000
    %v1570 = vmul.f32 %v1566, %v1001
    %v1571 = vadd.f32 %v1559, %v1567
    %v1572 = vadd.f32 %v1560, %v1568
    %v1573 = vadd.f32 %v1561, %v1569
    %v1574 = vadd.f32 %v1562, %v1570
    %v1575 = vperm.slane %v72, 5
    %v1576 = vperm.slane %v73, 5
    %v1577 = vperm.slane %v74, 5
    %v1578 = vperm.slane %v75, 5
    %v1579 = vmul.f32 %v1575, %v1503
    %v1580 = vmul.f32 %v1576, %v1504
    %v1581 = vmul.f32 %v1577, %v1505
    %v1582 = vmul.f32 %v1578, %v1506
    %v1583 = vadd.f32 %v1571, %v1579
    %v1584 = vadd.f32 %v1572, %v1580
    %v1585 = vadd.f32 %v1573, %v1581
    %v1586 = vadd.f32 %v1574, %v1582
    %v1587 = vperm.slane %v72, 6
    %v1588 = vperm.slane %v73, 6
    %v1589 = vperm.slane %v74, 6
    %v1590 = vperm.slane %v75, 6
    %v1591 = vmul.f32 %v1587, %v1527
    %v1592 = vmul.f32 %v1588, %v1528
    %v1593 = vmul.f32 %v1589, %v1529
    %v1594 = vmul.f32 %v1590, %v1530
    %v1595 = vadd.f32 %v1583, %v1591
    %v1596 = vadd.f32 %v1584, %v1592
    %v1597 = vadd.f32 %v1585, %v1593
    %v1598 = vadd.f32 %v1586, %v1594
    %v1599 = vperm.slane %v72, 7
    %v1600 = vperm.slane %v73, 7
    %v1601 = vperm.slane %v74, 7
    %v1602 = vperm.slane %v75, 7
    %v1603 = vmul.f32 %v1599, %v1450
    %v1604 = vmul.f32 %v1600, %v1451
    %v1605 = vmul.f32 %v1601, %v1452
    %v1606 = vmul.f32 %v1602, %v1453
    %v1607 = vadd.f32 %v1595, %v1603
    %v1608 = vadd.f32 %v1596, %v1604
    %v1609 = vadd.f32 %v1597, %v1605
    %v1610 = vadd.f32 %v1598, %v1606
    %v1611 = vperm.slane %v76, 0
    %v1612 = vperm.slane %v77, 0
    %v1613 = vperm.slane %v78, 0
    %v1614 = vperm.slane %v79, 0
    %v1615 = vmul.f32 %v1611, %v1547
    %v1616 = vmul.f32 %v1612, %v1548
    %v1617 = vmul.f32 %v1613, %v1549
    %v1618 = vmul.f32 %v1614, %v1550
    %v1619 = vadd.f32 %v1607, %v1615
    %v1620 = vadd.f32 %v1608, %v1616
    %v1621 = vadd.f32 %v1609, %v1617
    %v1622 = vadd.f32 %v1610, %v1618
    %v1623 = vperm.slane %v76, 1
    %v1624 = vperm.slane %v77, 1
    %v1625 = vperm.slane %v78, 1
    %v1626 = vperm.slane %v79, 1
    %v1627 = vadd.f32 %v1619, %v1623
    %v1628 = vadd.f32 %v1620, %v1624
    %v1629 = vadd.f32 %v1621, %v1625
    %v1630 = vadd.f32 %v1622, %v1626
    %v1631 = vmax.f32 %v1627, 0.0
    %v1632 = vmax.f32 %v1628, 0.0
    %v1633 = vmax.f32 %v1629, 0.0
    %v1634 = vmax.f32 %v1630, 0.0
    %v1635 = vperm.slane %v72, 0
    %v1636 = vperm.slane %v73, 0
    %v1637 = vperm.slane %v74, 0
    %v1638 = vperm.slane %v75, 0
    %v1639 = vmul.f32 %v1635, %v1478
    %v1640 = vmul.f32 %v1636, %v1479
    %v1641 = vmul.f32 %v1637, %v1480
    %v1642 = vmul.f32 %v1638, %v1481
    %v1643 = vadd.f32 %v1639, 0.0
    %v1644 = vadd.f32 %v1640, 0.0
    %v1645 = vadd.f32 %v1641, 0.0
    %v1646 = vadd.f32 %v1642, 0.0
    %v1647 = vperm.slane %v72, 1
    %v1648 = vperm.slane %v73, 1
    %v1649 = vperm.slane %v74, 1
    %v1650 = vperm.slane %v75, 1
    %v1651 = vmul.f32 %v1647, %v998
    %v1652 = vmul.f32 %v1648, %v999
    %v1653 = vmul.f32 %v1649, %v1000
    %v1654 = vmul.f32 %v1650, %v1001
    %v1655 = vadd.f32 %v1643, %v1651
    %v1656 = vadd.f32 %v1644, %v1652
    %v1657 = vadd.f32 %v1645, %v1653
    %v1658 = vadd.f32 %v1646, %v1654
    %v1659 = vperm.slane %v72, 2
    %v1660 = vperm.slane %v73, 2
    %v1661 = vperm.slane %v74, 2
    %v1662 = vperm.slane %v75, 2
    %v1663 = vmul.f32 %v1659, %v1503
    %v1664 = vmul.f32 %v1660, %v1504
    %v1665 = vmul.f32 %v1661, %v1505
    %v1666 = vmul.f32 %v1662, %v1506
    %v1667 = vadd.f32 %v1655, %v1663
    %v1668 = vadd.f32 %v1656, %v1664
    %v1669 = vadd.f32 %v1657, %v1665
    %v1670 = vadd.f32 %v1658, %v1666
    %v1671 = vmul.f32 %v1551, %v1527
    %v1672 = vmul.f32 %v1552, %v1528
    %v1673 = vmul.f32 %v1553, %v1529
    %v1674 = vmul.f32 %v1554, %v1530
    %v1675 = vadd.f32 %v1667, %v1671
    %v1676 = vadd.f32 %v1668, %v1672
    %v1677 = vadd.f32 %v1669, %v1673
    %v1678 = vadd.f32 %v1670, %v1674
    %v1679 = vmul.f32 %v1563, %v1450
    %v1680 = vmul.f32 %v1564, %v1451
    %v1681 = vmul.f32 %v1565, %v1452
    %v1682 = vmul.f32 %v1566, %v1453
    %v1683 = vadd.f32 %v1675, %v1679
    %v1684 = vadd.f32 %v1676, %v1680
    %v1685 = vadd.f32 %v1677, %v1681
    %v1686 = vadd.f32 %v1678, %v1682
    %v1687 = vmul.f32 %v1575, %v1547
    %v1688 = vmul.f32 %v1576, %v1548
    %v1689 = vmul.f32 %v1577, %v1549
    %v1690 = vmul.f32 %v1578, %v1550
    %v1691 = vadd.f32 %v1683, %v1687
    %v1692 = vadd.f32 %v1684, %v1688
    %v1693 = vadd.f32 %v1685, %v1689
    %v1694 = vadd.f32 %v1686, %v1690
    %v1695 = vadd.f32 %v1691, %v1623
    %v1696 = vadd.f32 %v1692, %v1624
    %v1697 = vadd.f32 %v1693, %v1625
    %v1698 = vadd.f32 %v1694, %v1626
    %v1699 = vmax.f32 %v1695, 0.0
    %v1700 = vmax.f32 %v1696, 0.0
    %v1701 = vmax.f32 %v1697, 0.0
    %v1702 = vmax.f32 %v1698, 0.0
    %v1703 = vperm.slane %v76, 2
    %v1704 = vperm.slane %v77, 2
    %v1705 = vperm.slane %v78, 2
    %v1706 = vperm.slane %v79, 2
    %1707 = vmatpush.msra.mxu0 %v140
    %1708 = vmatpush.msra.mxu0 %v136
    %1709 = vmatpush.msra.mxu0 %v132
    %1710 = vmatpush.msra.mxu0 %v128
    %1711 = vmatpush.msra.mxu0 %v124
    %1712 = vmatpush.msra.mxu0 %v120
    %1713 = vmatpush.msra.mxu0 %v116
    %1714 = vmatpush.msra.mxu0 %v112
    %1715 = vmatpush.msra.mxu0 %v108
    %1716 = vmatpush.msra.mxu0 %v104
    %1717 = vmatpush.msra.mxu0 %v100
    %1718 = vmatpush.msra.mxu0 %v96
    %1719 = vmatpush.msra.mxu0 %v92
    %1720 = vmatpush.msra.mxu0 %v88
    %1721 = vmatpush.msra.mxu0 %v84
    %1722 = vmatpush.msra.mxu0 %v80
    %1723 = vmatmul.f32.gmra.mxu0 %v1631
    %v1724 = vpop.f32.mrf.mxu0
    %v1725 = vadd.f32 %v1703, %v1724
    %1726 = vdwg.mxu0
    %1727 = vmatpush.msra.mxu0 %v204
    %1728 = vmatpush.msra.mxu0 %v200
    %1729 = vmatpush.msra.mxu0 %v196
    %1730 = vmatpush.msra.mxu0 %v192
    %1731 = vmatpush.msra.mxu0 %v188
    %1732 = vmatpush.msra.mxu0 %v184
    %1733 = vmatpush.msra.mxu0 %v180
    %1734 = vmatpush.msra.mxu0 %v176
    %1735 = vmatpush.msra.mxu0 %v172
    %1736 = vmatpush.msra.mxu0 %v168
    %1737 = vmatpush.msra.mxu0 %v164
    %1738 = vmatpush.msra.mxu0 %v160
    %1739 = vmatpush.msra.mxu0 %v156
    %1740 = vmatpush.msra.mxu0 %v152
    %1741 = vmatpush.msra.mxu0 %v148
    %1742 = vmatpush.msra.mxu0 %v144
    %1743 = vmatmul.f32.gmra.mxu0 %v1632
    %v1744 = vpop.f32.mrf.mxu0
    %v1745 = vadd.f32 %v1725, %v1744
    %1746 = vdwg.mxu0
    %1747 = vmatpush.msra.mxu0 %v268
    %1748 = vmatpush.msra.mxu0 %v264
    %1749 = vmatpush.msra.mxu0 %v260
    %1750 = vmatpush.msra.mxu0 %v256
    %1751 = vmatpush.msra.mxu0 %v252
    %1752 = vmatpush.msra.mxu0 %v248
    %1753 = vmatpush.msra.mxu0 %v244
    %1754 = vmatpush.msra.mxu0 %v240
    %1755 = vmatpush.msra.mxu0 %v236
    %1756 = vmatpush.msra.mxu0 %v232
    %1757 = vmatpush.msra.mxu0 %v228
    %1758 = vmatpush.msra.mxu0 %v224
    %1759 = vmatpush.msra.mxu0 %v220
    %1760 = vmatpush.msra.mxu0 %v216
    %1761 = vmatpush.msra.mxu0 %v212
    %1762 = vmatpush.msra.mxu0 %v208
    %1763 = vmatmul.f32.gmra.mxu0 %v1633
    %v1764 = vpop.f32.mrf.mxu0
    %v1765 = vadd.f32 %v1745, %v1764
    %1766 = vdwg.mxu0
    %1767 = vmatpush.msra.mxu0 %v332
    %1768 = vmatpush.msra.mxu0 %v328
    %1769 = vmatpush.msra.mxu0 %v324
    %1770 = vmatpush.msra.mxu0 %v320
    %1771 = vmatpush.msra.mxu0 %v316
    %1772 = vmatpush.msra.mxu0 %v312
    %1773 = vmatpush.msra.mxu0 %v308
    %1774 = vmatpush.msra.mxu0 %v304
    %1775 = vmatpush.msra.mxu0 %v300
    %1776 = vmatpush.msra.mxu0 %v296
    %1777 = vmatpush.msra.mxu0 %v292
    %1778 = vmatpush.msra.mxu0 %v288
    %1779 = vmatpush.msra.mxu0 %v284
    %1780 = vmatpush.msra.mxu0 %v280
    %1781 = vmatpush.msra.mxu0 %v276
    %1782 = vmatpush.msra.mxu0 %v272
    %1783 = vmatmul.f32.gmra.mxu0 %v1634
    %v1784 = vpop.f32.mrf.mxu0
    %v1785 = vadd.f32 %v1765, %v1784
    %1786 = vdwg.mxu0
    %1787 = vmatpush.msra.mxu0 %v141
    %1788 = vmatpush.msra.mxu0 %v137
    %1789 = vmatpush.msra.mxu0 %v133
    %1790 = vmatpush.msra.mxu0 %v129
    %1791 = vmatpush.msra.mxu0 %v125
    %1792 = vmatpush.msra.mxu0 %v121
    %1793 = vmatpush.msra.mxu0 %v117
    %1794 = vmatpush.msra.mxu0 %v113
    %1795 = vmatpush.msra.mxu0 %v109
    %1796 = vmatpush.msra.mxu0 %v105
    %1797 = vmatpush.msra.mxu0 %v101
    %1798 = vmatpush.msra.mxu0 %v97
    %1799 = vmatpush.msra.mxu0 %v93
    %1800 = vmatpush.msra.mxu0 %v89
    %1801 = vmatpush.msra.mxu0 %v85
    %1802 = vmatpush.msra.mxu0 %v81
    %1803 = vmatmul.f32.gmra.mxu0 %v1631
    %v1804 = vpop.f32.mrf.mxu0
    %v1805 = vadd.f32 %v1704, %v1804
    %1806 = vdwg.mxu0
    %1807 = vmatpush.msra.mxu0 %v205
    %1808 = vmatpush.msra.mxu0 %v201
    %1809 = vmatpush.msra.mxu0 %v197
    %1810 = vmatpush.msra.mxu0 %v193
    %1811 = vmatpush.msra.mxu0 %v189
    %1812 = vmatpush.msra.mxu0 %v185
    %1813 = vmatpush.msra.mxu0 %v181
    %1814 = vmatpush.msra.mxu0 %v177
    %1815 = vmatpush.msra.mxu0 %v173
    %1816 = vmatpush.msra.mxu0 %v169
    %1817 = vmatpush.msra.mxu0 %v165
    %1818 = vmatpush.msra.mxu0 %v161
    %1819 = vmatpush.msra.mxu0 %v157
    %1820 = vmatpush.msra.mxu0 %v153
    %1821 = vmatpush.msra.mxu0 %v149
    %1822 = vmatpush.msra.mxu0 %v145
    %1823 = vmatmul.f32.gmra.mxu0 %v1632
    %v1824 = vpop.f32.mrf.mxu0
    %v1825 = vadd.f32 %v1805, %v1824
    %1826 = vdwg.mxu0
    %1827 = vmatpush.msra.mxu0 %v269
    %1828 = vmatpush.msra.mxu0 %v265
    %1829 = vmatpush.msra.mxu0 %v261
    %1830 = vmatpush.msra.mxu0 %v257
    %1831 = vmatpush.msra.mxu0 %v253
    %1832 = vmatpush.msra.mxu0 %v249
    %1833 = vmatpush.msra.mxu0 %v245
    %1834 = vmatpush.msra.mxu0 %v241
    %1835 = vmatpush.msra.mxu0 %v237
    %1836 = vmatpush.msra.mxu0 %v233
    %1837 = vmatpush.msra.mxu0 %v229
    %1838 = vmatpush.msra.mxu0 %v225
    %1839 = vmatpush.msra.mxu0 %v221
    %1840 = vmatpush.msra.mxu0 %v217
    %1841 = vmatpush.msra.mxu0 %v213
    %1842 = vmatpush.msra.mxu0 %v209
    %1843 = vmatmul.f32.gmra.mxu0 %v1633
    %v1844 = vpop.f32.mrf.mxu0
    %v1845 = vadd.f32 %v1825, %v1844
    %1846 = vdwg.mxu0
    %1847 = vmatpush.msra.mxu0 %v333
    %1848 = vmatpush.msra.mxu0 %v329
    %1849 = vmatpush.msra.mxu0 %v325
    %1850 = vmatpush.msra.mxu0 %v321
    %1851 = vmatpush.msra.mxu0 %v317
    %1852 = vmatpush.msra.mxu0 %v313
    %1853 = vmatpush.msra.mxu0 %v309
    %1854 = vmatpush.msra.mxu0 %v305
    %1855 = vmatpush.msra.mxu0 %v301
    %1856 = vmatpush.msra.mxu0 %v297
    %1857 = vmatpush.msra.mxu0 %v293
    %1858 = vmatpush.msra.mxu0 %v289
    %1859 = vmatpush.msra.mxu0 %v285
    %1860 = vmatpush.msra.mxu0 %v281
    %1861 = vmatpush.msra.mxu0 %v277
    %1862 = vmatpush.msra.mxu0 %v273
    %1863 = vmatmul.f32.gmra.mxu0 %v1634
    %v1864 = vpop.f32.mrf.mxu0
    %v1865 = vadd.f32 %v1845, %v1864
    %1866 = vdwg.mxu0
    %1867 = vmatpush.msra.mxu0 %v142
    %1868 = vmatpush.msra.mxu0 %v138
    %1869 = vmatpush.msra.mxu0 %v134
    %1870 = vmatpush.msra.mxu0 %v130
    %1871 = vmatpush.msra.mxu0 %v126
    %1872 = vmatpush.msra.mxu0 %v122
    %1873 = vmatpush.msra.mxu0 %v118
    %1874 = vmatpush.msra.mxu0 %v114
    %1875 = vmatpush.msra.mxu0 %v110
    %1876 = vmatpush.msra.mxu0 %v106
    %1877 = vmatpush.msra.mxu0 %v102
    %1878 = vmatpush.msra.mxu0 %v98
    %1879 = vmatpush.msra.mxu0 %v94
    %1880 = vmatpush.msra.mxu0 %v90
    %1881 = vmatpush.msra.mxu0 %v86
    %1882 = vmatpush.msra.mxu0 %v82
    %1883 = vmatmul.f32.gmra.mxu0 %v1631
    %v1884 = vpop.f32.mrf.mxu0
    %v1885 = vadd.f32 %v1705, %v1884
    %1886 = vdwg.mxu0
    %1887 = vmatpush.msra.mxu0 %v206
    %1888 = vmatpush.msra.mxu0 %v202
    %1889 = vmatpush.msra.mxu0 %v198
    %1890 = vmatpush.msra.mxu0 %v194
    %1891 = vmatpush.msra.mxu0 %v190
    %1892 = vmatpush.msra.mxu0 %v186
    %1893 = vmatpush.msra.mxu0 %v182
    %1894 = vmatpush.msra.mxu0 %v178
    %1895 = vmatpush.msra.mxu0 %v174
    %1896 = vmatpush.msra.mxu0 %v170
    %1897 = vmatpush.msra.mxu0 %v166
    %1898 = vmatpush.msra.mxu0 %v162
    %1899 = vmatpush.msra.mxu0 %v158
    %1900 = vmatpush.msra.mxu0 %v154
    %1901 = vmatpush.msra.mxu0 %v150
    %1902 = vmatpush.msra.mxu0 %v146
    %1903 = vmatmul.f32.gmra.mxu0 %v1632
    %v1904 = vpop.f32.mrf.mxu0
    %v1905 = vadd.f32 %v1885, %v1904
    %1906 = vdwg.mxu0
    %1907 = vmatpush.msra.mxu0 %v270
    %1908 = vmatpush.msra.mxu0 %v266
    %1909 = vmatpush.msra.mxu0 %v262
    %1910 = vmatpush.msra.mxu0 %v258
    %1911 = vmatpush.msra.mxu0 %v254
    %1912 = vmatpush.msra.mxu0 %v250
    %1913 = vmatpush.msra.mxu0 %v246
    %1914 = vmatpush.msra.mxu0 %v242
    %1915 = vmatpush.msra.mxu0 %v238
    %1916 = vmatpush.msra.mxu0 %v234
    %1917 = vmatpush.msra.mxu0 %v230
    %1918 = vmatpush.msra.mxu0 %v226
    %1919 = vmatpush.msra.mxu0 %v222
    %1920 = vmatpush.msra.mxu0 %v218
    %1921 = vmatpush.msra.mxu0 %v214
    %1922 = vmatpush.msra.mxu0 %v210
    %1923 = vmatmul.f32.gmra.mxu0 %v1633
    %v1924 = vpop.f32.mrf.mxu0
    %v1925 = vadd.f32 %v1905, %v1924
    %1926 = vdwg.mxu0
    %1927 = vmatpush.msra.mxu0 %v334
    %1928 = vmatpush.msra.mxu0 %v330
    %1929 = vmatpush.msra.mxu0 %v326
    %1930 = vmatpush.msra.mxu0 %v322
    %1931 = vmatpush.msra.mxu0 %v318
    %1932 = vmatpush.msra.mxu0 %v314
    %1933 = vmatpush.msra.mxu0 %v310
    %1934 = vmatpush.msra.mxu0 %v306
    %1935 = vmatpush.msra.mxu0 %v302
    %1936 = vmatpush.msra.mxu0 %v298
    %1937 = vmatpush.msra.mxu0 %v294
    %1938 = vmatpush.msra.mxu0 %v290
    %1939 = vmatpush.msra.mxu0 %v286
    %1940 = vmatpush.msra.mxu0 %v282
    %1941 = vmatpush.msra.mxu0 %v278
    %1942 = vmatpush.msra.mxu0 %v274
    %1943 = vmatmul.f32.gmra.mxu0 %v1634
    %v1944 = vpop.f32.mrf.mxu0
    %v1945 = vadd.f32 %v1925, %v1944
    %1946 = vdwg.mxu0
    %1947 = vmatpush.msra.mxu0 %v143
    %1948 = vmatpush.msra.mxu0 %v139
    %1949 = vmatpush.msra.mxu0 %v135
    %1950 = vmatpush.msra.mxu0 %v131
    %1951 = vmatpush.msra.mxu0 %v127
    %1952 = vmatpush.msra.mxu0 %v123
    %1953 = vmatpush.msra.mxu0 %v119
    %1954 = vmatpush.msra.mxu0 %v115
    %1955 = vmatpush.msra.mxu0 %v111
    %1956 = vmatpush.msra.mxu0 %v107
    %1957 = vmatpush.msra.mxu0 %v103
    %1958 = vmatpush.msra.mxu0 %v99
    %1959 = vmatpush.msra.mxu0 %v95
    %1960 = vmatpush.msra.mxu0 %v91
    %1961 = vmatpush.msra.mxu0 %v87
    %1962 = vmatpush.msra.mxu0 %v83
    %1963 = vmatmul.f32.gmra.mxu0 %v1631
    %v1964 = vpop.f32.mrf.mxu0
    %v1965 = vadd.f32 %v1706, %v1964
    %1966 = vdwg.mxu0
    %1967 = vmatpush.msra.mxu0 %v207
    %1968 = vmatpush.msra.mxu0 %v203
    %1969 = vmatpush.msra.mxu0 %v199
    %1970 = vmatpush.msra.mxu0 %v195
    %1971 = vmatpush.msra.mxu0 %v191
    %1972 = vmatpush.msra.mxu0 %v187
    %1973 = vmatpush.msra.mxu0 %v183
    %1974 = vmatpush.msra.mxu0 %v179
    %1975 = vmatpush.msra.mxu0 %v175
    %1976 = vmatpush.msra.mxu0 %v171
    %1977 = vmatpush.msra.mxu0 %v167
    %1978 = vmatpush.msra.mxu0 %v163
    %1979 = vmatpush.msra.mxu0 %v159
    %1980 = vmatpush.msra.mxu0 %v155
    %1981 = vmatpush.msra.mxu0 %v151
    %1982 = vmatpush.msra.mxu0 %v147
    %1983 = vmatmul.f32.gmra.mxu0 %v1632
    %v1984 = vpop.f32.mrf.mxu0
    %v1985 = vadd.f32 %v1965, %v1984
    %1986 = vdwg.mxu0
    %1987 = vmatpush.msra.mxu0 %v271
    %1988 = vmatpush.msra.mxu0 %v267
    %1989 = vmatpush.msra.mxu0 %v263
    %1990 = vmatpush.msra.mxu0 %v259
    %1991 = vmatpush.msra.mxu0 %v255
    %1992 = vmatpush.msra.mxu0 %v251
    %1993 = vmatpush.msra.mxu0 %v247
    %1994 = vmatpush.msra.mxu0 %v243
    %1995 = vmatpush.msra.mxu0 %v239
    %1996 = vmatpush.msra.mxu0 %v235
    %1997 = vmatpush.msra.mxu0 %v231
    %1998 = vmatpush.msra.mxu0 %v227
    %1999 = vmatpush.msra.mxu0 %v223
    %2000 = vmatpush.msra.mxu0 %v219
    %2001 = vmatpush.msra.mxu0 %v215
    %2002 = vmatpush.msra.mxu0 %v211
    %2003 = vmatmul.f32.gmra.mxu0 %v1633
    %v2004 = vpop.f32.mrf.mxu0
    %v2005 = vadd.f32 %v1985, %v2004
    %2006 = vdwg.mxu0
    %2007 = vmatpush.msra.mxu0 %v335
    %2008 = vmatpush.msra.mxu0 %v331
    %2009 = vmatpush.msra.mxu0 %v327
    %2010 = vmatpush.msra.mxu0 %v323
    %2011 = vmatpush.msra.mxu0 %v319
    %2012 = vmatpush.msra.mxu0 %v315
    %2013 = vmatpush.msra.mxu0 %v311
    %2014 = vmatpush.msra.mxu0 %v307
    %2015 = vmatpush.msra.mxu0 %v303
    %2016 = vmatpush.msra.mxu0 %v299
    %2017 = vmatpush.msra.mxu0 %v295
    %2018 = vmatpush.msra.mxu0 %v291
    %2019 = vmatpush.msra.mxu0 %v287
    %2020 = vmatpush.msra.mxu0 %v283
    %2021 = vmatpush.msra.mxu0 %v279
    %2022 = vmatpush.msra.mxu0 %v275
    %2023 = vmatmul.f32.gmra.mxu0 %v1634
    %v2024 = vpop.f32.mrf.mxu0
    %v2025 = vadd.f32 %v2005, %v2024
    %2026 = vdwg.mxu0
    %v2027 = vmax.f32 %v1785, 0.0
    %v2028 = vmax.f32 %v1865, 0.0
    %v2029 = vmax.f32 %v1945, 0.0
    %v2030 = vmax.f32 %v2025, 0.0
    %2031 = vmatpush.msra.mxu0 %v351
    %2032 = vmatpush.msra.mxu0 %v350
    %2033 = vmatpush.msra.mxu0 %v349
    %2034 = vmatpush.msra.mxu0 %v348
    %2035 = vmatpush.msra.mxu0 %v347
    %2036 = vmatpush.msra.mxu0 %v346
    %2037 = vmatpush.msra.mxu0 %v345
    %2038 = vmatpush.msra.mxu0 %v344
    %2039 = vmatpush.msra.mxu0 %v343
    %2040 = vmatpush.msra.mxu0 %v342
    %2041 = vmatpush.msra.mxu0 %v341
    %2042 = vmatpush.msra.mxu0 %v340
    %2043 = vmatpush.msra.mxu0 %v339
    %2044 = vmatpush.msra.mxu0 %v338
    %2045 = vmatpush.msra.mxu0 %v337
    %2046 = vmatpush.msra.mxu0 %v336
    %2047 = vmatmul.f32.gmra.mxu0 %v2027
    %v2048 = vpop.f32.mrf.mxu0
    %v2049 = vadd.f32 0.0, %v2048
    %2050 = vdwg.mxu0
    %2051 = vmatpush.msra.mxu0 %v367
    %2052 = vmatpush.msra.mxu0 %v366
    %2053 = vmatpush.msra.mxu0 %v365
    %2054 = vmatpush.msra.mxu0 %v364
    %2055 = vmatpush.msra.mxu0 %v363
    %2056 = vmatpush.msra.mxu0 %v362
    %2057 = vmatpush.msra.mxu0 %v361
    %2058 = vmatpush.msra.mxu0 %v360
    %2059 = vmatpush.msra.mxu0 %v359
    %2060 = vmatpush.msra.mxu0 %v358
    %2061 = vmatpush.msra.mxu0 %v357
    %2062 = vmatpush.msra.mxu0 %v356
    %2063 = vmatpush.msra.mxu0 %v355
    %2064 = vmatpush.msra.mxu0 %v354
    %2065 = vmatpush.msra.mxu0 %v353
    %2066 = vmatpush.msra.mxu0 %v352
    %2067 = vmatmul.f32.gmra.mxu0 %v2028
    %v2068 = vpop.f32.mrf.mxu0
    %v2069 = vadd.f32 %v2049, %v2068
    %2070 = vdwg.mxu0
    %2071 = vmatpush.msra.mxu0 %v383
    %2072 = vmatpush.msra.mxu0 %v382
    %2073 = vmatpush.msra.mxu0 %v381
    %2074 = vmatpush.msra.mxu0 %v380
    %2075 = vmatpush.msra.mxu0 %v379
    %2076 = vmatpush.msra.mxu0 %v378
    %2077 = vmatpush.msra.mxu0 %v377
    %2078 = vmatpush.msra.mxu0 %v376
    %2079 = vmatpush.msra.mxu0 %v375
    %2080 = vmatpush.msra.mxu0 %v374
    %2081 = vmatpush.msra.mxu0 %v373
    %2082 = vmatpush.msra.mxu0 %v372
    %2083 = vmatpush.msra.mxu0 %v371
    %2084 = vmatpush.msra.mxu0 %v370
    %2085 = vmatpush.msra.mxu0 %v369
    %2086 = vmatpush.msra.mxu0 %v368
    %2087 = vmatmul.f32.gmra.mxu0 %v2029
    %v2088 = vpop.f32.mrf.mxu0
    %v2089 = vadd.f32 %v2069, %v2088
    %2090 = vdwg.mxu0
    %2091 = vmatpush.msra.mxu0 %v399
    %2092 = vmatpush.msra.mxu0 %v398
    %2093 = vmatpush.msra.mxu0 %v397
    %2094 = vmatpush.msra.mxu0 %v396
    %2095 = vmatpush.msra.mxu0 %v395
    %2096 = vmatpush.msra.mxu0 %v394
    %2097 = vmatpush.msra.mxu0 %v393
    %2098 = vmatpush.msra.mxu0 %v392
    %2099 = vmatpush.msra.mxu0 %v391
    %2100 = vmatpush.msra.mxu0 %v390
    %2101 = vmatpush.msra.mxu0 %v389
    %2102 = vmatpush.msra.mxu0 %v388
    %2103 = vmatpush.msra.mxu0 %v387
    %2104 = vmatpush.msra.mxu0 %v386
    %2105 = vmatpush.msra.mxu0 %v385
    %2106 = vmatpush.msra.mxu0 %v384
    %2107 = vmatmul.f32.gmra.mxu0 %v2030
    %v2108 = vpop.f32.mrf.mxu0
    %v2109 = vadd.f32 %v2089, %v2108
    %2110 = vdwg.mxu0
    %v2112 = vsel %vm717, %v2109, 0
    %2114 = vmatpush.msra.mxu0 0.0
    %2115 = vmatpush.msra.mxu0 0.0
    %2116 = vmatpush.msra.mxu0 0.0
    %2117 = vmatpush.msra.mxu0 0.0
    %2118 = vmatpush.msra.mxu0 0.0
    %2119 = vmatpush.msra.mxu0 0.0
    %2120 = vmatpush.msra.mxu0 0.0
    %2121 = vmatpush.msra.mxu0 0.0
    %2122 = vmatpush.msra.mxu0 0.0
    %2123 = vmatpush.msra.mxu0 0.0
    %2124 = vmatpush.msra.mxu0 0.0
    %2125 = vmatpush.msra.mxu0 0.0
    %2126 = vmatpush.msra.mxu0 0.0
    %2127 = vmatpush.msra.mxu0 0.0
    %2128 = vmatpush.msra.mxu0 0.0
    %2129 = vmatpush.msra.mxu0 %v400
    %2130 = vmatmul.f32.gmra.mxu0 %v2112
    %v2131 = vpop.f32.mrf.mxu0
    %v2132 = vadd.f32 0.0, %v2131
    %2133 = vdwg.mxu0
    %2134 = vmatpush.msra.mxu0 0.0
    %2135 = vmatpush.msra.mxu0 0.0
    %2136 = vmatpush.msra.mxu0 0.0
    %2137 = vmatpush.msra.mxu0 0.0
    %2138 = vmatpush.msra.mxu0 0.0
    %2139 = vmatpush.msra.mxu0 0.0
    %2140 = vmatpush.msra.mxu0 0.0
    %2141 = vmatpush.msra.mxu0 0.0
    %2142 = vmatpush.msra.mxu0 0.0
    %2143 = vmatpush.msra.mxu0 0.0
    %2144 = vmatpush.msra.mxu0 0.0
    %2145 = vmatpush.msra.mxu0 0.0
    %2146 = vmatpush.msra.mxu0 0.0
    %2147 = vmatpush.msra.mxu0 0.0
    %2148 = vmatpush.msra.mxu0 0.0
    %2149 = vmatpush.msra.mxu0 %v401
    %2150 = vmatmul.f32.gmra.mxu0 %v2112
    %v2151 = vpop.f32.mrf.mxu0
    %v2152 = vadd.f32 0.0, %v2151
    %2153 = vdwg.mxu0
    %2154 = vmatpush.msra.mxu0 0.0
    %2155 = vmatpush.msra.mxu0 0.0
    %2156 = vmatpush.msra.mxu0 0.0
    %2157 = vmatpush.msra.mxu0 0.0
    %2158 = vmatpush.msra.mxu0 0.0
    %2159 = vmatpush.msra.mxu0 0.0
    %2160 = vmatpush.msra.mxu0 0.0
    %2161 = vmatpush.msra.mxu0 0.0
    %2162 = vmatpush.msra.mxu0 0.0
    %2163 = vmatpush.msra.mxu0 0.0
    %2164 = vmatpush.msra.mxu0 0.0
    %2165 = vmatpush.msra.mxu0 0.0
    %2166 = vmatpush.msra.mxu0 0.0
    %2167 = vmatpush.msra.mxu0 0.0
    %2168 = vmatpush.msra.mxu0 0.0
    %2169 = vmatpush.msra.mxu0 %v402
    %2170 = vmatmul.f32.gmra.mxu0 %v2112
    %v2171 = vpop.f32.mrf.mxu0
    %v2172 = vadd.f32 0.0, %v2171
    %2173 = vdwg.mxu0
    %2174 = vmatpush.msra.mxu0 0.0
    %2175 = vmatpush.msra.mxu0 0.0
    %2176 = vmatpush.msra.mxu0 0.0
    %2177 = vmatpush.msra.mxu0 0.0
    %2178 = vmatpush.msra.mxu0 0.0
    %2179 = vmatpush.msra.mxu0 0.0
    %2180 = vmatpush.msra.mxu0 0.0
    %2181 = vmatpush.msra.mxu0 0.0
    %2182 = vmatpush.msra.mxu0 0.0
    %2183 = vmatpush.msra.mxu0 0.0
    %2184 = vmatpush.msra.mxu0 0.0
    %2185 = vmatpush.msra.mxu0 0.0
    %2186 = vmatpush.msra.mxu0 0.0
    %2187 = vmatpush.msra.mxu0 0.0
    %2188 = vmatpush.msra.mxu0 0.0
    %2189 = vmatpush.msra.mxu0 %v403
    %2190 = vmatmul.f32.gmra.mxu0 %v2112
    %v2191 = vpop.f32.mrf.mxu0
    %v2192 = vadd.f32 0.0, %v2191
    %2193 = vdwg.mxu0
    %v2194 = vsub.f32 %v2027, %v2132
    %v2195 = vsub.f32 %v2028, %v2152
    %v2196 = vsub.f32 %v2029, %v2172
    %v2197 = vsub.f32 %v2030, %v2192
    %v2198 = vmul.f32 %v2194, %v2194
    %v2199 = vmul.f32 %v2195, %v2195
    %v2200 = vmul.f32 %v2196, %v2196
    %v2201 = vmul.f32 %v2197, %v2197
    %2202 = vmatpush.msra.mxu0 %v351
    %2203 = vmatpush.msra.mxu0 %v350
    %2204 = vmatpush.msra.mxu0 %v349
    %2205 = vmatpush.msra.mxu0 %v348
    %2206 = vmatpush.msra.mxu0 %v347
    %2207 = vmatpush.msra.mxu0 %v346
    %2208 = vmatpush.msra.mxu0 %v345
    %2209 = vmatpush.msra.mxu0 %v344
    %2210 = vmatpush.msra.mxu0 %v343
    %2211 = vmatpush.msra.mxu0 %v342
    %2212 = vmatpush.msra.mxu0 %v341
    %2213 = vmatpush.msra.mxu0 %v340
    %2214 = vmatpush.msra.mxu0 %v339
    %2215 = vmatpush.msra.mxu0 %v338
    %2216 = vmatpush.msra.mxu0 %v337
    %2217 = vmatpush.msra.mxu0 %v336
    %2218 = vmatmul.f32.gmra.mxu0 %v2198
    %v2219 = vpop.f32.mrf.mxu0
    %v2220 = vadd.f32 1e-05, %v2219
    %2221 = vdwg.mxu0
    %2222 = vmatpush.msra.mxu0 %v367
    %2223 = vmatpush.msra.mxu0 %v366
    %2224 = vmatpush.msra.mxu0 %v365
    %2225 = vmatpush.msra.mxu0 %v364
    %2226 = vmatpush.msra.mxu0 %v363
    %2227 = vmatpush.msra.mxu0 %v362
    %2228 = vmatpush.msra.mxu0 %v361
    %2229 = vmatpush.msra.mxu0 %v360
    %2230 = vmatpush.msra.mxu0 %v359
    %2231 = vmatpush.msra.mxu0 %v358
    %2232 = vmatpush.msra.mxu0 %v357
    %2233 = vmatpush.msra.mxu0 %v356
    %2234 = vmatpush.msra.mxu0 %v355
    %2235 = vmatpush.msra.mxu0 %v354
    %2236 = vmatpush.msra.mxu0 %v353
    %2237 = vmatpush.msra.mxu0 %v352
    %2238 = vmatmul.f32.gmra.mxu0 %v2199
    %v2239 = vpop.f32.mrf.mxu0
    %v2240 = vadd.f32 %v2220, %v2239
    %2241 = vdwg.mxu0
    %2242 = vmatpush.msra.mxu0 %v383
    %2243 = vmatpush.msra.mxu0 %v382
    %2244 = vmatpush.msra.mxu0 %v381
    %2245 = vmatpush.msra.mxu0 %v380
    %2246 = vmatpush.msra.mxu0 %v379
    %2247 = vmatpush.msra.mxu0 %v378
    %2248 = vmatpush.msra.mxu0 %v377
    %2249 = vmatpush.msra.mxu0 %v376
    %2250 = vmatpush.msra.mxu0 %v375
    %2251 = vmatpush.msra.mxu0 %v374
    %2252 = vmatpush.msra.mxu0 %v373
    %2253 = vmatpush.msra.mxu0 %v372
    %2254 = vmatpush.msra.mxu0 %v371
    %2255 = vmatpush.msra.mxu0 %v370
    %2256 = vmatpush.msra.mxu0 %v369
    %2257 = vmatpush.msra.mxu0 %v368
    %2258 = vmatmul.f32.gmra.mxu0 %v2200
    %v2259 = vpop.f32.mrf.mxu0
    %v2260 = vadd.f32 %v2240, %v2259
    %2261 = vdwg.mxu0
    %2262 = vmatpush.msra.mxu0 %v399
    %2263 = vmatpush.msra.mxu0 %v398
    %2264 = vmatpush.msra.mxu0 %v397
    %2265 = vmatpush.msra.mxu0 %v396
    %2266 = vmatpush.msra.mxu0 %v395
    %2267 = vmatpush.msra.mxu0 %v394
    %2268 = vmatpush.msra.mxu0 %v393
    %2269 = vmatpush.msra.mxu0 %v392
    %2270 = vmatpush.msra.mxu0 %v391
    %2271 = vmatpush.msra.mxu0 %v390
    %2272 = vmatpush.msra.mxu0 %v389
    %2273 = vmatpush.msra.mxu0 %v388
    %2274 = vmatpush.msra.mxu0 %v387
    %2275 = vmatpush.msra.mxu0 %v386
    %2276 = vmatpush.msra.mxu0 %v385
    %2277 = vmatpush.msra.mxu0 %v384
    %2278 = vmatmul.f32.gmra.mxu0 %v2201
    %v2279 = vpop.f32.mrf.mxu0
    %v2280 = vadd.f32 %v2260, %v2279
    %2281 = vdwg.mxu0
    %v2282 = vrsqrt.pop %v2280
    %v2283 = vmul.f32 %v2282, %v2280
    %v2284 = vmul.f32 %v2283, %v2282
    %v2285 = vmul.f32 0.5, %v2284
    %v2286 = vsub.f32 1.5, %v2285
    %v2287 = vmul.f32 %v2282, %v2286
    %vm2288 = vweird.f32 %v2280
    %vm2289 = vweird.f32 %v2282
    %vm2290 = vmor %vm2288, %vm2289
    %v2291 = vsel %vm2290, %v2282, %v2287
    %v2293 = vsel %vm717, %v2291, 0
    %2295 = vmatpush.msra.mxu0 0.0
    %2296 = vmatpush.msra.mxu0 0.0
    %2297 = vmatpush.msra.mxu0 0.0
    %2298 = vmatpush.msra.mxu0 0.0
    %2299 = vmatpush.msra.mxu0 0.0
    %2300 = vmatpush.msra.mxu0 0.0
    %2301 = vmatpush.msra.mxu0 0.0
    %2302 = vmatpush.msra.mxu0 0.0
    %2303 = vmatpush.msra.mxu0 0.0
    %2304 = vmatpush.msra.mxu0 0.0
    %2305 = vmatpush.msra.mxu0 0.0
    %2306 = vmatpush.msra.mxu0 0.0
    %2307 = vmatpush.msra.mxu0 0.0
    %2308 = vmatpush.msra.mxu0 0.0
    %2309 = vmatpush.msra.mxu0 0.0
    %2310 = vmatpush.msra.mxu0 %v400
    %2311 = vmatmul.f32.gmra.mxu0 %v2293
    %v2312 = vpop.f32.mrf.mxu0
    %v2313 = vadd.f32 0.0, %v2312
    %2314 = vdwg.mxu0
    %2315 = vmatpush.msra.mxu0 0.0
    %2316 = vmatpush.msra.mxu0 0.0
    %2317 = vmatpush.msra.mxu0 0.0
    %2318 = vmatpush.msra.mxu0 0.0
    %2319 = vmatpush.msra.mxu0 0.0
    %2320 = vmatpush.msra.mxu0 0.0
    %2321 = vmatpush.msra.mxu0 0.0
    %2322 = vmatpush.msra.mxu0 0.0
    %2323 = vmatpush.msra.mxu0 0.0
    %2324 = vmatpush.msra.mxu0 0.0
    %2325 = vmatpush.msra.mxu0 0.0
    %2326 = vmatpush.msra.mxu0 0.0
    %2327 = vmatpush.msra.mxu0 0.0
    %2328 = vmatpush.msra.mxu0 0.0
    %2329 = vmatpush.msra.mxu0 0.0
    %2330 = vmatpush.msra.mxu0 %v401
    %2331 = vmatmul.f32.gmra.mxu0 %v2293
    %v2332 = vpop.f32.mrf.mxu0
    %v2333 = vadd.f32 0.0, %v2332
    %2334 = vdwg.mxu0
    %2335 = vmatpush.msra.mxu0 0.0
    %2336 = vmatpush.msra.mxu0 0.0
    %2337 = vmatpush.msra.mxu0 0.0
    %2338 = vmatpush.msra.mxu0 0.0
    %2339 = vmatpush.msra.mxu0 0.0
    %2340 = vmatpush.msra.mxu0 0.0
    %2341 = vmatpush.msra.mxu0 0.0
    %2342 = vmatpush.msra.mxu0 0.0
    %2343 = vmatpush.msra.mxu0 0.0
    %2344 = vmatpush.msra.mxu0 0.0
    %2345 = vmatpush.msra.mxu0 0.0
    %2346 = vmatpush.msra.mxu0 0.0
    %2347 = vmatpush.msra.mxu0 0.0
    %2348 = vmatpush.msra.mxu0 0.0
    %2349 = vmatpush.msra.mxu0 0.0
    %2350 = vmatpush.msra.mxu0 %v402
    %2351 = vmatmul.f32.gmra.mxu0 %v2293
    %v2352 = vpop.f32.mrf.mxu0
    %v2353 = vadd.f32 0.0, %v2352
    %2354 = vdwg.mxu0
    %2355 = vmatpush.msra.mxu0 0.0
    %2356 = vmatpush.msra.mxu0 0.0
    %2357 = vmatpush.msra.mxu0 0.0
    %2358 = vmatpush.msra.mxu0 0.0
    %2359 = vmatpush.msra.mxu0 0.0
    %2360 = vmatpush.msra.mxu0 0.0
    %2361 = vmatpush.msra.mxu0 0.0
    %2362 = vmatpush.msra.mxu0 0.0
    %2363 = vmatpush.msra.mxu0 0.0
    %2364 = vmatpush.msra.mxu0 0.0
    %2365 = vmatpush.msra.mxu0 0.0
    %2366 = vmatpush.msra.mxu0 0.0
    %2367 = vmatpush.msra.mxu0 0.0
    %2368 = vmatpush.msra.mxu0 0.0
    %2369 = vmatpush.msra.mxu0 0.0
    %2370 = vmatpush.msra.mxu0 %v403
    %2371 = vmatmul.f32.gmra.mxu0 %v2293
    %v2372 = vpop.f32.mrf.mxu0
    %v2373 = vadd.f32 0.0, %v2372
    %2374 = vdwg.mxu0
    %v2375 = vmul.f32 %v2194, %v2313
    %v2376 = vmul.f32 %v2195, %v2333
    %v2377 = vmul.f32 %v2196, %v2353
    %v2378 = vmul.f32 %v2197, %v2373
    %v2379 = vperm.slane %v76, 5
    %v2380 = vperm.slane %v77, 5
    %v2381 = vperm.slane %v78, 5
    %v2382 = vperm.slane %v79, 5
    %v2383 = vmul.f32 %v2375, %v2379
    %v2384 = vmul.f32 %v2376, %v2380
    %v2385 = vmul.f32 %v2377, %v2381
    %v2386 = vmul.f32 %v2378, %v2382
    %v2387 = vperm.slane %v76, 6
    %v2388 = vperm.slane %v77, 6
    %v2389 = vperm.slane %v78, 6
    %v2390 = vperm.slane %v79, 6
    %v2391 = vadd.f32 %v2383, %v2387
    %v2392 = vadd.f32 %v2384, %v2388
    %v2393 = vadd.f32 %v2385, %v2389
    %v2394 = vadd.f32 %v2386, %v2390
    %v2396 = vperm.slane %v468, 0
    %2398 = vmatpush.msra.mxu0 %v419
    %2399 = vmatpush.msra.mxu0 %v418
    %2400 = vmatpush.msra.mxu0 %v417
    %2401 = vmatpush.msra.mxu0 %v416
    %2402 = vmatpush.msra.mxu0 %v415
    %2403 = vmatpush.msra.mxu0 %v414
    %2404 = vmatpush.msra.mxu0 %v413
    %2405 = vmatpush.msra.mxu0 %v412
    %2406 = vmatpush.msra.mxu0 %v411
    %2407 = vmatpush.msra.mxu0 %v410
    %2408 = vmatpush.msra.mxu0 %v409
    %2409 = vmatpush.msra.mxu0 %v408
    %2410 = vmatpush.msra.mxu0 %v407
    %2411 = vmatpush.msra.mxu0 %v406
    %2412 = vmatpush.msra.mxu0 %v405
    %2413 = vmatpush.msra.mxu0 %v404
    %2414 = vmatmul.f32.gmra.mxu0 %v2391
    %v2415 = vpop.f32.mrf.mxu0
    %v2416 = vadd.f32 %v2396, %v2415
    %2417 = vdwg.mxu0
    %2418 = vmatpush.msra.mxu0 %v435
    %2419 = vmatpush.msra.mxu0 %v434
    %2420 = vmatpush.msra.mxu0 %v433
    %2421 = vmatpush.msra.mxu0 %v432
    %2422 = vmatpush.msra.mxu0 %v431
    %2423 = vmatpush.msra.mxu0 %v430
    %2424 = vmatpush.msra.mxu0 %v429
    %2425 = vmatpush.msra.mxu0 %v428
    %2426 = vmatpush.msra.mxu0 %v427
    %2427 = vmatpush.msra.mxu0 %v426
    %2428 = vmatpush.msra.mxu0 %v425
    %2429 = vmatpush.msra.mxu0 %v424
    %2430 = vmatpush.msra.mxu0 %v423
    %2431 = vmatpush.msra.mxu0 %v422
    %2432 = vmatpush.msra.mxu0 %v421
    %2433 = vmatpush.msra.mxu0 %v420
    %2434 = vmatmul.f32.gmra.mxu0 %v2392
    %v2435 = vpop.f32.mrf.mxu0
    %v2436 = vadd.f32 %v2416, %v2435
    %2437 = vdwg.mxu0
    %2438 = vmatpush.msra.mxu0 %v451
    %2439 = vmatpush.msra.mxu0 %v450
    %2440 = vmatpush.msra.mxu0 %v449
    %2441 = vmatpush.msra.mxu0 %v448
    %2442 = vmatpush.msra.mxu0 %v447
    %2443 = vmatpush.msra.mxu0 %v446
    %2444 = vmatpush.msra.mxu0 %v445
    %2445 = vmatpush.msra.mxu0 %v444
    %2446 = vmatpush.msra.mxu0 %v443
    %2447 = vmatpush.msra.mxu0 %v442
    %2448 = vmatpush.msra.mxu0 %v441
    %2449 = vmatpush.msra.mxu0 %v440
    %2450 = vmatpush.msra.mxu0 %v439
    %2451 = vmatpush.msra.mxu0 %v438
    %2452 = vmatpush.msra.mxu0 %v437
    %2453 = vmatpush.msra.mxu0 %v436
    %2454 = vmatmul.f32.gmra.mxu0 %v2393
    %v2455 = vpop.f32.mrf.mxu0
    %v2456 = vadd.f32 %v2436, %v2455
    %2457 = vdwg.mxu0
    %2458 = vmatpush.msra.mxu0 %v467
    %2459 = vmatpush.msra.mxu0 %v466
    %2460 = vmatpush.msra.mxu0 %v465
    %2461 = vmatpush.msra.mxu0 %v464
    %2462 = vmatpush.msra.mxu0 %v463
    %2463 = vmatpush.msra.mxu0 %v462
    %2464 = vmatpush.msra.mxu0 %v461
    %2465 = vmatpush.msra.mxu0 %v460
    %2466 = vmatpush.msra.mxu0 %v459
    %2467 = vmatpush.msra.mxu0 %v458
    %2468 = vmatpush.msra.mxu0 %v457
    %2469 = vmatpush.msra.mxu0 %v456
    %2470 = vmatpush.msra.mxu0 %v455
    %2471 = vmatpush.msra.mxu0 %v454
    %2472 = vmatpush.msra.mxu0 %v453
    %2473 = vmatpush.msra.mxu0 %v452
    %2474 = vmatmul.f32.gmra.mxu0 %v2394
    %v2475 = vpop.f32.mrf.mxu0
    %v2476 = vadd.f32 %v2456, %v2475
    %2477 = vdwg.mxu0
    %2478 = vmatpush.msra.mxu0 %v140
    %2479 = vmatpush.msra.mxu0 %v136
    %2480 = vmatpush.msra.mxu0 %v132
    %2481 = vmatpush.msra.mxu0 %v128
    %2482 = vmatpush.msra.mxu0 %v124
    %2483 = vmatpush.msra.mxu0 %v120
    %2484 = vmatpush.msra.mxu0 %v116
    %2485 = vmatpush.msra.mxu0 %v112
    %2486 = vmatpush.msra.mxu0 %v108
    %2487 = vmatpush.msra.mxu0 %v104
    %2488 = vmatpush.msra.mxu0 %v100
    %2489 = vmatpush.msra.mxu0 %v96
    %2490 = vmatpush.msra.mxu0 %v92
    %2491 = vmatpush.msra.mxu0 %v88
    %2492 = vmatpush.msra.mxu0 %v84
    %2493 = vmatpush.msra.mxu0 %v80
    %2494 = vmatmul.f32.gmra.mxu0 %v1699
    %v2495 = vpop.f32.mrf.mxu0
    %v2496 = vadd.f32 %v1703, %v2495
    %2497 = vdwg.mxu0
    %2498 = vmatpush.msra.mxu0 %v204
    %2499 = vmatpush.msra.mxu0 %v200
    %2500 = vmatpush.msra.mxu0 %v196
    %2501 = vmatpush.msra.mxu0 %v192
    %2502 = vmatpush.msra.mxu0 %v188
    %2503 = vmatpush.msra.mxu0 %v184
    %2504 = vmatpush.msra.mxu0 %v180
    %2505 = vmatpush.msra.mxu0 %v176
    %2506 = vmatpush.msra.mxu0 %v172
    %2507 = vmatpush.msra.mxu0 %v168
    %2508 = vmatpush.msra.mxu0 %v164
    %2509 = vmatpush.msra.mxu0 %v160
    %2510 = vmatpush.msra.mxu0 %v156
    %2511 = vmatpush.msra.mxu0 %v152
    %2512 = vmatpush.msra.mxu0 %v148
    %2513 = vmatpush.msra.mxu0 %v144
    %2514 = vmatmul.f32.gmra.mxu0 %v1700
    %v2515 = vpop.f32.mrf.mxu0
    %v2516 = vadd.f32 %v2496, %v2515
    %2517 = vdwg.mxu0
    %2518 = vmatpush.msra.mxu0 %v268
    %2519 = vmatpush.msra.mxu0 %v264
    %2520 = vmatpush.msra.mxu0 %v260
    %2521 = vmatpush.msra.mxu0 %v256
    %2522 = vmatpush.msra.mxu0 %v252
    %2523 = vmatpush.msra.mxu0 %v248
    %2524 = vmatpush.msra.mxu0 %v244
    %2525 = vmatpush.msra.mxu0 %v240
    %2526 = vmatpush.msra.mxu0 %v236
    %2527 = vmatpush.msra.mxu0 %v232
    %2528 = vmatpush.msra.mxu0 %v228
    %2529 = vmatpush.msra.mxu0 %v224
    %2530 = vmatpush.msra.mxu0 %v220
    %2531 = vmatpush.msra.mxu0 %v216
    %2532 = vmatpush.msra.mxu0 %v212
    %2533 = vmatpush.msra.mxu0 %v208
    %2534 = vmatmul.f32.gmra.mxu0 %v1701
    %v2535 = vpop.f32.mrf.mxu0
    %v2536 = vadd.f32 %v2516, %v2535
    %2537 = vdwg.mxu0
    %2538 = vmatpush.msra.mxu0 %v332
    %2539 = vmatpush.msra.mxu0 %v328
    %2540 = vmatpush.msra.mxu0 %v324
    %2541 = vmatpush.msra.mxu0 %v320
    %2542 = vmatpush.msra.mxu0 %v316
    %2543 = vmatpush.msra.mxu0 %v312
    %2544 = vmatpush.msra.mxu0 %v308
    %2545 = vmatpush.msra.mxu0 %v304
    %2546 = vmatpush.msra.mxu0 %v300
    %2547 = vmatpush.msra.mxu0 %v296
    %2548 = vmatpush.msra.mxu0 %v292
    %2549 = vmatpush.msra.mxu0 %v288
    %2550 = vmatpush.msra.mxu0 %v284
    %2551 = vmatpush.msra.mxu0 %v280
    %2552 = vmatpush.msra.mxu0 %v276
    %2553 = vmatpush.msra.mxu0 %v272
    %2554 = vmatmul.f32.gmra.mxu0 %v1702
    %v2555 = vpop.f32.mrf.mxu0
    %v2556 = vadd.f32 %v2536, %v2555
    %2557 = vdwg.mxu0
    %2558 = vmatpush.msra.mxu0 %v141
    %2559 = vmatpush.msra.mxu0 %v137
    %2560 = vmatpush.msra.mxu0 %v133
    %2561 = vmatpush.msra.mxu0 %v129
    %2562 = vmatpush.msra.mxu0 %v125
    %2563 = vmatpush.msra.mxu0 %v121
    %2564 = vmatpush.msra.mxu0 %v117
    %2565 = vmatpush.msra.mxu0 %v113
    %2566 = vmatpush.msra.mxu0 %v109
    %2567 = vmatpush.msra.mxu0 %v105
    %2568 = vmatpush.msra.mxu0 %v101
    %2569 = vmatpush.msra.mxu0 %v97
    %2570 = vmatpush.msra.mxu0 %v93
    %2571 = vmatpush.msra.mxu0 %v89
    %2572 = vmatpush.msra.mxu0 %v85
    %2573 = vmatpush.msra.mxu0 %v81
    %2574 = vmatmul.f32.gmra.mxu0 %v1699
    %v2575 = vpop.f32.mrf.mxu0
    %v2576 = vadd.f32 %v1704, %v2575
    %2577 = vdwg.mxu0
    %2578 = vmatpush.msra.mxu0 %v205
    %2579 = vmatpush.msra.mxu0 %v201
    %2580 = vmatpush.msra.mxu0 %v197
    %2581 = vmatpush.msra.mxu0 %v193
    %2582 = vmatpush.msra.mxu0 %v189
    %2583 = vmatpush.msra.mxu0 %v185
    %2584 = vmatpush.msra.mxu0 %v181
    %2585 = vmatpush.msra.mxu0 %v177
    %2586 = vmatpush.msra.mxu0 %v173
    %2587 = vmatpush.msra.mxu0 %v169
    %2588 = vmatpush.msra.mxu0 %v165
    %2589 = vmatpush.msra.mxu0 %v161
    %2590 = vmatpush.msra.mxu0 %v157
    %2591 = vmatpush.msra.mxu0 %v153
    %2592 = vmatpush.msra.mxu0 %v149
    %2593 = vmatpush.msra.mxu0 %v145
    %2594 = vmatmul.f32.gmra.mxu0 %v1700
    %v2595 = vpop.f32.mrf.mxu0
    %v2596 = vadd.f32 %v2576, %v2595
    %2597 = vdwg.mxu0
    %2598 = vmatpush.msra.mxu0 %v269
    %2599 = vmatpush.msra.mxu0 %v265
    %2600 = vmatpush.msra.mxu0 %v261
    %2601 = vmatpush.msra.mxu0 %v257
    %2602 = vmatpush.msra.mxu0 %v253
    %2603 = vmatpush.msra.mxu0 %v249
    %2604 = vmatpush.msra.mxu0 %v245
    %2605 = vmatpush.msra.mxu0 %v241
    %2606 = vmatpush.msra.mxu0 %v237
    %2607 = vmatpush.msra.mxu0 %v233
    %2608 = vmatpush.msra.mxu0 %v229
    %2609 = vmatpush.msra.mxu0 %v225
    %2610 = vmatpush.msra.mxu0 %v221
    %2611 = vmatpush.msra.mxu0 %v217
    %2612 = vmatpush.msra.mxu0 %v213
    %2613 = vmatpush.msra.mxu0 %v209
    %2614 = vmatmul.f32.gmra.mxu0 %v1701
    %v2615 = vpop.f32.mrf.mxu0
    %v2616 = vadd.f32 %v2596, %v2615
    %2617 = vdwg.mxu0
    %2618 = vmatpush.msra.mxu0 %v333
    %2619 = vmatpush.msra.mxu0 %v329
    %2620 = vmatpush.msra.mxu0 %v325
    %2621 = vmatpush.msra.mxu0 %v321
    %2622 = vmatpush.msra.mxu0 %v317
    %2623 = vmatpush.msra.mxu0 %v313
    %2624 = vmatpush.msra.mxu0 %v309
    %2625 = vmatpush.msra.mxu0 %v305
    %2626 = vmatpush.msra.mxu0 %v301
    %2627 = vmatpush.msra.mxu0 %v297
    %2628 = vmatpush.msra.mxu0 %v293
    %2629 = vmatpush.msra.mxu0 %v289
    %2630 = vmatpush.msra.mxu0 %v285
    %2631 = vmatpush.msra.mxu0 %v281
    %2632 = vmatpush.msra.mxu0 %v277
    %2633 = vmatpush.msra.mxu0 %v273
    %2634 = vmatmul.f32.gmra.mxu0 %v1702
    %v2635 = vpop.f32.mrf.mxu0
    %v2636 = vadd.f32 %v2616, %v2635
    %2637 = vdwg.mxu0
    %2638 = vmatpush.msra.mxu0 %v142
    %2639 = vmatpush.msra.mxu0 %v138
    %2640 = vmatpush.msra.mxu0 %v134
    %2641 = vmatpush.msra.mxu0 %v130
    %2642 = vmatpush.msra.mxu0 %v126
    %2643 = vmatpush.msra.mxu0 %v122
    %2644 = vmatpush.msra.mxu0 %v118
    %2645 = vmatpush.msra.mxu0 %v114
    %2646 = vmatpush.msra.mxu0 %v110
    %2647 = vmatpush.msra.mxu0 %v106
    %2648 = vmatpush.msra.mxu0 %v102
    %2649 = vmatpush.msra.mxu0 %v98
    %2650 = vmatpush.msra.mxu0 %v94
    %2651 = vmatpush.msra.mxu0 %v90
    %2652 = vmatpush.msra.mxu0 %v86
    %2653 = vmatpush.msra.mxu0 %v82
    %2654 = vmatmul.f32.gmra.mxu0 %v1699
    %v2655 = vpop.f32.mrf.mxu0
    %v2656 = vadd.f32 %v1705, %v2655
    %2657 = vdwg.mxu0
    %2658 = vmatpush.msra.mxu0 %v206
    %2659 = vmatpush.msra.mxu0 %v202
    %2660 = vmatpush.msra.mxu0 %v198
    %2661 = vmatpush.msra.mxu0 %v194
    %2662 = vmatpush.msra.mxu0 %v190
    %2663 = vmatpush.msra.mxu0 %v186
    %2664 = vmatpush.msra.mxu0 %v182
    %2665 = vmatpush.msra.mxu0 %v178
    %2666 = vmatpush.msra.mxu0 %v174
    %2667 = vmatpush.msra.mxu0 %v170
    %2668 = vmatpush.msra.mxu0 %v166
    %2669 = vmatpush.msra.mxu0 %v162
    %2670 = vmatpush.msra.mxu0 %v158
    %2671 = vmatpush.msra.mxu0 %v154
    %2672 = vmatpush.msra.mxu0 %v150
    %2673 = vmatpush.msra.mxu0 %v146
    %2674 = vmatmul.f32.gmra.mxu0 %v1700
    %v2675 = vpop.f32.mrf.mxu0
    %v2676 = vadd.f32 %v2656, %v2675
    %2677 = vdwg.mxu0
    %2678 = vmatpush.msra.mxu0 %v270
    %2679 = vmatpush.msra.mxu0 %v266
    %2680 = vmatpush.msra.mxu0 %v262
    %2681 = vmatpush.msra.mxu0 %v258
    %2682 = vmatpush.msra.mxu0 %v254
    %2683 = vmatpush.msra.mxu0 %v250
    %2684 = vmatpush.msra.mxu0 %v246
    %2685 = vmatpush.msra.mxu0 %v242
    %2686 = vmatpush.msra.mxu0 %v238
    %2687 = vmatpush.msra.mxu0 %v234
    %2688 = vmatpush.msra.mxu0 %v230
    %2689 = vmatpush.msra.mxu0 %v226
    %2690 = vmatpush.msra.mxu0 %v222
    %2691 = vmatpush.msra.mxu0 %v218
    %2692 = vmatpush.msra.mxu0 %v214
    %2693 = vmatpush.msra.mxu0 %v210
    %2694 = vmatmul.f32.gmra.mxu0 %v1701
    %v2695 = vpop.f32.mrf.mxu0
    %v2696 = vadd.f32 %v2676, %v2695
    %2697 = vdwg.mxu0
    %2698 = vmatpush.msra.mxu0 %v334
    %2699 = vmatpush.msra.mxu0 %v330
    %2700 = vmatpush.msra.mxu0 %v326
    %2701 = vmatpush.msra.mxu0 %v322
    %2702 = vmatpush.msra.mxu0 %v318
    %2703 = vmatpush.msra.mxu0 %v314
    %2704 = vmatpush.msra.mxu0 %v310
    %2705 = vmatpush.msra.mxu0 %v306
    %2706 = vmatpush.msra.mxu0 %v302
    %2707 = vmatpush.msra.mxu0 %v298
    %2708 = vmatpush.msra.mxu0 %v294
    %2709 = vmatpush.msra.mxu0 %v290
    %2710 = vmatpush.msra.mxu0 %v286
    %2711 = vmatpush.msra.mxu0 %v282
    %2712 = vmatpush.msra.mxu0 %v278
    %2713 = vmatpush.msra.mxu0 %v274
    %2714 = vmatmul.f32.gmra.mxu0 %v1702
    %v2715 = vpop.f32.mrf.mxu0
    %v2716 = vadd.f32 %v2696, %v2715
    %2717 = vdwg.mxu0
    %2718 = vmatpush.msra.mxu0 %v143
    %2719 = vmatpush.msra.mxu0 %v139
    %2720 = vmatpush.msra.mxu0 %v135
    %2721 = vmatpush.msra.mxu0 %v131
    %2722 = vmatpush.msra.mxu0 %v127
    %2723 = vmatpush.msra.mxu0 %v123
    %2724 = vmatpush.msra.mxu0 %v119
    %2725 = vmatpush.msra.mxu0 %v115
    %2726 = vmatpush.msra.mxu0 %v111
    %2727 = vmatpush.msra.mxu0 %v107
    %2728 = vmatpush.msra.mxu0 %v103
    %2729 = vmatpush.msra.mxu0 %v99
    %2730 = vmatpush.msra.mxu0 %v95
    %2731 = vmatpush.msra.mxu0 %v91
    %2732 = vmatpush.msra.mxu0 %v87
    %2733 = vmatpush.msra.mxu0 %v83
    %2734 = vmatmul.f32.gmra.mxu0 %v1699
    %v2735 = vpop.f32.mrf.mxu0
    %v2736 = vadd.f32 %v1706, %v2735
    %2737 = vdwg.mxu0
    %2738 = vmatpush.msra.mxu0 %v207
    %2739 = vmatpush.msra.mxu0 %v203
    %2740 = vmatpush.msra.mxu0 %v199
    %2741 = vmatpush.msra.mxu0 %v195
    %2742 = vmatpush.msra.mxu0 %v191
    %2743 = vmatpush.msra.mxu0 %v187
    %2744 = vmatpush.msra.mxu0 %v183
    %2745 = vmatpush.msra.mxu0 %v179
    %2746 = vmatpush.msra.mxu0 %v175
    %2747 = vmatpush.msra.mxu0 %v171
    %2748 = vmatpush.msra.mxu0 %v167
    %2749 = vmatpush.msra.mxu0 %v163
    %2750 = vmatpush.msra.mxu0 %v159
    %2751 = vmatpush.msra.mxu0 %v155
    %2752 = vmatpush.msra.mxu0 %v151
    %2753 = vmatpush.msra.mxu0 %v147
    %2754 = vmatmul.f32.gmra.mxu0 %v1700
    %v2755 = vpop.f32.mrf.mxu0
    %v2756 = vadd.f32 %v2736, %v2755
    %2757 = vdwg.mxu0
    %2758 = vmatpush.msra.mxu0 %v271
    %2759 = vmatpush.msra.mxu0 %v267
    %2760 = vmatpush.msra.mxu0 %v263
    %2761 = vmatpush.msra.mxu0 %v259
    %2762 = vmatpush.msra.mxu0 %v255
    %2763 = vmatpush.msra.mxu0 %v251
    %2764 = vmatpush.msra.mxu0 %v247
    %2765 = vmatpush.msra.mxu0 %v243
    %2766 = vmatpush.msra.mxu0 %v239
    %2767 = vmatpush.msra.mxu0 %v235
    %2768 = vmatpush.msra.mxu0 %v231
    %2769 = vmatpush.msra.mxu0 %v227
    %2770 = vmatpush.msra.mxu0 %v223
    %2771 = vmatpush.msra.mxu0 %v219
    %2772 = vmatpush.msra.mxu0 %v215
    %2773 = vmatpush.msra.mxu0 %v211
    %2774 = vmatmul.f32.gmra.mxu0 %v1701
    %v2775 = vpop.f32.mrf.mxu0
    %v2776 = vadd.f32 %v2756, %v2775
    %2777 = vdwg.mxu0
    %2778 = vmatpush.msra.mxu0 %v335
    %2779 = vmatpush.msra.mxu0 %v331
    %2780 = vmatpush.msra.mxu0 %v327
    %2781 = vmatpush.msra.mxu0 %v323
    %2782 = vmatpush.msra.mxu0 %v319
    %2783 = vmatpush.msra.mxu0 %v315
    %2784 = vmatpush.msra.mxu0 %v311
    %2785 = vmatpush.msra.mxu0 %v307
    %2786 = vmatpush.msra.mxu0 %v303
    %2787 = vmatpush.msra.mxu0 %v299
    %2788 = vmatpush.msra.mxu0 %v295
    %2789 = vmatpush.msra.mxu0 %v291
    %2790 = vmatpush.msra.mxu0 %v287
    %2791 = vmatpush.msra.mxu0 %v283
    %2792 = vmatpush.msra.mxu0 %v279
    %2793 = vmatpush.msra.mxu0 %v275
    %2794 = vmatmul.f32.gmra.mxu0 %v1702
    %v2795 = vpop.f32.mrf.mxu0
    %v2796 = vadd.f32 %v2776, %v2795
    %2797 = vdwg.mxu0
    %v2798 = vmax.f32 %v2556, 0.0
    %v2799 = vmax.f32 %v2636, 0.0
    %v2800 = vmax.f32 %v2716, 0.0
    %v2801 = vmax.f32 %v2796, 0.0
    %2802 = vmatpush.msra.mxu0 %v351
    %2803 = vmatpush.msra.mxu0 %v350
    %2804 = vmatpush.msra.mxu0 %v349
    %2805 = vmatpush.msra.mxu0 %v348
    %2806 = vmatpush.msra.mxu0 %v347
    %2807 = vmatpush.msra.mxu0 %v346
    %2808 = vmatpush.msra.mxu0 %v345
    %2809 = vmatpush.msra.mxu0 %v344
    %2810 = vmatpush.msra.mxu0 %v343
    %2811 = vmatpush.msra.mxu0 %v342
    %2812 = vmatpush.msra.mxu0 %v341
    %2813 = vmatpush.msra.mxu0 %v340
    %2814 = vmatpush.msra.mxu0 %v339
    %2815 = vmatpush.msra.mxu0 %v338
    %2816 = vmatpush.msra.mxu0 %v337
    %2817 = vmatpush.msra.mxu0 %v336
    %2818 = vmatmul.f32.gmra.mxu0 %v2798
    %v2819 = vpop.f32.mrf.mxu0
    %v2820 = vadd.f32 0.0, %v2819
    %2821 = vdwg.mxu0
    %2822 = vmatpush.msra.mxu0 %v367
    %2823 = vmatpush.msra.mxu0 %v366
    %2824 = vmatpush.msra.mxu0 %v365
    %2825 = vmatpush.msra.mxu0 %v364
    %2826 = vmatpush.msra.mxu0 %v363
    %2827 = vmatpush.msra.mxu0 %v362
    %2828 = vmatpush.msra.mxu0 %v361
    %2829 = vmatpush.msra.mxu0 %v360
    %2830 = vmatpush.msra.mxu0 %v359
    %2831 = vmatpush.msra.mxu0 %v358
    %2832 = vmatpush.msra.mxu0 %v357
    %2833 = vmatpush.msra.mxu0 %v356
    %2834 = vmatpush.msra.mxu0 %v355
    %2835 = vmatpush.msra.mxu0 %v354
    %2836 = vmatpush.msra.mxu0 %v353
    %2837 = vmatpush.msra.mxu0 %v352
    %2838 = vmatmul.f32.gmra.mxu0 %v2799
    %v2839 = vpop.f32.mrf.mxu0
    %v2840 = vadd.f32 %v2820, %v2839
    %2841 = vdwg.mxu0
    %2842 = vmatpush.msra.mxu0 %v383
    %2843 = vmatpush.msra.mxu0 %v382
    %2844 = vmatpush.msra.mxu0 %v381
    %2845 = vmatpush.msra.mxu0 %v380
    %2846 = vmatpush.msra.mxu0 %v379
    %2847 = vmatpush.msra.mxu0 %v378
    %2848 = vmatpush.msra.mxu0 %v377
    %2849 = vmatpush.msra.mxu0 %v376
    %2850 = vmatpush.msra.mxu0 %v375
    %2851 = vmatpush.msra.mxu0 %v374
    %2852 = vmatpush.msra.mxu0 %v373
    %2853 = vmatpush.msra.mxu0 %v372
    %2854 = vmatpush.msra.mxu0 %v371
    %2855 = vmatpush.msra.mxu0 %v370
    %2856 = vmatpush.msra.mxu0 %v369
    %2857 = vmatpush.msra.mxu0 %v368
    %2858 = vmatmul.f32.gmra.mxu0 %v2800
    %v2859 = vpop.f32.mrf.mxu0
    %v2860 = vadd.f32 %v2840, %v2859
    %2861 = vdwg.mxu0
    %2862 = vmatpush.msra.mxu0 %v399
    %2863 = vmatpush.msra.mxu0 %v398
    %2864 = vmatpush.msra.mxu0 %v397
    %2865 = vmatpush.msra.mxu0 %v396
    %2866 = vmatpush.msra.mxu0 %v395
    %2867 = vmatpush.msra.mxu0 %v394
    %2868 = vmatpush.msra.mxu0 %v393
    %2869 = vmatpush.msra.mxu0 %v392
    %2870 = vmatpush.msra.mxu0 %v391
    %2871 = vmatpush.msra.mxu0 %v390
    %2872 = vmatpush.msra.mxu0 %v389
    %2873 = vmatpush.msra.mxu0 %v388
    %2874 = vmatpush.msra.mxu0 %v387
    %2875 = vmatpush.msra.mxu0 %v386
    %2876 = vmatpush.msra.mxu0 %v385
    %2877 = vmatpush.msra.mxu0 %v384
    %2878 = vmatmul.f32.gmra.mxu0 %v2801
    %v2879 = vpop.f32.mrf.mxu0
    %v2880 = vadd.f32 %v2860, %v2879
    %2881 = vdwg.mxu0
    %v2883 = vsel %vm717, %v2880, 0
    %2885 = vmatpush.msra.mxu0 0.0
    %2886 = vmatpush.msra.mxu0 0.0
    %2887 = vmatpush.msra.mxu0 0.0
    %2888 = vmatpush.msra.mxu0 0.0
    %2889 = vmatpush.msra.mxu0 0.0
    %2890 = vmatpush.msra.mxu0 0.0
    %2891 = vmatpush.msra.mxu0 0.0
    %2892 = vmatpush.msra.mxu0 0.0
    %2893 = vmatpush.msra.mxu0 0.0
    %2894 = vmatpush.msra.mxu0 0.0
    %2895 = vmatpush.msra.mxu0 0.0
    %2896 = vmatpush.msra.mxu0 0.0
    %2897 = vmatpush.msra.mxu0 0.0
    %2898 = vmatpush.msra.mxu0 0.0
    %2899 = vmatpush.msra.mxu0 0.0
    %2900 = vmatpush.msra.mxu0 %v400
    %2901 = vmatmul.f32.gmra.mxu0 %v2883
    %v2902 = vpop.f32.mrf.mxu0
    %v2903 = vadd.f32 0.0, %v2902
    %2904 = vdwg.mxu0
    %2905 = vmatpush.msra.mxu0 0.0
    %2906 = vmatpush.msra.mxu0 0.0
    %2907 = vmatpush.msra.mxu0 0.0
    %2908 = vmatpush.msra.mxu0 0.0
    %2909 = vmatpush.msra.mxu0 0.0
    %2910 = vmatpush.msra.mxu0 0.0
    %2911 = vmatpush.msra.mxu0 0.0
    %2912 = vmatpush.msra.mxu0 0.0
    %2913 = vmatpush.msra.mxu0 0.0
    %2914 = vmatpush.msra.mxu0 0.0
    %2915 = vmatpush.msra.mxu0 0.0
    %2916 = vmatpush.msra.mxu0 0.0
    %2917 = vmatpush.msra.mxu0 0.0
    %2918 = vmatpush.msra.mxu0 0.0
    %2919 = vmatpush.msra.mxu0 0.0
    %2920 = vmatpush.msra.mxu0 %v401
    %2921 = vmatmul.f32.gmra.mxu0 %v2883
    %v2922 = vpop.f32.mrf.mxu0
    %v2923 = vadd.f32 0.0, %v2922
    %2924 = vdwg.mxu0
    %2925 = vmatpush.msra.mxu0 0.0
    %2926 = vmatpush.msra.mxu0 0.0
    %2927 = vmatpush.msra.mxu0 0.0
    %2928 = vmatpush.msra.mxu0 0.0
    %2929 = vmatpush.msra.mxu0 0.0
    %2930 = vmatpush.msra.mxu0 0.0
    %2931 = vmatpush.msra.mxu0 0.0
    %2932 = vmatpush.msra.mxu0 0.0
    %2933 = vmatpush.msra.mxu0 0.0
    %2934 = vmatpush.msra.mxu0 0.0
    %2935 = vmatpush.msra.mxu0 0.0
    %2936 = vmatpush.msra.mxu0 0.0
    %2937 = vmatpush.msra.mxu0 0.0
    %2938 = vmatpush.msra.mxu0 0.0
    %2939 = vmatpush.msra.mxu0 0.0
    %2940 = vmatpush.msra.mxu0 %v402
    %2941 = vmatmul.f32.gmra.mxu0 %v2883
    %v2942 = vpop.f32.mrf.mxu0
    %v2943 = vadd.f32 0.0, %v2942
    %2944 = vdwg.mxu0
    %2945 = vmatpush.msra.mxu0 0.0
    %2946 = vmatpush.msra.mxu0 0.0
    %2947 = vmatpush.msra.mxu0 0.0
    %2948 = vmatpush.msra.mxu0 0.0
    %2949 = vmatpush.msra.mxu0 0.0
    %2950 = vmatpush.msra.mxu0 0.0
    %2951 = vmatpush.msra.mxu0 0.0
    %2952 = vmatpush.msra.mxu0 0.0
    %2953 = vmatpush.msra.mxu0 0.0
    %2954 = vmatpush.msra.mxu0 0.0
    %2955 = vmatpush.msra.mxu0 0.0
    %2956 = vmatpush.msra.mxu0 0.0
    %2957 = vmatpush.msra.mxu0 0.0
    %2958 = vmatpush.msra.mxu0 0.0
    %2959 = vmatpush.msra.mxu0 0.0
    %2960 = vmatpush.msra.mxu0 %v403
    %2961 = vmatmul.f32.gmra.mxu0 %v2883
    %v2962 = vpop.f32.mrf.mxu0
    %v2963 = vadd.f32 0.0, %v2962
    %2964 = vdwg.mxu0
    %v2965 = vsub.f32 %v2798, %v2903
    %v2966 = vsub.f32 %v2799, %v2923
    %v2967 = vsub.f32 %v2800, %v2943
    %v2968 = vsub.f32 %v2801, %v2963
    %v2969 = vmul.f32 %v2965, %v2965
    %v2970 = vmul.f32 %v2966, %v2966
    %v2971 = vmul.f32 %v2967, %v2967
    %v2972 = vmul.f32 %v2968, %v2968
    %2973 = vmatpush.msra.mxu0 %v351
    %2974 = vmatpush.msra.mxu0 %v350
    %2975 = vmatpush.msra.mxu0 %v349
    %2976 = vmatpush.msra.mxu0 %v348
    %2977 = vmatpush.msra.mxu0 %v347
    %2978 = vmatpush.msra.mxu0 %v346
    %2979 = vmatpush.msra.mxu0 %v345
    %2980 = vmatpush.msra.mxu0 %v344
    %2981 = vmatpush.msra.mxu0 %v343
    %2982 = vmatpush.msra.mxu0 %v342
    %2983 = vmatpush.msra.mxu0 %v341
    %2984 = vmatpush.msra.mxu0 %v340
    %2985 = vmatpush.msra.mxu0 %v339
    %2986 = vmatpush.msra.mxu0 %v338
    %2987 = vmatpush.msra.mxu0 %v337
    %2988 = vmatpush.msra.mxu0 %v336
    %2989 = vmatmul.f32.gmra.mxu0 %v2969
    %v2990 = vpop.f32.mrf.mxu0
    %v2991 = vadd.f32 1e-05, %v2990
    %2992 = vdwg.mxu0
    %2993 = vmatpush.msra.mxu0 %v367
    %2994 = vmatpush.msra.mxu0 %v366
    %2995 = vmatpush.msra.mxu0 %v365
    %2996 = vmatpush.msra.mxu0 %v364
    %2997 = vmatpush.msra.mxu0 %v363
    %2998 = vmatpush.msra.mxu0 %v362
    %2999 = vmatpush.msra.mxu0 %v361
    %3000 = vmatpush.msra.mxu0 %v360
    %3001 = vmatpush.msra.mxu0 %v359
    %3002 = vmatpush.msra.mxu0 %v358
    %3003 = vmatpush.msra.mxu0 %v357
    %3004 = vmatpush.msra.mxu0 %v356
    %3005 = vmatpush.msra.mxu0 %v355
    %3006 = vmatpush.msra.mxu0 %v354
    %3007 = vmatpush.msra.mxu0 %v353
    %3008 = vmatpush.msra.mxu0 %v352
    %3009 = vmatmul.f32.gmra.mxu0 %v2970
    %v3010 = vpop.f32.mrf.mxu0
    %v3011 = vadd.f32 %v2991, %v3010
    %3012 = vdwg.mxu0
    %3013 = vmatpush.msra.mxu0 %v383
    %3014 = vmatpush.msra.mxu0 %v382
    %3015 = vmatpush.msra.mxu0 %v381
    %3016 = vmatpush.msra.mxu0 %v380
    %3017 = vmatpush.msra.mxu0 %v379
    %3018 = vmatpush.msra.mxu0 %v378
    %3019 = vmatpush.msra.mxu0 %v377
    %3020 = vmatpush.msra.mxu0 %v376
    %3021 = vmatpush.msra.mxu0 %v375
    %3022 = vmatpush.msra.mxu0 %v374
    %3023 = vmatpush.msra.mxu0 %v373
    %3024 = vmatpush.msra.mxu0 %v372
    %3025 = vmatpush.msra.mxu0 %v371
    %3026 = vmatpush.msra.mxu0 %v370
    %3027 = vmatpush.msra.mxu0 %v369
    %3028 = vmatpush.msra.mxu0 %v368
    %3029 = vmatmul.f32.gmra.mxu0 %v2971
    %v3030 = vpop.f32.mrf.mxu0
    %v3031 = vadd.f32 %v3011, %v3030
    %3032 = vdwg.mxu0
    %3033 = vmatpush.msra.mxu0 %v399
    %3034 = vmatpush.msra.mxu0 %v398
    %3035 = vmatpush.msra.mxu0 %v397
    %3036 = vmatpush.msra.mxu0 %v396
    %3037 = vmatpush.msra.mxu0 %v395
    %3038 = vmatpush.msra.mxu0 %v394
    %3039 = vmatpush.msra.mxu0 %v393
    %3040 = vmatpush.msra.mxu0 %v392
    %3041 = vmatpush.msra.mxu0 %v391
    %3042 = vmatpush.msra.mxu0 %v390
    %3043 = vmatpush.msra.mxu0 %v389
    %3044 = vmatpush.msra.mxu0 %v388
    %3045 = vmatpush.msra.mxu0 %v387
    %3046 = vmatpush.msra.mxu0 %v386
    %3047 = vmatpush.msra.mxu0 %v385
    %3048 = vmatpush.msra.mxu0 %v384
    %3049 = vmatmul.f32.gmra.mxu0 %v2972
    %v3050 = vpop.f32.mrf.mxu0
    %v3051 = vadd.f32 %v3031, %v3050
    %3052 = vdwg.mxu0
    %v3053 = vrsqrt.pop %v3051
    %v3054 = vmul.f32 %v3053, %v3051
    %v3055 = vmul.f32 %v3054, %v3053
    %v3056 = vmul.f32 0.5, %v3055
    %v3057 = vsub.f32 1.5, %v3056
    %v3058 = vmul.f32 %v3053, %v3057
    %vm3059 = vweird.f32 %v3051
    %vm3060 = vweird.f32 %v3053
    %vm3061 = vmor %vm3059, %vm3060
    %v3062 = vsel %vm3061, %v3053, %v3058
    %v3064 = vsel %vm717, %v3062, 0
    %3066 = vmatpush.msra.mxu0 0.0
    %3067 = vmatpush.msra.mxu0 0.0
    %3068 = vmatpush.msra.mxu0 0.0
    %3069 = vmatpush.msra.mxu0 0.0
    %3070 = vmatpush.msra.mxu0 0.0
    %3071 = vmatpush.msra.mxu0 0.0
    %3072 = vmatpush.msra.mxu0 0.0
    %3073 = vmatpush.msra.mxu0 0.0
    %3074 = vmatpush.msra.mxu0 0.0
    %3075 = vmatpush.msra.mxu0 0.0
    %3076 = vmatpush.msra.mxu0 0.0
    %3077 = vmatpush.msra.mxu0 0.0
    %3078 = vmatpush.msra.mxu0 0.0
    %3079 = vmatpush.msra.mxu0 0.0
    %3080 = vmatpush.msra.mxu0 0.0
    %3081 = vmatpush.msra.mxu0 %v400
    %3082 = vmatmul.f32.gmra.mxu0 %v3064
    %v3083 = vpop.f32.mrf.mxu0
    %v3084 = vadd.f32 0.0, %v3083
    %3085 = vdwg.mxu0
    %3086 = vmatpush.msra.mxu0 0.0
    %3087 = vmatpush.msra.mxu0 0.0
    %3088 = vmatpush.msra.mxu0 0.0
    %3089 = vmatpush.msra.mxu0 0.0
    %3090 = vmatpush.msra.mxu0 0.0
    %3091 = vmatpush.msra.mxu0 0.0
    %3092 = vmatpush.msra.mxu0 0.0
    %3093 = vmatpush.msra.mxu0 0.0
    %3094 = vmatpush.msra.mxu0 0.0
    %3095 = vmatpush.msra.mxu0 0.0
    %3096 = vmatpush.msra.mxu0 0.0
    %3097 = vmatpush.msra.mxu0 0.0
    %3098 = vmatpush.msra.mxu0 0.0
    %3099 = vmatpush.msra.mxu0 0.0
    %3100 = vmatpush.msra.mxu0 0.0
    %3101 = vmatpush.msra.mxu0 %v401
    %3102 = vmatmul.f32.gmra.mxu0 %v3064
    %v3103 = vpop.f32.mrf.mxu0
    %v3104 = vadd.f32 0.0, %v3103
    %3105 = vdwg.mxu0
    %3106 = vmatpush.msra.mxu0 0.0
    %3107 = vmatpush.msra.mxu0 0.0
    %3108 = vmatpush.msra.mxu0 0.0
    %3109 = vmatpush.msra.mxu0 0.0
    %3110 = vmatpush.msra.mxu0 0.0
    %3111 = vmatpush.msra.mxu0 0.0
    %3112 = vmatpush.msra.mxu0 0.0
    %3113 = vmatpush.msra.mxu0 0.0
    %3114 = vmatpush.msra.mxu0 0.0
    %3115 = vmatpush.msra.mxu0 0.0
    %3116 = vmatpush.msra.mxu0 0.0
    %3117 = vmatpush.msra.mxu0 0.0
    %3118 = vmatpush.msra.mxu0 0.0
    %3119 = vmatpush.msra.mxu0 0.0
    %3120 = vmatpush.msra.mxu0 0.0
    %3121 = vmatpush.msra.mxu0 %v402
    %3122 = vmatmul.f32.gmra.mxu0 %v3064
    %v3123 = vpop.f32.mrf.mxu0
    %v3124 = vadd.f32 0.0, %v3123
    %3125 = vdwg.mxu0
    %3126 = vmatpush.msra.mxu0 0.0
    %3127 = vmatpush.msra.mxu0 0.0
    %3128 = vmatpush.msra.mxu0 0.0
    %3129 = vmatpush.msra.mxu0 0.0
    %3130 = vmatpush.msra.mxu0 0.0
    %3131 = vmatpush.msra.mxu0 0.0
    %3132 = vmatpush.msra.mxu0 0.0
    %3133 = vmatpush.msra.mxu0 0.0
    %3134 = vmatpush.msra.mxu0 0.0
    %3135 = vmatpush.msra.mxu0 0.0
    %3136 = vmatpush.msra.mxu0 0.0
    %3137 = vmatpush.msra.mxu0 0.0
    %3138 = vmatpush.msra.mxu0 0.0
    %3139 = vmatpush.msra.mxu0 0.0
    %3140 = vmatpush.msra.mxu0 0.0
    %3141 = vmatpush.msra.mxu0 %v403
    %3142 = vmatmul.f32.gmra.mxu0 %v3064
    %v3143 = vpop.f32.mrf.mxu0
    %v3144 = vadd.f32 0.0, %v3143
    %3145 = vdwg.mxu0
    %v3146 = vmul.f32 %v2965, %v3084
    %v3147 = vmul.f32 %v2966, %v3104
    %v3148 = vmul.f32 %v2967, %v3124
    %v3149 = vmul.f32 %v2968, %v3144
    %v3150 = vmul.f32 %v3146, %v2379
    %v3151 = vmul.f32 %v3147, %v2380
    %v3152 = vmul.f32 %v3148, %v2381
    %v3153 = vmul.f32 %v3149, %v2382
    %v3154 = vadd.f32 %v3150, %v2387
    %v3155 = vadd.f32 %v3151, %v2388
    %v3156 = vadd.f32 %v3152, %v2389
    %v3157 = vadd.f32 %v3153, %v2390
    %3158 = vmatpush.msra.mxu0 %v419
    %3159 = vmatpush.msra.mxu0 %v418
    %3160 = vmatpush.msra.mxu0 %v417
    %3161 = vmatpush.msra.mxu0 %v416
    %3162 = vmatpush.msra.mxu0 %v415
    %3163 = vmatpush.msra.mxu0 %v414
    %3164 = vmatpush.msra.mxu0 %v413
    %3165 = vmatpush.msra.mxu0 %v412
    %3166 = vmatpush.msra.mxu0 %v411
    %3167 = vmatpush.msra.mxu0 %v410
    %3168 = vmatpush.msra.mxu0 %v409
    %3169 = vmatpush.msra.mxu0 %v408
    %3170 = vmatpush.msra.mxu0 %v407
    %3171 = vmatpush.msra.mxu0 %v406
    %3172 = vmatpush.msra.mxu0 %v405
    %3173 = vmatpush.msra.mxu0 %v404
    %3174 = vmatmul.f32.gmra.mxu0 %v3154
    %v3175 = vpop.f32.mrf.mxu0
    %v3176 = vadd.f32 %v2396, %v3175
    %3177 = vdwg.mxu0
    %3178 = vmatpush.msra.mxu0 %v435
    %3179 = vmatpush.msra.mxu0 %v434
    %3180 = vmatpush.msra.mxu0 %v433
    %3181 = vmatpush.msra.mxu0 %v432
    %3182 = vmatpush.msra.mxu0 %v431
    %3183 = vmatpush.msra.mxu0 %v430
    %3184 = vmatpush.msra.mxu0 %v429
    %3185 = vmatpush.msra.mxu0 %v428
    %3186 = vmatpush.msra.mxu0 %v427
    %3187 = vmatpush.msra.mxu0 %v426
    %3188 = vmatpush.msra.mxu0 %v425
    %3189 = vmatpush.msra.mxu0 %v424
    %3190 = vmatpush.msra.mxu0 %v423
    %3191 = vmatpush.msra.mxu0 %v422
    %3192 = vmatpush.msra.mxu0 %v421
    %3193 = vmatpush.msra.mxu0 %v420
    %3194 = vmatmul.f32.gmra.mxu0 %v3155
    %v3195 = vpop.f32.mrf.mxu0
    %v3196 = vadd.f32 %v3176, %v3195
    %3197 = vdwg.mxu0
    %3198 = vmatpush.msra.mxu0 %v451
    %3199 = vmatpush.msra.mxu0 %v450
    %3200 = vmatpush.msra.mxu0 %v449
    %3201 = vmatpush.msra.mxu0 %v448
    %3202 = vmatpush.msra.mxu0 %v447
    %3203 = vmatpush.msra.mxu0 %v446
    %3204 = vmatpush.msra.mxu0 %v445
    %3205 = vmatpush.msra.mxu0 %v444
    %3206 = vmatpush.msra.mxu0 %v443
    %3207 = vmatpush.msra.mxu0 %v442
    %3208 = vmatpush.msra.mxu0 %v441
    %3209 = vmatpush.msra.mxu0 %v440
    %3210 = vmatpush.msra.mxu0 %v439
    %3211 = vmatpush.msra.mxu0 %v438
    %3212 = vmatpush.msra.mxu0 %v437
    %3213 = vmatpush.msra.mxu0 %v436
    %3214 = vmatmul.f32.gmra.mxu0 %v3156
    %v3215 = vpop.f32.mrf.mxu0
    %v3216 = vadd.f32 %v3196, %v3215
    %3217 = vdwg.mxu0
    %3218 = vmatpush.msra.mxu0 %v467
    %3219 = vmatpush.msra.mxu0 %v466
    %3220 = vmatpush.msra.mxu0 %v465
    %3221 = vmatpush.msra.mxu0 %v464
    %3222 = vmatpush.msra.mxu0 %v463
    %3223 = vmatpush.msra.mxu0 %v462
    %3224 = vmatpush.msra.mxu0 %v461
    %3225 = vmatpush.msra.mxu0 %v460
    %3226 = vmatpush.msra.mxu0 %v459
    %3227 = vmatpush.msra.mxu0 %v458
    %3228 = vmatpush.msra.mxu0 %v457
    %3229 = vmatpush.msra.mxu0 %v456
    %3230 = vmatpush.msra.mxu0 %v455
    %3231 = vmatpush.msra.mxu0 %v454
    %3232 = vmatpush.msra.mxu0 %v453
    %3233 = vmatpush.msra.mxu0 %v452
    %3234 = vmatmul.f32.gmra.mxu0 %v3157
    %v3235 = vpop.f32.mrf.mxu0
    %v3236 = vadd.f32 %v3216, %v3235
    %3237 = vdwg.mxu0
    %v3239 = vperm.slane %v473, 0
    %v3241 = vadd.f32 %v3239, 0.0
    %v3243 = vsel %vm540, %v2476, 0
    %v3246 = vsel %vm544, %v470, 0
    %3248 = vmatpush.msra.mxu0 0.0
    %3249 = vmatpush.msra.mxu0 0.0
    %3250 = vmatpush.msra.mxu0 0.0
    %3251 = vmatpush.msra.mxu0 0.0
    %3252 = vmatpush.msra.mxu0 0.0
    %3253 = vmatpush.msra.mxu0 0.0
    %3254 = vmatpush.msra.mxu0 0.0
    %3255 = vmatpush.msra.mxu0 0.0
    %3256 = vmatpush.msra.mxu0 0.0
    %3257 = vmatpush.msra.mxu0 0.0
    %3258 = vmatpush.msra.mxu0 0.0
    %3259 = vmatpush.msra.mxu0 0.0
    %3260 = vmatpush.msra.mxu0 0.0
    %3261 = vmatpush.msra.mxu0 0.0
    %3262 = vmatpush.msra.mxu0 %v3246
    %3263 = vmatpush.msra.mxu0 %v469
    %3264 = vmatmul.f32.gmra.mxu0 %v3243
    %v3265 = vpop.f32.mrf.mxu0
    %v3266 = vadd.f32 0.0, %v3265
    %3267 = vdwg.mxu0
    %v3268 = vadd.f32 %v3241, %v3266
    %v3270 = vsel %vm540, %v3236, 0
    %v3273 = vsel %vm544, %v472, 0
    %3275 = vmatpush.msra.mxu0 0.0
    %3276 = vmatpush.msra.mxu0 0.0
    %3277 = vmatpush.msra.mxu0 0.0
    %3278 = vmatpush.msra.mxu0 0.0
    %3279 = vmatpush.msra.mxu0 0.0
    %3280 = vmatpush.msra.mxu0 0.0
    %3281 = vmatpush.msra.mxu0 0.0
    %3282 = vmatpush.msra.mxu0 0.0
    %3283 = vmatpush.msra.mxu0 0.0
    %3284 = vmatpush.msra.mxu0 0.0
    %3285 = vmatpush.msra.mxu0 0.0
    %3286 = vmatpush.msra.mxu0 0.0
    %3287 = vmatpush.msra.mxu0 0.0
    %3288 = vmatpush.msra.mxu0 0.0
    %3289 = vmatpush.msra.mxu0 %v3273
    %3290 = vmatpush.msra.mxu0 %v471
    %3291 = vmatmul.f32.gmra.mxu0 %v3270
    %v3292 = vpop.f32.mrf.mxu0
    %v3293 = vadd.f32 0.0, %v3292
    %3294 = vdwg.mxu0
    %v3295 = vadd.f32 %v3268, %v3293
    %v3296 = vadd.f32 %v3295, %v61
    %vm3297 = vcmask 195584
    %3298 = vst.msk [vmem:[#allocation5] sm:$0xff] %vm3297, %v3296
    // Predicated region
    $region50: #{model_forward.1} parent=1 // pred_check
      _
    $region51: #{model_forward.1} parent=1 // pred_check_branch
      %3300 = sbr.rel (0) target = $region53
    $region52: #{model_forward.1} parent=1 // pred_region
      %3302 = vsyncadd [#allocation4], 0
      %s3304 = sshll.u32 [#allocation5], 4
      %s3305 = int_to_ptr.vmem [resolvable:$true] %s3304
      %s3306 = sshll.u32 %s11, 4
      %s3307 = int_to_ptr.hbm [resolvable:$true] %s3306
      %3309 = dma.vmem_to_hbm [thread:$0]  %s3305, 128, %s3307, [#allocation4]
    $region53: #{model_forward.1} parent=1 // pred_fallthru
      _
    // Predicated region
    $region54: #{model_forward.1} parent=1 // pred_check
      _
    $region55: #{model_forward.1} parent=1 // pred_check_branch
      %3311 = sbr.rel (0) target = $region57
    $region56: #{model_forward.1} parent=1 // pred_region
      %3313 = dma.done [#allocation4], 128
    $region57: #{model_forward.1} parent=1 // pred_fallthru
      _
    %3314 = vsyncpa [#allocation3], 1
    %3315 = vsyncpa [#allocation4], 1

</llo_original>
